<compile_context>
chip_gen: v7x
topology: tpu7x:2x2x1
jax: 0.10.0
libtpu: 0.0.40
codegen_flags: <defaults>
</compile_context>

<pallas_src>
import functools
import math

import jax
import jax.numpy as jnp
import numpy as np
from jax.experimental import pallas as pl
from jax.experimental.pallas import tpu as pltpu


# ------------------------------ Pallas kernel -------------------------------

def _fused_fwd_kernel(x_ref,
                      t1_ref, b1_ref,
                      t2_ref, b2_ref, h2_ref,
                      t3_ref, b3_ref, h3_ref,
                      t4_ref, b4_ref, h4_ref,
                      wh_ref, bh_ref,
                      out_ref, *, n_classes):
    """conv block x4 (as dense transfer matmuls) -> fused heads -> sigmoid/softmax."""

    def block(a, t_ref, b_ref, h_ref=None):
        # Conv(3x3, s=2, p=1) + bias (+ folded eval-BN scale) as one lane-dense matmul.
        y = jnp.dot(a, t_ref[...], preferred_element_type=jnp.float32) + b_ref[...]
        y = jnp.maximum(y, 0.2 * y)                     # LeakyReLU(0.2), max form
        if h_ref is not None:                           # eval-BN shift (scale folded into T)
            y = y + h_ref[...]
        # Dropout2d(0.25) is identity in eval mode.
        # TODO(synk): on v6e/v7x a bf16 epilogue would roughly halve VALU cycles; kept
        # f32 for v5e compatibility and numerics.
        return y.astype(jnp.bfloat16)

    a = x_ref[...]                                      # bf16 (TILE_N, C*H*W)
    a = block(a, t1_ref, b1_ref)                        # block 1 has no BN
    a = block(a, t2_ref, b2_ref, h2_ref)
    a = block(a, t3_ref, b3_ref, h3_ref)
    a = block(a, t4_ref, b4_ref, h4_ref)                # row == torch's out.view(N, -1)

    # Fused heads: column 0 = adv logit, columns 1..n_classes = aux logits, rest pad.
    logits = jnp.dot(a, wh_ref[...], preferred_element_type=jnp.float32) + bh_ref[...]
    lane = jax.lax.broadcasted_iota(jnp.int32, logits.shape, 1)

    sig = 1.0 / (1.0 + jnp.exp(-logits))                # adv head: sigmoid (lane 0)

    aux = (lane >= 1) & (lane < 1 + n_classes)          # aux head: masked softmax
    ml = jnp.where(aux, logits, -1e30)
    m = jnp.max(ml, axis=-1, keepdims=True)
    e = jnp.where(aux, jnp.exp(ml - m), 0.0)
    probs = e / jnp.sum(e, axis=-1, keepdims=True)      # exact divide

    out_ref[...] = jnp.where(lane == 0, sig, probs)


# ------------------------------- wrapper glue --------------------------------

def _conv_transfer(w, b, bn, H, W):
    """Dense transfer matrix for Conv2d(3, stride=2, pad=1) with eval-BN scale folded.

    a_out = leaky(a_in @ T + bias) + shift   (shift is None when the block has no BN);
    activations are flattened channel-major (C, H, W) so layer-4's row matches torch's
    `out.view(N, -1)`.
    """
    C_out, C_in, KH, KW = w.shape
    Ho, Wo = -(-H // 2), -(-W // 2)
    P_in, P_out = H * W, Ho * Wo

    # Static 0/1 tap-placement tensor (kh, kw, out_pos, in_pos); zero padding is
    # encoded by omitting out-of-bounds taps.
    M = np.zeros((KH, KW, P_out, P_in), np.float32)
    for kh in range(KH):
        for kw in range(KW):
            for oh in range(Ho):
                ih = 2 * oh - 1 + kh
                if ih < 0 or ih >= H:
                    continue
                for ow in range(Wo):
                    iw = 2 * ow - 1 + kw
                    if iw < 0 or iw >= W:
                        continue
                    M[kh, kw, oh * Wo + ow, ih * W + iw] = 1.0

    T = jnp.einsum("oikl,klqp->ipoq", w, jnp.asarray(M))
    T = T.reshape(C_in * P_in, C_out * P_out)
    bias = jnp.repeat(b, P_out)
    shift = None
    if bn is not None:
        gamma, beta, mean, var, eps = bn
        s = gamma / jnp.sqrt(var + eps)
        # Fold the (positive) eval-BN scale into T and bias: LeakyReLU is positively
        # homogeneous, so leaky(y)*s == leaky(y*s) when s > 0 (true for default gamma=1).
        # TODO(synk): a learned negative gamma would need the unfused per-channel scale.
        s_col = jnp.repeat(s, P_out)
        T = T * s_col[None, :]
        bias = bias * s_col
        shift = jnp.repeat(beta - mean * s, P_out).reshape(1, C_out * P_out)
        shift = shift.astype(jnp.float32)
    return (T.astype(jnp.bfloat16),
            bias.reshape(1, C_out * P_out).astype(jnp.float32),
            shift, Ho, Wo)


def discriminator_weak_forward(img_nchw, params):
    # Eval semantics: Dropout2d(0.25) = identity, BatchNorm uses running stats (eps=0.8).
    N, C, H, W = img_nchw.shape
    x = img_nchw.reshape(N, C * H * W).astype(jnp.bfloat16)

    # Per-layer dense conv-transfer matrices + fused epilogue row vectors.
    # TODO(synk): the dense transfer matrix scales as (H*W)^2; for image sizes much
    # beyond 32x32 switch to an in-kernel tap-decomposition im2col.
    layer_defs = [("w1", "b1", None), ("w2", "b2", "bn2"),
                  ("w3", "b3", "bn3"), ("w4", "b4", "bn4")]
    consts = []
    h, w = H, W
    for wk, bk, bnk in layer_defs:
        T, bias, shift, h, w = _conv_transfer(
            params[wk], params[bk], params[bnk] if bnk else None, h, w)
        consts += [T, bias] + ([shift] if shift is not None else [])

    # Fused, lane-padded heads (adv column 0, aux columns 1..n_classes).
    n_classes = params["aux_w"].shape[0]
    nh = 1 + n_classes
    head_w = max(128, ((nh + 127) // 128) * 128)
    wh = jnp.concatenate([params["adv_w"], params["aux_w"]], axis=0).T
    wh = jnp.pad(wh, ((0, 0), (0, head_w - nh))).astype(jnp.bfloat16)
    bh = jnp.concatenate([params["adv_b"], params["aux_b"]]).reshape(1, nh)
    bh = jnp.pad(bh, ((0, 0), (0, head_w - nh))).astype(jnp.float32)
    consts += [wh, bh]

    # Batch tiling. Large batches: 256-row tiles (fills the v6e/v7x MXU M-dim and
    # amortises per-grid-step overhead), but capped so grid >= 2 once N >= 256 so both
    # v7x TensorCores get work via the "parallel" axis. Small batches: pad rows to a
    # multiple of 16 (bf16 sublane pack) and run a single tile.
    if N >= 256:
        n128 = ((N + 127) // 128) * 128
        tile_n = max(128, min(256, ((n128 // 2) // 128) * 128))
    elif N >= 128:
        tile_n = 128
    else:
        tile_n = ((N + 15) // 16) * 16
    n_pad = pl.cdiv(N, tile_n) * tile_n
    if n_pad != N:
        x = jnp.pad(x, ((0, n_pad - N), (0, 0)))

    # x is blocked over the batch; grid-invariant constants are whole-array VMEM
    # residents (single-buffered, no per-step DMA).
    in_specs = [pl.BlockSpec((tile_n, x.shape[1]), lambda i: (i, 0))]
    in_specs += [pl.BlockSpec(memory_space=pltpu.MemorySpace.VMEM) for _ in consts]

    # Explicit scoped-VMEM budget (hygiene now; required headroom if image_size grows).
    const_bytes = sum(int(np.prod(c.shape)) * c.dtype.itemsize for c in consts)
    io_bytes = 2 * tile_n * (x.shape[1] * 2 + head_w * 4)   # double-buffered x / out
    vmem_limit = int(min(96 << 20, max(32 << 20, 2 * (const_bytes + io_bytes))))

    out = pl.pallas_call(
        functools.partial(_fused_fwd_kernel, n_classes=n_classes),
        out_shape=jax.ShapeDtypeStruct((n_pad, head_w), jnp.float32),
        grid=(n_pad // tile_n,),
        in_specs=in_specs,
        out_specs=pl.BlockSpec((tile_n, head_w), lambda i: (i, 0)),
        compiler_params=pltpu.CompilerParams(
            dimension_semantics=("parallel",),
            vmem_limit_bytes=vmem_limit),
    )(x, *consts)

    validity = out[:N, 0:1]
    label = out[:N, 1:1 + n_classes]
    return validity, label


# ----------------------------- pure-JAX reference ----------------------------

def _reference_forward(img, params):
    """XLA eval-mode reference for correctness checking."""
    def block(x, w, b, bn):
        y = jax.lax.conv_general_dilated(
            x, w, window_strides=(2, 2), padding=((1, 1), (1, 1)),
            dimension_numbers=("NCHW", "OIHW", "NCHW"))
        y = y + b[None, :, None, None]
        y = jnp.where(y > 0, y, 0.2 * y)
        if bn is not None:
            gamma, beta, mean, var, eps = bn
            s = gamma / jnp.sqrt(var + eps)
            y = y * s[None, :, None, None] + (beta - mean * s)[None, :, None, None]
        return y

    y = block(img, params["w1"], params["b1"], None)
    y = block(y, params["w2"], params["b2"], params["bn2"])
    y = block(y, params["w3"], params["b3"], params["bn3"])
    y = block(y, params["w4"], params["b4"], params["bn4"])
    feat = y.reshape(y.shape[0], -1)
    validity = jax.nn.sigmoid(feat @ params["adv_w"].T + params["adv_b"])
    label = jax.nn.softmax(feat @ params["aux_w"].T + params["aux_b"], axis=-1)
    return validity, label


# ----------------------------- deterministic init ----------------------------

def init_params(key, n_classes, image_size, channels):
    ds_size = math.ceil(image_size / 2 ** 4)
    feat_dim = 128 * ds_size ** 2
    ks = jax.random.split(key, 12)

    def conv_w(k, cout, cin):
        return 0.1 * jax.random.normal(k, (cout, cin, 3, 3), jnp.float32)

    def bn_params(c, eps=0.8):
        # fresh-module defaults: gamma=1, beta=0, running_mean=0, running_var=1
        return (jnp.ones((c,), jnp.float32), jnp.zeros((c,), jnp.float32),
                jnp.zeros((c,), jnp.float32), jnp.ones((c,), jnp.float32), eps)

    return {
        "w1": conv_w(ks[0], 16, channels),  "b1": 0.1 * jax.random.normal(ks[1], (16,)),
        "w2": conv_w(ks[2], 32, 16),        "b2": 0.1 * jax.random.normal(ks[3], (32,)),
        "w3": conv_w(ks[4], 64, 32),        "b3": 0.1 * jax.random.normal(ks[5], (64,)),
        "w4": conv_w(ks[6], 128, 64),       "b4": 0.1 * jax.random.normal(ks[7], (128,)),
        "bn2": bn_params(32), "bn3": bn_params(64), "bn4": bn_params(128),
        "adv_w": 0.1 * jax.random.normal(ks[8], (1, feat_dim), jnp.float32),
        "adv_b": 0.1 * jax.random.normal(ks[9], (1,), jnp.float32),
        "aux_w": 0.1 * jax.random.normal(ks[10], (n_classes, feat_dim), jnp.float32),
        "aux_b": 0.1 * jax.random.normal(ks[11], (n_classes,), jnp.float32),
    }


if __name__ == "__main__":
    n_classes, image_size, channels = 5, 16, 1
    key = jax.random.PRNGKey(0)
    k_img, k_par, k_img2 = jax.random.split(key, 3)
    params = init_params(k_par, n_classes, image_size, channels)
    fwd = jax.jit(discriminator_weak_forward)

    # Small batch (single-tile, padded-to-16 path).
    img = jax.random.normal(k_img, (2, channels, image_size, image_size), jnp.float32)
    validity, label = fwd(img, params)
    jax.block_until_ready((validity, label))
    assert validity.shape == (2, 1) and label.shape == (2, n_classes)
    ref_v, ref_l = _reference_forward(img, params)
    assert bool(jnp.allclose(validity, ref_v, atol=3e-2))
    assert bool(jnp.allclose(label, ref_l, atol=3e-2))
    assert bool(jnp.allclose(jnp.sum(label, axis=-1), 1.0, atol=1e-4))
    assert bool(jnp.all((validity >= 0.0) & (validity <= 1.0)))
    assert bool(jnp.all(label >= 0.0))

    # Larger batch (multi-tile "parallel" grid path, exercises batch padding).
    img2 = jax.random.normal(k_img2, (300, channels, image_size, image_size), jnp.float32)
    v2, l2 = fwd(img2, params)
    jax.block_until_ready((v2, l2))
    assert v2.shape == (300, 1) and l2.shape == (300, n_classes)
    ref_v2, ref_l2 = _reference_forward(img2, params)
    assert bool(jnp.allclose(v2, ref_v2, atol=3e-2))
    assert bool(jnp.allclose(l2, ref_l2, atol=3e-2))
    assert bool(jnp.allclose(jnp.sum(l2, axis=-1), 1.0, atol=1e-4))

    print("KERNEL_OK")
</pallas_src>

<mosaic_0001>
module attributes {stable_mosaic.version = 11 : i64} {
  func.func @_fused_fwd_kernel(%arg0: i32, %arg1: memref<16x256xbf16, #tpu.memory_space<vmem>>, %arg2: memref<256x1024xbf16, #tpu.memory_space<vmem>>, %arg3: memref<1x1024xf32, #tpu.memory_space<vmem>>, %arg4: memref<1024x512xbf16, #tpu.memory_space<vmem>>, %arg5: memref<1x512xf32, #tpu.memory_space<vmem>>, %arg6: memref<1x512xf32, #tpu.memory_space<vmem>>, %arg7: memref<512x256xbf16, #tpu.memory_space<vmem>>, %arg8: memref<1x256xf32, #tpu.memory_space<vmem>>, %arg9: memref<1x256xf32, #tpu.memory_space<vmem>>, %arg10: memref<256x128xbf16, #tpu.memory_space<vmem>>, %arg11: memref<1x128xf32, #tpu.memory_space<vmem>>, %arg12: memref<1x128xf32, #tpu.memory_space<vmem>>, %arg13: memref<128x128xbf16, #tpu.memory_space<vmem>>, %arg14: memref<1x128xf32, #tpu.memory_space<vmem>>, %arg15: memref<16x128xf32, #tpu.memory_space<vmem>>) attributes {dimension_semantics = [#tpu.dimension_semantics<parallel>], iteration_bounds = array<i64: 1>, scalar_prefetch = 0 : i64, scratch_operands = 0 : i64, tpu.core_type = #tpu.core_type<tc>, window_params = [{transform_indices = @transform_0, window_bounds = array<i64: 16, 256>}, {pipeline_mode = #tpu.pipeline_mode<synchronous>, transform_indices = @transform_1, window_bounds = array<i64: 256, 1024>}, {pipeline_mode = #tpu.pipeline_mode<synchronous>, transform_indices = @transform_2, window_bounds = array<i64: 1, 1024>}, {pipeline_mode = #tpu.pipeline_mode<synchronous>, transform_indices = @transform_3, window_bounds = array<i64: 1024, 512>}, {pipeline_mode = #tpu.pipeline_mode<synchronous>, transform_indices = @transform_4, window_bounds = array<i64: 1, 512>}, {pipeline_mode = #tpu.pipeline_mode<synchronous>, transform_indices = @transform_5, window_bounds = array<i64: 1, 512>}, {pipeline_mode = #tpu.pipeline_mode<synchronous>, transform_indices = @transform_6, window_bounds = array<i64: 512, 256>}, {pipeline_mode = #tpu.pipeline_mode<synchronous>, transform_indices = @transform_7, window_bounds = array<i64: 1, 256>}, {pipeline_mode = #tpu.pipeline_mode<synchronous>, transform_indices = @transform_8, window_bounds = array<i64: 1, 256>}, {pipeline_mode = #tpu.pipeline_mode<synchronous>, transform_indices = @transform_9, window_bounds = array<i64: 256, 128>}, {pipeline_mode = #tpu.pipeline_mode<synchronous>, transform_indices = @transform_10, window_bounds = array<i64: 1, 128>}, {pipeline_mode = #tpu.pipeline_mode<synchronous>, transform_indices = @transform_11, window_bounds = array<i64: 1, 128>}, {pipeline_mode = #tpu.pipeline_mode<synchronous>, transform_indices = @transform_12, window_bounds = array<i64: 128, 128>}, {pipeline_mode = #tpu.pipeline_mode<synchronous>, transform_indices = @transform_13, window_bounds = array<i64: 1, 128>}, {transform_indices = @transform_14, window_bounds = array<i64: 16, 128>}]} {
    %c0 = arith.constant 0 : index
    %c0_0 = arith.constant 0 : index
    %0 = vector.load %arg1[%c0, %c0_0] : memref<16x256xbf16, #tpu.memory_space<vmem>>, vector<16x256xbf16>
    %c0_1 = arith.constant 0 : index
    %c0_2 = arith.constant 0 : index
    %1 = vector.load %arg2[%c0_1, %c0_2] : memref<256x1024xbf16, #tpu.memory_space<vmem>>, vector<256x1024xbf16>
    %cst = arith.constant dense<0.000000e+00> : vector<16x1024xf32>
    %2 = tpu.matmul %0, %1, %cst {dimension_numbers = #tpu.dot_dimension_numbers<[1], [0], [0], [1], [0, 0, 1, 1], [], []>} : vector<16x256xbf16>, vector<256x1024xbf16>, vector<16x1024xf32> -> vector<16x1024xf32>
    %c0_3 = arith.constant 0 : index
    %c0_4 = arith.constant 0 : index
    %3 = vector.load %arg3[%c0_3, %c0_4] : memref<1x1024xf32, #tpu.memory_space<vmem>>, vector<1x1024xf32>
    %4 = vector.broadcast %3 : vector<1x1024xf32> to vector<16x1024xf32>
    %5 = arith.addf %2, %4 : vector<16x1024xf32>
    %cst_5 = arith.constant 2.000000e-01 : f32
    %6 = vector.broadcast %cst_5 : f32 to vector<16x1024xf32>
    %7 = arith.mulf %6, %5 : vector<16x1024xf32>
    %8 = arith.maximumf %5, %7 : vector<16x1024xf32>
    %9 = arith.truncf %8 : vector<16x1024xf32> to vector<16x1024xbf16>
    %c0_6 = arith.constant 0 : index
    %c0_7 = arith.constant 0 : index
    %10 = vector.load %arg4[%c0_6, %c0_7] : memref<1024x512xbf16, #tpu.memory_space<vmem>>, vector<1024x512xbf16>
    %cst_8 = arith.constant dense<0.000000e+00> : vector<16x512xf32>
    %11 = tpu.matmul %9, %10, %cst_8 {dimension_numbers = #tpu.dot_dimension_numbers<[1], [0], [0], [1], [0, 0, 1, 1], [], []>} : vector<16x1024xbf16>, vector<1024x512xbf16>, vector<16x512xf32> -> vector<16x512xf32>
    %c0_9 = arith.constant 0 : index
    %c0_10 = arith.constant 0 : index
    %12 = vector.load %arg5[%c0_9, %c0_10] : memref<1x512xf32, #tpu.memory_space<vmem>>, vector<1x512xf32>
    %13 = vector.broadcast %12 : vector<1x512xf32> to vector<16x512xf32>
    %14 = arith.addf %11, %13 : vector<16x512xf32>
    %cst_11 = arith.constant 2.000000e-01 : f32
    %15 = vector.broadcast %cst_11 : f32 to vector<16x512xf32>
    %16 = arith.mulf %15, %14 : vector<16x512xf32>
    %17 = arith.maximumf %14, %16 : vector<16x512xf32>
    %c0_12 = arith.constant 0 : index
    %c0_13 = arith.constant 0 : index
    %18 = vector.load %arg6[%c0_12, %c0_13] : memref<1x512xf32, #tpu.memory_space<vmem>>, vector<1x512xf32>
    %19 = vector.broadcast %18 : vector<1x512xf32> to vector<16x512xf32>
    %20 = arith.addf %17, %19 : vector<16x512xf32>
    %21 = arith.truncf %20 : vector<16x512xf32> to vector<16x512xbf16>
    %c0_14 = arith.constant 0 : index
    %c0_15 = arith.constant 0 : index
    %22 = vector.load %arg7[%c0_14, %c0_15] : memref<512x256xbf16, #tpu.memory_space<vmem>>, vector<512x256xbf16>
    %cst_16 = arith.constant dense<0.000000e+00> : vector<16x256xf32>
    %23 = tpu.matmul %21, %22, %cst_16 {dimension_numbers = #tpu.dot_dimension_numbers<[1], [0], [0], [1], [0, 0, 1, 1], [], []>} : vector<16x512xbf16>, vector<512x256xbf16>, vector<16x256xf32> -> vector<16x256xf32>
    %c0_17 = arith.constant 0 : index
    %c0_18 = arith.constant 0 : index
    %24 = vector.load %arg8[%c0_17, %c0_18] : memref<1x256xf32, #tpu.memory_space<vmem>>, vector<1x256xf32>
    %25 = vector.broadcast %24 : vector<1x256xf32> to vector<16x256xf32>
    %26 = arith.addf %23, %25 : vector<16x256xf32>
    %cst_19 = arith.constant 2.000000e-01 : f32
    %27 = vector.broadcast %cst_19 : f32 to vector<16x256xf32>
    %28 = arith.mulf %27, %26 : vector<16x256xf32>
    %29 = arith.maximumf %26, %28 : vector<16x256xf32>
    %c0_20 = arith.constant 0 : index
    %c0_21 = arith.constant 0 : index
    %30 = vector.load %arg9[%c0_20, %c0_21] : memref<1x256xf32, #tpu.memory_space<vmem>>, vector<1x256xf32>
    %31 = vector.broadcast %30 : vector<1x256xf32> to vector<16x256xf32>
    %32 = arith.addf %29, %31 : vector<16x256xf32>
    %33 = arith.truncf %32 : vector<16x256xf32> to vector<16x256xbf16>
    %c0_22 = arith.constant 0 : index
    %c0_23 = arith.constant 0 : index
    %34 = vector.load %arg10[%c0_22, %c0_23] : memref<256x128xbf16, #tpu.memory_space<vmem>>, vector<256x128xbf16>
    %cst_24 = arith.constant dense<0.000000e+00> : vector<16x128xf32>
    %35 = tpu.matmul %33, %34, %cst_24 {dimension_numbers = #tpu.dot_dimension_numbers<[1], [0], [0], [1], [0, 0, 1, 1], [], []>} : vector<16x256xbf16>, vector<256x128xbf16>, vector<16x128xf32> -> vector<16x128xf32>
    %c0_25 = arith.constant 0 : index
    %c0_26 = arith.constant 0 : index
    %36 = vector.load %arg11[%c0_25, %c0_26] : memref<1x128xf32, #tpu.memory_space<vmem>>, vector<1x128xf32>
    %37 = vector.broadcast %36 : vector<1x128xf32> to vector<16x128xf32>
    %38 = arith.addf %35, %37 : vector<16x128xf32>
    %cst_27 = arith.constant 2.000000e-01 : f32
    %39 = vector.broadcast %cst_27 : f32 to vector<16x128xf32>
    %40 = arith.mulf %39, %38 : vector<16x128xf32>
    %41 = arith.maximumf %38, %40 : vector<16x128xf32>
    %c0_28 = arith.constant 0 : index
    %c0_29 = arith.constant 0 : index
    %42 = vector.load %arg12[%c0_28, %c0_29] : memref<1x128xf32, #tpu.memory_space<vmem>>, vector<1x128xf32>
    %43 = vector.broadcast %42 : vector<1x128xf32> to vector<16x128xf32>
    %44 = arith.addf %41, %43 : vector<16x128xf32>
    %45 = arith.truncf %44 : vector<16x128xf32> to vector<16x128xbf16>
    %c0_30 = arith.constant 0 : index
    %c0_31 = arith.constant 0 : index
    %46 = vector.load %arg13[%c0_30, %c0_31] : memref<128x128xbf16, #tpu.memory_space<vmem>>, vector<128x128xbf16>
    %cst_32 = arith.constant dense<0.000000e+00> : vector<16x128xf32>
    %47 = tpu.matmul %45, %46, %cst_32 {dimension_numbers = #tpu.dot_dimension_numbers<[1], [0], [0], [1], [0, 0, 1, 1], [], []>} : vector<16x128xbf16>, vector<128x128xbf16>, vector<16x128xf32> -> vector<16x128xf32>
    %c0_33 = arith.constant 0 : index
    %c0_34 = arith.constant 0 : index
    %48 = vector.load %arg14[%c0_33, %c0_34] : memref<1x128xf32, #tpu.memory_space<vmem>>, vector<1x128xf32>
    %49 = vector.broadcast %48 : vector<1x128xf32> to vector<16x128xf32>
    %50 = arith.addf %47, %49 : vector<16x128xf32>
    %51 = tpu.iota {dimensions = array<i32: 1>} : vector<16x128xi32>
    %cst_35 = arith.constant 0.000000e+00 : f32
    %52 = vector.broadcast %cst_35 : f32 to vector<16x128xf32>
    %53 = arith.subf %52, %50 : vector<16x128xf32>
    %54 = math.exp %53 : vector<16x128xf32>
    %cst_36 = arith.constant 1.000000e+00 : f32
    %55 = vector.broadcast %cst_36 : f32 to vector<16x128xf32>
    %56 = arith.addf %55, %54 : vector<16x128xf32>
    %cst_37 = arith.constant 1.000000e+00 : f32
    %57 = vector.broadcast %cst_37 : f32 to vector<16x128xf32>
    %58 = arith.divf %57, %56 : vector<16x128xf32>
    %c1_i32 = arith.constant 1 : i32
    %59 = vector.broadcast %c1_i32 : i32 to vector<16x128xi32>
    %60 = arith.cmpi sge, %51, %59 : vector<16x128xi32>
    %c6_i32 = arith.constant 6 : i32
    %61 = vector.broadcast %c6_i32 : i32 to vector<16x128xi32>
    %62 = arith.cmpi slt, %51, %61 : vector<16x128xi32>
    %63 = arith.andi %60, %62 : vector<16x128xi1>
    %cst_38 = arith.constant -1.000000e+30 : f32
    %64 = vector.broadcast %cst_38 : f32 to vector<16x128xf32>
    %65 = arith.select %63, %50, %64 : vector<16x128xi1>, vector<16x128xf32>
    %cst_39 = arith.constant dense<0xFF800000> : vector<16xf32>
    %66 = vector.multi_reduction <maximumf>, %65, %cst_39 [1] : vector<16x128xf32> to vector<16xf32>
    %67 = vector.shape_cast %66 : vector<16xf32> to vector<16x1xf32>
    %68 = vector.broadcast %67 : vector<16x1xf32> to vector<16x128xf32>
    %69 = arith.subf %65, %68 : vector<16x128xf32>
    %70 = math.exp %69 : vector<16x128xf32>
    %cst_40 = arith.constant 0.000000e+00 : f32
    %71 = vector.broadcast %cst_40 : f32 to vector<16x128xf32>
    %72 = arith.select %63, %70, %71 : vector<16x128xi1>, vector<16x128xf32>
    %cst_41 = arith.constant dense<0.000000e+00> : vector<16xf32>
    %73 = vector.multi_reduction <add>, %72, %cst_41 [1] : vector<16x128xf32> to vector<16xf32>
    %74 = vector.shape_cast %73 : vector<16xf32> to vector<16x1xf32>
    %75 = vector.broadcast %74 : vector<16x1xf32> to vector<16x128xf32>
    %76 = arith.divf %72, %75 : vector<16x128xf32>
    %c0_i32 = arith.constant 0 : i32
    %77 = vector.broadcast %c0_i32 : i32 to vector<16x128xi32>
    %78 = arith.cmpi eq, %51, %77 : vector<16x128xi32>
    %79 = arith.select %78, %58, %76 : vector<16x128xi1>, vector<16x128xf32>
    %c0_42 = arith.constant 0 : index
    %c0_43 = arith.constant 0 : index
    %80 = vector.load %arg15[%c0_42, %c0_43] : memref<16x128xf32, #tpu.memory_space<vmem>>, vector<16x128xf32>
    tpu.vector_store %arg15[%c0_42, %c0_43], %79 {strides = array<i32>} : memref<16x128xf32, #tpu.memory_space<vmem>>, vector<16x128xf32>,
    return
  }
  func.func @transform_0(%arg0: i32) -> (i32, i32) {
    %c0_i32 = arith.constant 0 : i32
    %c0_i32_0 = arith.constant 0 : i32
    return %arg0, %c0_i32 : i32, i32
  }
  func.func @transform_1(%arg0: i32) -> (i32, i32) {
    %c0_i32 = arith.constant 0 : i32
    %c0_i32_0 = arith.constant 0 : i32
    %c0_i32_1 = arith.constant 0 : i32
    return %c0_i32, %c0_i32_0 : i32, i32
  }
  func.func @transform_2(%arg0: i32) -> (i32, i32) {
    %c0_i32 = arith.constant 0 : i32
    %c0_i32_0 = arith.constant 0 : i32
    %c0_i32_1 = arith.constant 0 : i32
    return %c0_i32, %c0_i32_0 : i32, i32
  }
  func.func @transform_3(%arg0: i32) -> (i32, i32) {
    %c0_i32 = arith.constant 0 : i32
    %c0_i32_0 = arith.constant 0 : i32
    %c0_i32_1 = arith.constant 0 : i32
    return %c0_i32, %c0_i32_0 : i32, i32
  }
  func.func @transform_4(%arg0: i32) -> (i32, i32) {
    %c0_i32 = arith.constant 0 : i32
    %c0_i32_0 = arith.constant 0 : i32
    %c0_i32_1 = arith.constant 0 : i32
    return %c0_i32, %c0_i32_0 : i32, i32
  }
  func.func @transform_5(%arg0: i32) -> (i32, i32) {
    %c0_i32 = arith.constant 0 : i32
    %c0_i32_0 = arith.constant 0 : i32
    %c0_i32_1 = arith.constant 0 : i32
    return %c0_i32, %c0_i32_0 : i32, i32
  }
  func.func @transform_6(%arg0: i32) -> (i32, i32) {
    %c0_i32 = arith.constant 0 : i32
    %c0_i32_0 = arith.constant 0 : i32
    %c0_i32_1 = arith.constant 0 : i32
    return %c0_i32, %c0_i32_0 : i32, i32
  }
  func.func @transform_7(%arg0: i32) -> (i32, i32) {
    %c0_i32 = arith.constant 0 : i32
    %c0_i32_0 = arith.constant 0 : i32
    %c0_i32_1 = arith.constant 0 : i32
    return %c0_i32, %c0_i32_0 : i32, i32
  }
  func.func @transform_8(%arg0: i32) -> (i32, i32) {
    %c0_i32 = arith.constant 0 : i32
    %c0_i32_0 = arith.constant 0 : i32
    %c0_i32_1 = arith.constant 0 : i32
    return %c0_i32, %c0_i32_0 : i32, i32
  }
  func.func @transform_9(%arg0: i32) -> (i32, i32) {
    %c0_i32 = arith.constant 0 : i32
    %c0_i32_0 = arith.constant 0 : i32
    %c0_i32_1 = arith.constant 0 : i32
    return %c0_i32, %c0_i32_0 : i32, i32
  }
  func.func @transform_10(%arg0: i32) -> (i32, i32) {
    %c0_i32 = arith.constant 0 : i32
    %c0_i32_0 = arith.constant 0 : i32
    %c0_i32_1 = arith.constant 0 : i32
    return %c0_i32, %c0_i32_0 : i32, i32
  }
  func.func @transform_11(%arg0: i32) -> (i32, i32) {
    %c0_i32 = arith.constant 0 : i32
    %c0_i32_0 = arith.constant 0 : i32
    %c0_i32_1 = arith.constant 0 : i32
    return %c0_i32, %c0_i32_0 : i32, i32
  }
  func.func @transform_12(%arg0: i32) -> (i32, i32) {
    %c0_i32 = arith.constant 0 : i32
    %c0_i32_0 = arith.constant 0 : i32
    %c0_i32_1 = arith.constant 0 : i32
    return %c0_i32, %c0_i32_0 : i32, i32
  }
  func.func @transform_13(%arg0: i32) -> (i32, i32) {
    %c0_i32 = arith.constant 0 : i32
    %c0_i32_0 = arith.constant 0 : i32
    %c0_i32_1 = arith.constant 0 : i32
    return %c0_i32, %c0_i32_0 : i32, i32
  }
  func.func @transform_14(%arg0: i32) -> (i32, i32) {
    %c0_i32 = arith.constant 0 : i32
    %c0_i32_0 = arith.constant 0 : i32
    return %arg0, %c0_i32 : i32, i32
  }
}

</mosaic_0001>

<llo_original>
// kernel: mul.19
$region0: #{mul.19}
  %s0 = inlined_call_operand.vmem [shape: f32[32,16], index: 0, kind: input, shape index: {}]
  %s1 = inlined_call_operand.vmem [shape: f32[512], index: 1, kind: output, shape index: {}]
  $region1: #{mul.19} parent=0
    #allocation0 [shape = 'u8[4096]{0}', space=vmem, size = 0x1000, scoped, tag = 'scoped mem for output reshape']
    %v2 = vld [vmem:[%s0] ss:$8 sm:$0xf]
    %vm3 = vcmask 130048
    %4 = vst.msk [vmem:[#allocation0] sm:$0xf] %vm3, %v2
    %s5 = scalar_lea.vmem %s0, 7
    %v6 = vld [vmem:[%s5] ss:$8 sm:$0xf]
    %7 = vrot.lane.b32.xlu0 %v6, 112
    %v8 = vpop.permute.xlu0 %7
    %vm9 = vcmask 1048448
    %10 = vst.msk [vmem:[#allocation0] sm:$0xf] %vm9, %v8
    %s11 = scalar_lea.vmem %s0, 6
    %v12 = vld [vmem:[%s11] ss:$8 sm:$0xf]
    %13 = vrot.lane.b32.xlu0 %v12, 96
    %v14 = vpop.permute.xlu0 %13
    %vm15 = vcmask 917248
    %16 = vst.msk [vmem:[#allocation0] sm:$0xf] %vm15, %v14
    %s17 = scalar_lea.vmem %s0, 5
    %v18 = vld [vmem:[%s17] ss:$8 sm:$0xf]
    %19 = vrot.lane.b32.xlu0 %v18, 80
    %v20 = vpop.permute.xlu0 %19
    %vm21 = vcmask 786048
    %22 = vst.msk [vmem:[#allocation0] sm:$0xf] %vm21, %v20
    %s23 = scalar_lea.vmem %s0, 4
    %v24 = vld [vmem:[%s23] ss:$8 sm:$0xf]
    %25 = vrot.lane.b32.xlu0 %v24, 64
    %v26 = vpop.permute.xlu0 %25
    %vm27 = vcmask 654848
    %28 = vst.msk [vmem:[#allocation0] sm:$0xf] %vm27, %v26
    %s29 = scalar_lea.vmem %s0, 3
    %v30 = vld [vmem:[%s29] ss:$8 sm:$0xf]
    %31 = vrot.lane.b32.xlu0 %v30, 48
    %v32 = vpop.permute.xlu0 %31
    %vm33 = vcmask 523648
    %34 = vst.msk [vmem:[#allocation0] sm:$0xf] %vm33, %v32
    %s35 = scalar_lea.vmem %s0, 2
    %v36 = vld [vmem:[%s35] ss:$8 sm:$0xf]
    %37 = vrot.lane.b32.xlu0 %v36, 32
    %v38 = vpop.permute.xlu0 %37
    %vm39 = vcmask 392448
    %40 = vst.msk [vmem:[#allocation0] sm:$0xf] %vm39, %v38
    %s41 = scalar_lea.vmem %s0, 1
    %v42 = vld [vmem:[%s41] ss:$8 sm:$0xf]
    %43 = vrot.lane.b32.xlu0 %v42, 16
    %v44 = vpop.permute.xlu0 %43
    %vm45 = vcmask 261248
    %46 = vst.msk [vmem:[#allocation0] sm:$0xf] %vm45, %v44
    %s48 = sshllo.u32 0, 4
    %v50 = vld [vmem:[#allocation0] sm:%s48]
    %s51 = sshllo.u32 0, 4
    %52 = vst [vmem:[%s1] sm:%s51] %v50

// kernel: mul.25
$region0: #{mul.25}
  %s0 = inlined_call_operand.vmem [shape: f32[64,4], index: 0, kind: input, shape index: {}]
  %s1 = inlined_call_operand.vmem [shape: f32[256], index: 1, kind: output, shape index: {}]
  $region1: #{mul.25} parent=0
    #allocation0 [shape = 'u8[4096]{0}', space=vmem, size = 0x1000, scoped, tag = 'scoped mem for output reshape']
    %v2 = vld [vmem:[%s0] sm:$0x1]
    %s3 = scalar_lea.vmem %s0, 31
    %v4 = vld [vmem:[%s3] sm:$0x2]
    %vm5 = vcmask 1041409
    %v6 = vsel %vm5, %v4, %v2
    %vm7 = vcmask 31744
    %8 = vst.msk [vmem:[#allocation0] sm:$0x3] %vm7, %v6
    %s9 = scalar_lea.vmem %s0, 31
    %v10 = vld [vmem:[%s9] sm:$0x1]
    %s11 = scalar_lea.vmem %s0, 62
    %v12 = vld [vmem:[%s11] sm:$0x2]
    %vm13 = vcmask 1041409
    %v14 = vsel %vm13, %v12, %v10
    %15 = vrot.lane.b32.xlu0 %v14, 124
    %v16 = vpop.permute.xlu0 %15
    %vm17 = vcmask 1048544
    %18 = vst.msk [vmem:[#allocation0] sm:$0x3] %vm17, %v16
    %s19 = scalar_lea.vmem %s0, 30
    %v20 = vld [vmem:[%s19] sm:$0x1]
    %s21 = scalar_lea.vmem %s0, 61
    %v22 = vld [vmem:[%s21] sm:$0x2]
    %vm23 = vcmask 1041409
    %v24 = vsel %vm23, %v22, %v20
    %25 = vrot.lane.b32.xlu0 %v24, 120
    %v26 = vpop.permute.xlu0 %25
    %vm27 = vcmask 1015744
    %28 = vst.msk [vmem:[#allocation0] sm:$0x3] %vm27, %v26
    %s29 = scalar_lea.vmem %s0, 29
    %v30 = vld [vmem:[%s29] sm:$0x1]
    %s31 = scalar_lea.vmem %s0, 60
    %v32 = vld [vmem:[%s31] sm:$0x2]
    %vm33 = vcmask 1041409
    %v34 = vsel %vm33, %v32, %v30
    %35 = vrot.lane.b32.xlu0 %v34, 116
    %v36 = vpop.permute.xlu0 %35
    %vm37 = vcmask 982944
    %38 = vst.msk [vmem:[#allocation0] sm:$0x3] %vm37, %v36
    %s39 = scalar_lea.vmem %s0, 28
    %v40 = vld [vmem:[%s39] sm:$0x1]
    %s41 = scalar_lea.vmem %s0, 59
    %v42 = vld [vmem:[%s41] sm:$0x2]
    %vm43 = vcmask 1041409
    %v44 = vsel %vm43, %v42, %v40
    %45 = vrot.lane.b32.xlu0 %v44, 112
    %v46 = vpop.permute.xlu0 %45
    %vm47 = vcmask 950144
    %48 = vst.msk [vmem:[#allocation0] sm:$0x3] %vm47, %v46
    %s49 = scalar_lea.vmem %s0, 27
    %v50 = vld [vmem:[%s49] sm:$0x1]
    %s51 = scalar_lea.vmem %s0, 58
    %v52 = vld [vmem:[%s51] sm:$0x2]
    %vm53 = vcmask 1041409
    %v54 = vsel %vm53, %v52, %v50
    %55 = vrot.lane.b32.xlu0 %v54, 108
    %v56 = vpop.permute.xlu0 %55
    %vm57 = vcmask 917344
    %58 = vst.msk [vmem:[#allocation0] sm:$0x3] %vm57, %v56
    %s59 = scalar_lea.vmem %s0, 26
    %v60 = vld [vmem:[%s59] sm:$0x1]
    %s61 = scalar_lea.vmem %s0, 57
    %v62 = vld [vmem:[%s61] sm:$0x2]
    %vm63 = vcmask 1041409
    %v64 = vsel %vm63, %v62, %v60
    %65 = vrot.lane.b32.xlu0 %v64, 104
    %v66 = vpop.permute.xlu0 %65
    %vm67 = vcmask 884544
    %68 = vst.msk [vmem:[#allocation0] sm:$0x3] %vm67, %v66
    %s69 = scalar_lea.vmem %s0, 25
    %v70 = vld [vmem:[%s69] sm:$0x1]
    %s71 = scalar_lea.vmem %s0, 56
    %v72 = vld [vmem:[%s71] sm:$0x2]
    %vm73 = vcmask 1041409
    %v74 = vsel %vm73, %v72, %v70
    %75 = vrot.lane.b32.xlu0 %v74, 100
    %v76 = vpop.permute.xlu0 %75
    %vm77 = vcmask 851744
    %78 = vst.msk [vmem:[#allocation0] sm:$0x3] %vm77, %v76
    %s79 = scalar_lea.vmem %s0, 24
    %v80 = vld [vmem:[%s79] sm:$0x1]
    %s81 = scalar_lea.vmem %s0, 55
    %v82 = vld [vmem:[%s81] sm:$0x2]
    %vm83 = vcmask 1041409
    %v84 = vsel %vm83, %v82, %v80
    %85 = vrot.lane.b32.xlu0 %v84, 96
    %v86 = vpop.permute.xlu0 %85
    %vm87 = vcmask 818944
    %88 = vst.msk [vmem:[#allocation0] sm:$0x3] %vm87, %v86
    %s89 = scalar_lea.vmem %s0, 23
    %v90 = vld [vmem:[%s89] sm:$0x1]
    %s91 = scalar_lea.vmem %s0, 54
    %v92 = vld [vmem:[%s91] sm:$0x2]
    %vm93 = vcmask 1041409
    %v94 = vsel %vm93, %v92, %v90
    %95 = vrot.lane.b32.xlu0 %v94, 92
    %v96 = vpop.permute.xlu0 %95
    %vm97 = vcmask 786144
    %98 = vst.msk [vmem:[#allocation0] sm:$0x3] %vm97, %v96
    %s99 = scalar_lea.vmem %s0, 22
    %v100 = vld [vmem:[%s99] sm:$0x1]
    %s101 = scalar_lea.vmem %s0, 53
    %v102 = vld [vmem:[%s101] sm:$0x2]
    %vm103 = vcmask 1041409
    %v104 = vsel %vm103, %v102, %v100
    %105 = vrot.lane.b32.xlu0 %v104, 88
    %v106 = vpop.permute.xlu0 %105
    %vm107 = vcmask 753344
    %108 = vst.msk [vmem:[#allocation0] sm:$0x3] %vm107, %v106
    %s109 = scalar_lea.vmem %s0, 21
    %v110 = vld [vmem:[%s109] sm:$0x1]
    %s111 = scalar_lea.vmem %s0, 52
    %v112 = vld [vmem:[%s111] sm:$0x2]
    %vm113 = vcmask 1041409
    %v114 = vsel %vm113, %v112, %v110
    %115 = vrot.lane.b32.xlu0 %v114, 84
    %v116 = vpop.permute.xlu0 %115
    %vm117 = vcmask 720544
    %118 = vst.msk [vmem:[#allocation0] sm:$0x3] %vm117, %v116
    %s119 = scalar_lea.vmem %s0, 20
    %v120 = vld [vmem:[%s119] sm:$0x1]
    %s121 = scalar_lea.vmem %s0, 51
    %v122 = vld [vmem:[%s121] sm:$0x2]
    %vm123 = vcmask 1041409
    %v124 = vsel %vm123, %v122, %v120
    %125 = vrot.lane.b32.xlu0 %v124, 80
    %v126 = vpop.permute.xlu0 %125
    %vm127 = vcmask 687744
    %128 = vst.msk [vmem:[#allocation0] sm:$0x3] %vm127, %v126
    %s129 = scalar_lea.vmem %s0, 19
    %v130 = vld [vmem:[%s129] sm:$0x1]
    %s131 = scalar_lea.vmem %s0, 50
    %v132 = vld [vmem:[%s131] sm:$0x2]
    %vm133 = vcmask 1041409
    %v134 = vsel %vm133, %v132, %v130
    %135 = vrot.lane.b32.xlu0 %v134, 76
    %v136 = vpop.permute.xlu0 %135
    %vm137 = vcmask 654944
    %138 = vst.msk [vmem:[#allocation0] sm:$0x3] %vm137, %v136
    %s139 = scalar_lea.vmem %s0, 18
    %v140 = vld [vmem:[%s139] sm:$0x1]
    %s141 = scalar_lea.vmem %s0, 49
    %v142 = vld [vmem:[%s141] sm:$0x2]
    %vm143 = vcmask 1041409
    %v144 = vsel %vm143, %v142, %v140
    %145 = vrot.lane.b32.xlu0 %v144, 72
    %v146 = vpop.permute.xlu0 %145
    %vm147 = vcmask 622144
    %148 = vst.msk [vmem:[#allocation0] sm:$0x3] %vm147, %v146
    %s149 = scalar_lea.vmem %s0, 17
    %v150 = vld [vmem:[%s149] sm:$0x1]
    %s151 = scalar_lea.vmem %s0, 48
    %v152 = vld [vmem:[%s151] sm:$0x2]
    %vm153 = vcmask 1041409
    %v154 = vsel %vm153, %v152, %v150
    %155 = vrot.lane.b32.xlu0 %v154, 68
    %v156 = vpop.permute.xlu0 %155
    %vm157 = vcmask 589344
    %158 = vst.msk [vmem:[#allocation0] sm:$0x3] %vm157, %v156
    %s159 = scalar_lea.vmem %s0, 16
    %v160 = vld [vmem:[%s159] sm:$0x1]
    %s161 = scalar_lea.vmem %s0, 47
    %v162 = vld [vmem:[%s161] sm:$0x2]
    %vm163 = vcmask 1041409
    %v164 = vsel %vm163, %v162, %v160
    %165 = vrot.lane.b32.xlu0 %v164, 64
    %v166 = vpop.permute.xlu0 %165
    %vm167 = vcmask 556544
    %168 = vst.msk [vmem:[#allocation0] sm:$0x3] %vm167, %v166
    %s169 = scalar_lea.vmem %s0, 15
    %v170 = vld [vmem:[%s169] sm:$0x1]
    %s171 = scalar_lea.vmem %s0, 46
    %v172 = vld [vmem:[%s171] sm:$0x2]
    %vm173 = vcmask 1041409
    %v174 = vsel %vm173, %v172, %v170
    %175 = vrot.lane.b32.xlu0 %v174, 60
    %v176 = vpop.permute.xlu0 %175
    %vm177 = vcmask 523744
    %178 = vst.msk [vmem:[#allocation0] sm:$0x3] %vm177, %v176
    %s179 = scalar_lea.vmem %s0, 14
    %v180 = vld [vmem:[%s179] sm:$0x1]
    %s181 = scalar_lea.vmem %s0, 45
    %v182 = vld [vmem:[%s181] sm:$0x2]
    %vm183 = vcmask 1041409
    %v184 = vsel %vm183, %v182, %v180
    %185 = vrot.lane.b32.xlu0 %v184, 56
    %v186 = vpop.permute.xlu0 %185
    %vm187 = vcmask 490944
    %188 = vst.msk [vmem:[#allocation0] sm:$0x3] %vm187, %v186
    %s189 = scalar_lea.vmem %s0, 13
    %v190 = vld [vmem:[%s189] sm:$0x1]
    %s191 = scalar_lea.vmem %s0, 44
    %v192 = vld [vmem:[%s191] sm:$0x2]
    %vm193 = vcmask 1041409
    %v194 = vsel %vm193, %v192, %v190
    %195 = vrot.lane.b32.xlu0 %v194, 52
    %v196 = vpop.permute.xlu0 %195
    %vm197 = vcmask 458144
    %198 = vst.msk [vmem:[#allocation0] sm:$0x3] %vm197, %v196
    %s199 = scalar_lea.vmem %s0, 12
    %v200 = vld [vmem:[%s199] sm:$0x1]
    %s201 = scalar_lea.vmem %s0, 43
    %v202 = vld [vmem:[%s201] sm:$0x2]
    %vm203 = vcmask 1041409
    %v204 = vsel %vm203, %v202, %v200
    %205 = vrot.lane.b32.xlu0 %v204, 48
    %v206 = vpop.permute.xlu0 %205
    %vm207 = vcmask 425344
    %208 = vst.msk [vmem:[#allocation0] sm:$0x3] %vm207, %v206
    %s209 = scalar_lea.vmem %s0, 11
    %v210 = vld [vmem:[%s209] sm:$0x1]
    %s211 = scalar_lea.vmem %s0, 42
    %v212 = vld [vmem:[%s211] sm:$0x2]
    %vm213 = vcmask 1041409
    %v214 = vsel %vm213, %v212, %v210
    %215 = vrot.lane.b32.xlu0 %v214, 44
    %v216 = vpop.permute.xlu0 %215
    %vm217 = vcmask 392544
    %218 = vst.msk [vmem:[#allocation0] sm:$0x3] %vm217, %v216
    %s219 = scalar_lea.vmem %s0, 10
    %v220 = vld [vmem:[%s219] sm:$0x1]
    %s221 = scalar_lea.vmem %s0, 41
    %v222 = vld [vmem:[%s221] sm:$0x2]
    %vm223 = vcmask 1041409
    %v224 = vsel %vm223, %v222, %v220
    %225 = vrot.lane.b32.xlu0 %v224, 40
    %v226 = vpop.permute.xlu0 %225
    %vm227 = vcmask 359744
    %228 = vst.msk [vmem:[#allocation0] sm:$0x3] %vm227, %v226
    %s229 = scalar_lea.vmem %s0, 9
    %v230 = vld [vmem:[%s229] sm:$0x1]
    %s231 = scalar_lea.vmem %s0, 40
    %v232 = vld [vmem:[%s231] sm:$0x2]
    %vm233 = vcmask 1041409
    %v234 = vsel %vm233, %v232, %v230
    %235 = vrot.lane.b32.xlu0 %v234, 36
    %v236 = vpop.permute.xlu0 %235
    %vm237 = vcmask 326944
    %238 = vst.msk [vmem:[#allocation0] sm:$0x3] %vm237, %v236
    %s239 = scalar_lea.vmem %s0, 8
    %v240 = vld [vmem:[%s239] sm:$0x1]
    %s241 = scalar_lea.vmem %s0, 39
    %v242 = vld [vmem:[%s241] sm:$0x2]
    %vm243 = vcmask 1041409
    %v244 = vsel %vm243, %v242, %v240
    %245 = vrot.lane.b32.xlu0 %v244, 32
    %v246 = vpop.permute.xlu0 %245
    %vm247 = vcmask 294144
    %248 = vst.msk [vmem:[#allocation0] sm:$0x3] %vm247, %v246
    %s249 = scalar_lea.vmem %s0, 7
    %v250 = vld [vmem:[%s249] sm:$0x1]
    %s251 = scalar_lea.vmem %s0, 38
    %v252 = vld [vmem:[%s251] sm:$0x2]
    %vm253 = vcmask 1041409
    %v254 = vsel %vm253, %v252, %v250
    %255 = vrot.lane.b32.xlu0 %v254, 28
    %v256 = vpop.permute.xlu0 %255
    %vm257 = vcmask 261344
    %258 = vst.msk [vmem:[#allocation0] sm:$0x3] %vm257, %v256
    %s259 = scalar_lea.vmem %s0, 6
    %v260 = vld [vmem:[%s259] sm:$0x1]
    %s261 = scalar_lea.vmem %s0, 37
    %v262 = vld [vmem:[%s261] sm:$0x2]
    %vm263 = vcmask 1041409
    %v264 = vsel %vm263, %v262, %v260
    %265 = vrot.lane.b32.xlu0 %v264, 24
    %v266 = vpop.permute.xlu0 %265
    %vm267 = vcmask 228544
    %268 = vst.msk [vmem:[#allocation0] sm:$0x3] %vm267, %v266
    %s269 = scalar_lea.vmem %s0, 5
    %v270 = vld [vmem:[%s269] sm:$0x1]
    %s271 = scalar_lea.vmem %s0, 36
    %v272 = vld [vmem:[%s271] sm:$0x2]
    %vm273 = vcmask 1041409
    %v274 = vsel %vm273, %v272, %v270
    %275 = vrot.lane.b32.xlu0 %v274, 20
    %v276 = vpop.permute.xlu0 %275
    %vm277 = vcmask 195744
    %278 = vst.msk [vmem:[#allocation0] sm:$0x3] %vm277, %v276
    %s279 = scalar_lea.vmem %s0, 4
    %v280 = vld [vmem:[%s279] sm:$0x1]
    %s281 = scalar_lea.vmem %s0, 35
    %v282 = vld [vmem:[%s281] sm:$0x2]
    %vm283 = vcmask 1041409
    %v284 = vsel %vm283, %v282, %v280
    %285 = vrot.lane.b32.xlu0 %v284, 16
    %v286 = vpop.permute.xlu0 %285
    %vm287 = vcmask 162944
    %288 = vst.msk [vmem:[#allocation0] sm:$0x3] %vm287, %v286
    %s289 = scalar_lea.vmem %s0, 3
    %v290 = vld [vmem:[%s289] sm:$0x1]
    %s291 = scalar_lea.vmem %s0, 34
    %v292 = vld [vmem:[%s291] sm:$0x2]
    %vm293 = vcmask 1041409
    %v294 = vsel %vm293, %v292, %v290
    %295 = vrot.lane.b32.xlu0 %v294, 12
    %v296 = vpop.permute.xlu0 %295
    %vm297 = vcmask 130144
    %298 = vst.msk [vmem:[#allocation0] sm:$0x3] %vm297, %v296
    %s299 = scalar_lea.vmem %s0, 2
    %v300 = vld [vmem:[%s299] sm:$0x1]
    %s301 = scalar_lea.vmem %s0, 33
    %v302 = vld [vmem:[%s301] sm:$0x2]
    %vm303 = vcmask 1041409
    %v304 = vsel %vm303, %v302, %v300
    %305 = vrot.lane.b32.xlu0 %v304, 8
    %v306 = vpop.permute.xlu0 %305
    %vm307 = vcmask 97344
    %308 = vst.msk [vmem:[#allocation0] sm:$0x3] %vm307, %v306
    %s309 = scalar_lea.vmem %s0, 1
    %v310 = vld [vmem:[%s309] sm:$0x1]
    %s311 = scalar_lea.vmem %s0, 32
    %v312 = vld [vmem:[%s311] sm:$0x2]
    %vm313 = vcmask 1041409
    %v314 = vsel %vm313, %v312, %v310
    %315 = vrot.lane.b32.xlu0 %v314, 4
    %v316 = vpop.permute.xlu0 %315
    %vm317 = vcmask 64544
    %318 = vst.msk [vmem:[#allocation0] sm:$0x3] %vm317, %v316
    %s320 = sshllo.u32 0, 2
    %v322 = vld [vmem:[#allocation0] sm:%s320]
    %s323 = sshllo.u32 0, 2
    %324 = vst [vmem:[%s1] sm:%s323] %v322

// kernel: mul.17
$region0: #{mul.17}
  #allocation0 [shape = 's32[1]{0}', space=sflag, size = 0x4, scoped, tag = 'scoped memory for mul.17']
  %s0 = inlined_call_operand.vmem [shape: f32[64], index: 0, kind: input, shape index: {}]
  %s1 = inlined_call_operand.vmem [shape: f32[64], index: 1, kind: input, shape index: {}]
  %s2 = inlined_call_operand.vmem [shape: f32[64], index: 2, kind: output, shape index: {}]
  %v3 = vld [vmem:[%s0] sm:$0x1]
  %v4 = vld [vmem:[%s1] sm:$0x1]
  %5 = xla_tuple %v3, %v4
  %6 = xla_tuple %5
  %v7 = vmul.f32 %v3, %v4
  %8 = xla_tuple %v7
  %9 = vst [vmem:[%s2] sm:$0x1] %v7

// kernel: mul.16
$region0: #{mul.16}
  #allocation0 [shape = 's32[1]{0}', space=sflag, size = 0x4, scoped, tag = 'scoped memory for mul.16']
  %s0 = inlined_call_operand.vmem [shape: f32[32], index: 0, kind: input, shape index: {}]
  %s1 = inlined_call_operand.vmem [shape: f32[32], index: 1, kind: input, shape index: {}]
  %s2 = inlined_call_operand.vmem [shape: f32[32], index: 2, kind: output, shape index: {}]
  %v3 = vld [vmem:[%s0] sm:$0x1]
  %v4 = vld [vmem:[%s1] sm:$0x1]
  %5 = xla_tuple %v3, %v4
  %6 = xla_tuple %5
  %v7 = vmul.f32 %v3, %v4
  %8 = xla_tuple %v7
  %9 = vst [vmem:[%s2] sm:$0x1] %v7

// kernel: discriminator_weak_forward.1
$region0: #{discriminator_weak_forward.1}
  #allocation0 [shape = 'u32[]', space=smem, size = 0x4, offset = 0x4, fixed_abs, tag = 'smem constant byte address 0x4 - core index']
  #allocation1 [shape = 'u32[144,128]{1,0:T(1,128)}', space=vmem, size = 0x12000, scoped, tag = 'internal scratch']
  %s0 = inlined_call_operand.vmem [shape: bf16[16,256], index: 0, kind: input, shape index: {}]
  %s1 = inlined_call_operand.vmem [shape: bf16[256,1024], index: 1, kind: input, shape index: {}]
  %s2 = inlined_call_operand.vmem [shape: f32[1,1024], index: 2, kind: input, shape index: {}]
  %s3 = inlined_call_operand.vmem [shape: bf16[1024,512], index: 3, kind: input, shape index: {}]
  %s4 = inlined_call_operand.vmem [shape: f32[1,512], index: 4, kind: input, shape index: {}]
  %s5 = inlined_call_operand.vmem [shape: f32[1,512], index: 5, kind: input, shape index: {}]
  %s6 = inlined_call_operand.vmem [shape: bf16[512,256], index: 6, kind: input, shape index: {}]
  %s7 = inlined_call_operand.vmem [shape: f32[1,256], index: 7, kind: input, shape index: {}]
  %s8 = inlined_call_operand.vmem [shape: f32[1,256], index: 8, kind: input, shape index: {}]
  %s9 = inlined_call_operand.vmem [shape: bf16[256,128], index: 9, kind: input, shape index: {}]
  %s10 = inlined_call_operand.vmem [shape: f32[1,128], index: 10, kind: input, shape index: {}]
  %s11 = inlined_call_operand.vmem [shape: f32[1,128], index: 11, kind: input, shape index: {}]
  %s12 = inlined_call_operand.vmem [shape: bf16[128,128], index: 12, kind: input, shape index: {}]
  %s13 = inlined_call_operand.vmem [shape: f32[1,128], index: 13, kind: input, shape index: {}]
  %s14 = inlined_call_operand.vmem [shape: f32[16,128], index: 14, kind: output, shape index: {}]
  %s15 = sld [smem:[#allocation0]]
  $region66: #{discriminator_weak_forward.1} parent=0
    _
  %s17 = ssub.s32 1, %s15
  %s18 = scalar_select 0, %s17, %s15
  // Predicated region
  $region2: #{discriminator_weak_forward.1} parent=0 // pred_check
    _
  $region3: #{discriminator_weak_forward.1} parent=0 // pred_check_branch
    %20 = sbr.rel (0) target = $region5
  $region4: #{discriminator_weak_forward.1} parent=0 // pred_region
    _
  $region5: #{discriminator_weak_forward.1} parent=0 // pred_fallthru
    _
  // Predicated region
  $region6: #{discriminator_weak_forward.1} parent=0 // pred_check
    _
  $region7: #{discriminator_weak_forward.1} parent=0 // pred_check_branch
    %22 = sbr.rel (0) target = $region9
  $region8: #{discriminator_weak_forward.1} parent=0 // pred_region
    _
  $region9: #{discriminator_weak_forward.1} parent=0 // pred_fallthru
    _
  // Predicated region
  $region10: #{discriminator_weak_forward.1} parent=0 // pred_check
    _
  $region11: #{discriminator_weak_forward.1} parent=0 // pred_check_branch
    %24 = sbr.rel (0) target = $region13
  $region12: #{discriminator_weak_forward.1} parent=0 // pred_region
    _
  $region13: #{discriminator_weak_forward.1} parent=0 // pred_fallthru
    _
  // Predicated region
  $region14: #{discriminator_weak_forward.1} parent=0 // pred_check
    _
  $region15: #{discriminator_weak_forward.1} parent=0 // pred_check_branch
    %26 = sbr.rel (0) target = $region17
  $region16: #{discriminator_weak_forward.1} parent=0 // pred_region
    _
  $region17: #{discriminator_weak_forward.1} parent=0 // pred_fallthru
    _
  // Predicated region
  $region18: #{discriminator_weak_forward.1} parent=0 // pred_check
    _
  $region19: #{discriminator_weak_forward.1} parent=0 // pred_check_branch
    %28 = sbr.rel (0) target = $region21
  $region20: #{discriminator_weak_forward.1} parent=0 // pred_region
    _
  $region21: #{discriminator_weak_forward.1} parent=0 // pred_fallthru
    _
  // Predicated region
  $region22: #{discriminator_weak_forward.1} parent=0 // pred_check
    _
  $region23: #{discriminator_weak_forward.1} parent=0 // pred_check_branch
    %30 = sbr.rel (0) target = $region25
  $region24: #{discriminator_weak_forward.1} parent=0 // pred_region
    _
  $region25: #{discriminator_weak_forward.1} parent=0 // pred_fallthru
    _
  // Predicated region
  $region26: #{discriminator_weak_forward.1} parent=0 // pred_check
    _
  $region27: #{discriminator_weak_forward.1} parent=0 // pred_check_branch
    %32 = sbr.rel (0) target = $region29
  $region28: #{discriminator_weak_forward.1} parent=0 // pred_region
    _
  $region29: #{discriminator_weak_forward.1} parent=0 // pred_fallthru
    _
  // Predicated region
  $region30: #{discriminator_weak_forward.1} parent=0 // pred_check
    _
  $region31: #{discriminator_weak_forward.1} parent=0 // pred_check_branch
    %34 = sbr.rel (0) target = $region33
  $region32: #{discriminator_weak_forward.1} parent=0 // pred_region
    _
  $region33: #{discriminator_weak_forward.1} parent=0 // pred_fallthru
    _
  // Predicated region
  $region34: #{discriminator_weak_forward.1} parent=0 // pred_check
    _
  $region35: #{discriminator_weak_forward.1} parent=0 // pred_check_branch
    %36 = sbr.rel (0) target = $region37
  $region36: #{discriminator_weak_forward.1} parent=0 // pred_region
    _
  $region37: #{discriminator_weak_forward.1} parent=0 // pred_fallthru
    _
  // Predicated region
  $region38: #{discriminator_weak_forward.1} parent=0 // pred_check
    _
  $region39: #{discriminator_weak_forward.1} parent=0 // pred_check_branch
    %38 = sbr.rel (0) target = $region41
  $region40: #{discriminator_weak_forward.1} parent=0 // pred_region
    _
  $region41: #{discriminator_weak_forward.1} parent=0 // pred_fallthru
    _
  // Predicated region
  $region42: #{discriminator_weak_forward.1} parent=0 // pred_check
    _
  $region43: #{discriminator_weak_forward.1} parent=0 // pred_check_branch
    %40 = sbr.rel (0) target = $region45
  $region44: #{discriminator_weak_forward.1} parent=0 // pred_region
    _
  $region45: #{discriminator_weak_forward.1} parent=0 // pred_fallthru
    _
  // Predicated region
  $region46: #{discriminator_weak_forward.1} parent=0 // pred_check
    _
  $region47: #{discriminator_weak_forward.1} parent=0 // pred_check_branch
    %42 = sbr.rel (0) target = $region49
  $region48: #{discriminator_weak_forward.1} parent=0 // pred_region
    _
  $region49: #{discriminator_weak_forward.1} parent=0 // pred_fallthru
    _
  // Predicated region
  $region50: #{discriminator_weak_forward.1} parent=0 // pred_check
    _
  $region51: #{discriminator_weak_forward.1} parent=0 // pred_check_branch
    %44 = sbr.rel (0) target = $region53
  $region52: #{discriminator_weak_forward.1} parent=0 // pred_region
    _
  $region53: #{discriminator_weak_forward.1} parent=0 // pred_fallthru
    _
  // Predicated region
  $region54: #{discriminator_weak_forward.1} parent=0 // pred_check
    _
  $region55: #{discriminator_weak_forward.1} parent=0 // pred_check_branch
    %46 = sbr.rel (0) target = $region57
  $region56: #{discriminator_weak_forward.1} parent=0 // pred_region
    _
  $region57: #{discriminator_weak_forward.1} parent=0 // pred_fallthru
    _
  %v48 = vld [vmem:[%s0] sm:$0xff]
  %v49 = vld [vmem:[%s0 + $0x8] sm:$0xff]
  %v50 = vld [vmem:[%s1] sm:$0xff]
  %v51 = vld [vmem:[%s1 + $0x8] sm:$0xff]
  %v52 = vld [vmem:[%s1 + $0x10] sm:$0xff]
  %v53 = vld [vmem:[%s1 + $0x18] sm:$0xff]
  %v54 = vld [vmem:[%s1 + $0x20] sm:$0xff]
  %v55 = vld [vmem:[%s1 + $0x28] sm:$0xff]
  %v56 = vld [vmem:[%s1 + $0x30] sm:$0xff]
  %v57 = vld [vmem:[%s1 + $0x38] sm:$0xff]
  %v58 = vld [vmem:[%s1 + $0x40] sm:$0xff]
  %v59 = vld [vmem:[%s1 + $0x48] sm:$0xff]
  %v60 = vld [vmem:[%s1 + $0x50] sm:$0xff]
  %v61 = vld [vmem:[%s1 + $0x58] sm:$0xff]
  %v62 = vld [vmem:[%s1 + $0x60] sm:$0xff]
  %v63 = vld [vmem:[%s1 + $0x68] sm:$0xff]
  %v64 = vld [vmem:[%s1 + $0x70] sm:$0xff]
  %v65 = vld [vmem:[%s1 + $0x78] sm:$0xff]
  %v66 = vld [vmem:[%s1 + $0x80] sm:$0xff]
  %v67 = vld [vmem:[%s1 + $0x88] sm:$0xff]
  %v68 = vld [vmem:[%s1 + $0x90] sm:$0xff]
  %v69 = vld [vmem:[%s1 + $0x98] sm:$0xff]
  %v70 = vld [vmem:[%s1 + $0xa0] sm:$0xff]
  %v71 = vld [vmem:[%s1 + $0xa8] sm:$0xff]
  %v72 = vld [vmem:[%s1 + $0xb0] sm:$0xff]
  %v73 = vld [vmem:[%s1 + $0xb8] sm:$0xff]
  %v74 = vld [vmem:[%s1 + $0xc0] sm:$0xff]
  %v75 = vld [vmem:[%s1 + $0xc8] sm:$0xff]
  %v76 = vld [vmem:[%s1 + $0xd0] sm:$0xff]
  %v77 = vld [vmem:[%s1 + $0xd8] sm:$0xff]
  %v78 = vld [vmem:[%s1 + $0xe0] sm:$0xff]
  %v79 = vld [vmem:[%s1 + $0xe8] sm:$0xff]
  %v80 = vld [vmem:[%s1 + $0xf0] sm:$0xff]
  %v81 = vld [vmem:[%s1 + $0xf8] sm:$0xff]
  %v82 = vld [vmem:[%s1 + $0x100] sm:$0xff]
  %v83 = vld [vmem:[%s1 + $0x108] sm:$0xff]
  %v84 = vld [vmem:[%s1 + $0x110] sm:$0xff]
  %v85 = vld [vmem:[%s1 + $0x118] sm:$0xff]
  %v86 = vld [vmem:[%s1 + $0x120] sm:$0xff]
  %v87 = vld [vmem:[%s1 + $0x128] sm:$0xff]
  %v88 = vld [vmem:[%s1 + $0x130] sm:$0xff]
  %v89 = vld [vmem:[%s1 + $0x138] sm:$0xff]
  %v90 = vld [vmem:[%s1 + $0x140] sm:$0xff]
  %v91 = vld [vmem:[%s1 + $0x148] sm:$0xff]
  %v92 = vld [vmem:[%s1 + $0x150] sm:$0xff]
  %v93 = vld [vmem:[%s1 + $0x158] sm:$0xff]
  %v94 = vld [vmem:[%s1 + $0x160] sm:$0xff]
  %v95 = vld [vmem:[%s1 + $0x168] sm:$0xff]
  %v96 = vld [vmem:[%s1 + $0x170] sm:$0xff]
  %v97 = vld [vmem:[%s1 + $0x178] sm:$0xff]
  %v98 = vld [vmem:[%s1 + $0x180] sm:$0xff]
  %v99 = vld [vmem:[%s1 + $0x188] sm:$0xff]
  %v100 = vld [vmem:[%s1 + $0x190] sm:$0xff]
  %v101 = vld [vmem:[%s1 + $0x198] sm:$0xff]
  %v102 = vld [vmem:[%s1 + $0x1a0] sm:$0xff]
  %v103 = vld [vmem:[%s1 + $0x1a8] sm:$0xff]
  %v104 = vld [vmem:[%s1 + $0x1b0] sm:$0xff]
  %v105 = vld [vmem:[%s1 + $0x1b8] sm:$0xff]
  %v106 = vld [vmem:[%s1 + $0x1c0] sm:$0xff]
  %v107 = vld [vmem:[%s1 + $0x1c8] sm:$0xff]
  %v108 = vld [vmem:[%s1 + $0x1d0] sm:$0xff]
  %v109 = vld [vmem:[%s1 + $0x1d8] sm:$0xff]
  %v110 = vld [vmem:[%s1 + $0x1e0] sm:$0xff]
  %v111 = vld [vmem:[%s1 + $0x1e8] sm:$0xff]
  %v112 = vld [vmem:[%s1 + $0x1f0] sm:$0xff]
  %v113 = vld [vmem:[%s1 + $0x1f8] sm:$0xff]
  %v114 = vld [vmem:[%s1 + $0x200] sm:$0xff]
  %v115 = vld [vmem:[%s1 + $0x208] sm:$0xff]
  %v116 = vld [vmem:[%s1 + $0x210] sm:$0xff]
  %v117 = vld [vmem:[%s1 + $0x218] sm:$0xff]
  %v118 = vld [vmem:[%s1 + $0x220] sm:$0xff]
  %v119 = vld [vmem:[%s1 + $0x228] sm:$0xff]
  %v120 = vld [vmem:[%s1 + $0x230] sm:$0xff]
  %v121 = vld [vmem:[%s1 + $0x238] sm:$0xff]
  %v122 = vld [vmem:[%s1 + $0x240] sm:$0xff]
  %v123 = vld [vmem:[%s1 + $0x248] sm:$0xff]
  %v124 = vld [vmem:[%s1 + $0x250] sm:$0xff]
  %v125 = vld [vmem:[%s1 + $0x258] sm:$0xff]
  %v126 = vld [vmem:[%s1 + $0x260] sm:$0xff]
  %v127 = vld [vmem:[%s1 + $0x268] sm:$0xff]
  %v128 = vld [vmem:[%s1 + $0x270] sm:$0xff]
  %v129 = vld [vmem:[%s1 + $0x278] sm:$0xff]
  %v130 = vld [vmem:[%s1 + $0x280] sm:$0xff]
  %v131 = vld [vmem:[%s1 + $0x288] sm:$0xff]
  %v132 = vld [vmem:[%s1 + $0x290] sm:$0xff]
  %v133 = vld [vmem:[%s1 + $0x298] sm:$0xff]
  %v134 = vld [vmem:[%s1 + $0x2a0] sm:$0xff]
  %v135 = vld [vmem:[%s1 + $0x2a8] sm:$0xff]
  %v136 = vld [vmem:[%s1 + $0x2b0] sm:$0xff]
  %v137 = vld [vmem:[%s1 + $0x2b8] sm:$0xff]
  %v138 = vld [vmem:[%s1 + $0x2c0] sm:$0xff]
  %v139 = vld [vmem:[%s1 + $0x2c8] sm:$0xff]
  %v140 = vld [vmem:[%s1 + $0x2d0] sm:$0xff]
  %v141 = vld [vmem:[%s1 + $0x2d8] sm:$0xff]
  %v142 = vld [vmem:[%s1 + $0x2e0] sm:$0xff]
  %v143 = vld [vmem:[%s1 + $0x2e8] sm:$0xff]
  %v144 = vld [vmem:[%s1 + $0x2f0] sm:$0xff]
  %v145 = vld [vmem:[%s1 + $0x2f8] sm:$0xff]
  %v146 = vld [vmem:[%s1 + $0x300] sm:$0xff]
  %v147 = vld [vmem:[%s1 + $0x308] sm:$0xff]
  %v148 = vld [vmem:[%s1 + $0x310] sm:$0xff]
  %v149 = vld [vmem:[%s1 + $0x318] sm:$0xff]
  %v150 = vld [vmem:[%s1 + $0x320] sm:$0xff]
  %v151 = vld [vmem:[%s1 + $0x328] sm:$0xff]
  %v152 = vld [vmem:[%s1 + $0x330] sm:$0xff]
  %v153 = vld [vmem:[%s1 + $0x338] sm:$0xff]
  %v154 = vld [vmem:[%s1 + $0x340] sm:$0xff]
  %v155 = vld [vmem:[%s1 + $0x348] sm:$0xff]
  %v156 = vld [vmem:[%s1 + $0x350] sm:$0xff]
  %v157 = vld [vmem:[%s1 + $0x358] sm:$0xff]
  %v158 = vld [vmem:[%s1 + $0x360] sm:$0xff]
  %v159 = vld [vmem:[%s1 + $0x368] sm:$0xff]
  %v160 = vld [vmem:[%s1 + $0x370] sm:$0xff]
  %v161 = vld [vmem:[%s1 + $0x378] sm:$0xff]
  %v162 = vld [vmem:[%s1 + $0x380] sm:$0xff]
  %v163 = vld [vmem:[%s1 + $0x388] sm:$0xff]
  %v164 = vld [vmem:[%s1 + $0x390] sm:$0xff]
  %v165 = vld [vmem:[%s1 + $0x398] sm:$0xff]
  %v166 = vld [vmem:[%s1 + $0x3a0] sm:$0xff]
  %v167 = vld [vmem:[%s1 + $0x3a8] sm:$0xff]
  %v168 = vld [vmem:[%s1 + $0x3b0] sm:$0xff]
  %v169 = vld [vmem:[%s1 + $0x3b8] sm:$0xff]
  %v170 = vld [vmem:[%s1 + $0x3c0] sm:$0xff]
  %v171 = vld [vmem:[%s1 + $0x3c8] sm:$0xff]
  %v172 = vld [vmem:[%s1 + $0x3d0] sm:$0xff]
  %v173 = vld [vmem:[%s1 + $0x3d8] sm:$0xff]
  %v174 = vld [vmem:[%s1 + $0x3e0] sm:$0xff]
  %v175 = vld [vmem:[%s1 + $0x3e8] sm:$0xff]
  %v176 = vld [vmem:[%s1 + $0x3f0] sm:$0xff]
  %v177 = vld [vmem:[%s1 + $0x3f8] sm:$0xff]
  %v178 = vld [vmem:[%s2] sm:$0xff]
  %v180 = vlaneseq
  %v181 = vshrl.u32 %v180, 7
  %v182 = vsub.s32 0, %v181
  %v183 = vrot.slane %v178, %v182
  %v184 = vlaneseq
  %v185 = vshrl.u32 %v184, 7
  %v186 = vsub.s32 1, %v185
  %v187 = vrot.slane %v178, %v186
  %v188 = vlaneseq
  %v189 = vshrl.u32 %v188, 7
  %v190 = vsub.s32 2, %v189
  %v191 = vrot.slane %v178, %v190
  %v192 = vlaneseq
  %v193 = vshrl.u32 %v192, 7
  %v194 = vsub.s32 3, %v193
  %v195 = vrot.slane %v178, %v194
  %v196 = vlaneseq
  %v197 = vshrl.u32 %v196, 7
  %v198 = vsub.s32 4, %v197
  %v199 = vrot.slane %v178, %v198
  %v200 = vlaneseq
  %v201 = vshrl.u32 %v200, 7
  %v202 = vsub.s32 5, %v201
  %v203 = vrot.slane %v178, %v202
  %v204 = vlaneseq
  %v205 = vshrl.u32 %v204, 7
  %v206 = vsub.s32 6, %v205
  %v207 = vrot.slane %v178, %v206
  %v208 = vlaneseq
  %v209 = vshrl.u32 %v208, 7
  %v210 = vsub.s32 7, %v209
  %v211 = vrot.slane %v178, %v210
  %v222 = vunpack.c.l.b16 %v48
  %v223 = vunpack.c.h.b16 %v48
  %v224 = vunpack.c.l.b16 %v49
  %v225 = vunpack.c.h.b16 %v49
  %v226 = vpack.c.b16 %v224, %v222
  %v227 = vpack.c.b16 %v225, %v223
  %v358 = vunpack.c.l.b16 %v50
  %v359 = vunpack.c.h.b16 %v50
  %v360 = vunpack.c.l.b16 %v51
  %v361 = vunpack.c.h.b16 %v51
  %v362 = vunpack.c.l.b16 %v52
  %v363 = vunpack.c.h.b16 %v52
  %v364 = vunpack.c.l.b16 %v53
  %v365 = vunpack.c.h.b16 %v53
  %v366 = vunpack.c.l.b16 %v54
  %v367 = vunpack.c.h.b16 %v54
  %v368 = vunpack.c.l.b16 %v55
  %v369 = vunpack.c.h.b16 %v55
  %v370 = vunpack.c.l.b16 %v56
  %v371 = vunpack.c.h.b16 %v56
  %v372 = vunpack.c.l.b16 %v57
  %v373 = vunpack.c.h.b16 %v57
  %v374 = vunpack.c.l.b16 %v58
  %v375 = vunpack.c.h.b16 %v58
  %v376 = vunpack.c.l.b16 %v59
  %v377 = vunpack.c.h.b16 %v59
  %v378 = vunpack.c.l.b16 %v60
  %v379 = vunpack.c.h.b16 %v60
  %v380 = vunpack.c.l.b16 %v61
  %v381 = vunpack.c.h.b16 %v61
  %v382 = vunpack.c.l.b16 %v62
  %v383 = vunpack.c.h.b16 %v62
  %v384 = vunpack.c.l.b16 %v63
  %v385 = vunpack.c.h.b16 %v63
  %v386 = vunpack.c.l.b16 %v64
  %v387 = vunpack.c.h.b16 %v64
  %v388 = vunpack.c.l.b16 %v65
  %v389 = vunpack.c.h.b16 %v65
  %v390 = vunpack.c.l.b16 %v66
  %v391 = vunpack.c.h.b16 %v66
  %v392 = vunpack.c.l.b16 %v67
  %v393 = vunpack.c.h.b16 %v67
  %v394 = vunpack.c.l.b16 %v68
  %v395 = vunpack.c.h.b16 %v68
  %v396 = vunpack.c.l.b16 %v69
  %v397 = vunpack.c.h.b16 %v69
  %v398 = vunpack.c.l.b16 %v70
  %v399 = vunpack.c.h.b16 %v70
  %v400 = vunpack.c.l.b16 %v71
  %v401 = vunpack.c.h.b16 %v71
  %v402 = vunpack.c.l.b16 %v72
  %v403 = vunpack.c.h.b16 %v72
  %v404 = vunpack.c.l.b16 %v73
  %v405 = vunpack.c.h.b16 %v73
  %v406 = vunpack.c.l.b16 %v74
  %v407 = vunpack.c.h.b16 %v74
  %v408 = vunpack.c.l.b16 %v75
  %v409 = vunpack.c.h.b16 %v75
  %v410 = vunpack.c.l.b16 %v76
  %v411 = vunpack.c.h.b16 %v76
  %v412 = vunpack.c.l.b16 %v77
  %v413 = vunpack.c.h.b16 %v77
  %v414 = vunpack.c.l.b16 %v78
  %v415 = vunpack.c.h.b16 %v78
  %v416 = vunpack.c.l.b16 %v79
  %v417 = vunpack.c.h.b16 %v79
  %v418 = vunpack.c.l.b16 %v80
  %v419 = vunpack.c.h.b16 %v80
  %v420 = vunpack.c.l.b16 %v81
  %v421 = vunpack.c.h.b16 %v81
  %v422 = vunpack.c.l.b16 %v82
  %v423 = vunpack.c.h.b16 %v82
  %v424 = vunpack.c.l.b16 %v83
  %v425 = vunpack.c.h.b16 %v83
  %v426 = vunpack.c.l.b16 %v84
  %v427 = vunpack.c.h.b16 %v84
  %v428 = vunpack.c.l.b16 %v85
  %v429 = vunpack.c.h.b16 %v85
  %v430 = vunpack.c.l.b16 %v86
  %v431 = vunpack.c.h.b16 %v86
  %v432 = vunpack.c.l.b16 %v87
  %v433 = vunpack.c.h.b16 %v87
  %v434 = vunpack.c.l.b16 %v88
  %v435 = vunpack.c.h.b16 %v88
  %v436 = vunpack.c.l.b16 %v89
  %v437 = vunpack.c.h.b16 %v89
  %v438 = vunpack.c.l.b16 %v90
  %v439 = vunpack.c.h.b16 %v90
  %v440 = vunpack.c.l.b16 %v91
  %v441 = vunpack.c.h.b16 %v91
  %v442 = vunpack.c.l.b16 %v92
  %v443 = vunpack.c.h.b16 %v92
  %v444 = vunpack.c.l.b16 %v93
  %v445 = vunpack.c.h.b16 %v93
  %v446 = vunpack.c.l.b16 %v94
  %v447 = vunpack.c.h.b16 %v94
  %v448 = vunpack.c.l.b16 %v95
  %v449 = vunpack.c.h.b16 %v95
  %v450 = vunpack.c.l.b16 %v96
  %v451 = vunpack.c.h.b16 %v96
  %v452 = vunpack.c.l.b16 %v97
  %v453 = vunpack.c.h.b16 %v97
  %v454 = vunpack.c.l.b16 %v98
  %v455 = vunpack.c.h.b16 %v98
  %v456 = vunpack.c.l.b16 %v99
  %v457 = vunpack.c.h.b16 %v99
  %v458 = vunpack.c.l.b16 %v100
  %v459 = vunpack.c.h.b16 %v100
  %v460 = vunpack.c.l.b16 %v101
  %v461 = vunpack.c.h.b16 %v101
  %v462 = vunpack.c.l.b16 %v102
  %v463 = vunpack.c.h.b16 %v102
  %v464 = vunpack.c.l.b16 %v103
  %v465 = vunpack.c.h.b16 %v103
  %v466 = vunpack.c.l.b16 %v104
  %v467 = vunpack.c.h.b16 %v104
  %v468 = vunpack.c.l.b16 %v105
  %v469 = vunpack.c.h.b16 %v105
  %v470 = vunpack.c.l.b16 %v106
  %v471 = vunpack.c.h.b16 %v106
  %v472 = vunpack.c.l.b16 %v107
  %v473 = vunpack.c.h.b16 %v107
  %v474 = vunpack.c.l.b16 %v108
  %v475 = vunpack.c.h.b16 %v108
  %v476 = vunpack.c.l.b16 %v109
  %v477 = vunpack.c.h.b16 %v109
  %v478 = vunpack.c.l.b16 %v110
  %v479 = vunpack.c.h.b16 %v110
  %v480 = vunpack.c.l.b16 %v111
  %v481 = vunpack.c.h.b16 %v111
  %v482 = vunpack.c.l.b16 %v112
  %v483 = vunpack.c.h.b16 %v112
  %v484 = vunpack.c.l.b16 %v113
  %v485 = vunpack.c.h.b16 %v113
  %v486 = vunpack.c.l.b16 %v114
  %v487 = vunpack.c.h.b16 %v114
  %v488 = vunpack.c.l.b16 %v115
  %v489 = vunpack.c.h.b16 %v115
  %v490 = vunpack.c.l.b16 %v116
  %v491 = vunpack.c.h.b16 %v116
  %v492 = vunpack.c.l.b16 %v117
  %v493 = vunpack.c.h.b16 %v117
  %v494 = vunpack.c.l.b16 %v118
  %v495 = vunpack.c.h.b16 %v118
  %v496 = vunpack.c.l.b16 %v119
  %v497 = vunpack.c.h.b16 %v119
  %v498 = vunpack.c.l.b16 %v120
  %v499 = vunpack.c.h.b16 %v120
  %v500 = vunpack.c.l.b16 %v121
  %v501 = vunpack.c.h.b16 %v121
  %v502 = vunpack.c.l.b16 %v122
  %v503 = vunpack.c.h.b16 %v122
  %v504 = vunpack.c.l.b16 %v123
  %v505 = vunpack.c.h.b16 %v123
  %v506 = vunpack.c.l.b16 %v124
  %v507 = vunpack.c.h.b16 %v124
  %v508 = vunpack.c.l.b16 %v125
  %v509 = vunpack.c.h.b16 %v125
  %v510 = vunpack.c.l.b16 %v126
  %v511 = vunpack.c.h.b16 %v126
  %v512 = vunpack.c.l.b16 %v127
  %v513 = vunpack.c.h.b16 %v127
  %v514 = vunpack.c.l.b16 %v128
  %v515 = vunpack.c.h.b16 %v128
  %v516 = vunpack.c.l.b16 %v129
  %v517 = vunpack.c.h.b16 %v129
  %v518 = vunpack.c.l.b16 %v130
  %v519 = vunpack.c.h.b16 %v130
  %v520 = vunpack.c.l.b16 %v131
  %v521 = vunpack.c.h.b16 %v131
  %v522 = vunpack.c.l.b16 %v132
  %v523 = vunpack.c.h.b16 %v132
  %v524 = vunpack.c.l.b16 %v133
  %v525 = vunpack.c.h.b16 %v133
  %v526 = vunpack.c.l.b16 %v134
  %v527 = vunpack.c.h.b16 %v134
  %v528 = vunpack.c.l.b16 %v135
  %v529 = vunpack.c.h.b16 %v135
  %v530 = vunpack.c.l.b16 %v136
  %v531 = vunpack.c.h.b16 %v136
  %v532 = vunpack.c.l.b16 %v137
  %v533 = vunpack.c.h.b16 %v137
  %v534 = vunpack.c.l.b16 %v138
  %v535 = vunpack.c.h.b16 %v138
  %v536 = vunpack.c.l.b16 %v139
  %v537 = vunpack.c.h.b16 %v139
  %v538 = vunpack.c.l.b16 %v140
  %v539 = vunpack.c.h.b16 %v140
  %v540 = vunpack.c.l.b16 %v141
  %v541 = vunpack.c.h.b16 %v141
  %v542 = vunpack.c.l.b16 %v142
  %v543 = vunpack.c.h.b16 %v142
  %v544 = vunpack.c.l.b16 %v143
  %v545 = vunpack.c.h.b16 %v143
  %v546 = vunpack.c.l.b16 %v144
  %v547 = vunpack.c.h.b16 %v144
  %v548 = vunpack.c.l.b16 %v145
  %v549 = vunpack.c.h.b16 %v145
  %v550 = vunpack.c.l.b16 %v146
  %v551 = vunpack.c.h.b16 %v146
  %v552 = vunpack.c.l.b16 %v147
  %v553 = vunpack.c.h.b16 %v147
  %v554 = vunpack.c.l.b16 %v148
  %v555 = vunpack.c.h.b16 %v148
  %v556 = vunpack.c.l.b16 %v149
  %v557 = vunpack.c.h.b16 %v149
  %v558 = vunpack.c.l.b16 %v150
  %v559 = vunpack.c.h.b16 %v150
  %v560 = vunpack.c.l.b16 %v151
  %v561 = vunpack.c.h.b16 %v151
  %v562 = vunpack.c.l.b16 %v152
  %v563 = vunpack.c.h.b16 %v152
  %v564 = vunpack.c.l.b16 %v153
  %v565 = vunpack.c.h.b16 %v153
  %v566 = vunpack.c.l.b16 %v154
  %v567 = vunpack.c.h.b16 %v154
  %v568 = vunpack.c.l.b16 %v155
  %v569 = vunpack.c.h.b16 %v155
  %v570 = vunpack.c.l.b16 %v156
  %v571 = vunpack.c.h.b16 %v156
  %v572 = vunpack.c.l.b16 %v157
  %v573 = vunpack.c.h.b16 %v157
  %v574 = vunpack.c.l.b16 %v158
  %v575 = vunpack.c.h.b16 %v158
  %v576 = vunpack.c.l.b16 %v159
  %v577 = vunpack.c.h.b16 %v159
  %v578 = vunpack.c.l.b16 %v160
  %v579 = vunpack.c.h.b16 %v160
  %v580 = vunpack.c.l.b16 %v161
  %v581 = vunpack.c.h.b16 %v161
  %v582 = vunpack.c.l.b16 %v162
  %v583 = vunpack.c.h.b16 %v162
  %v584 = vunpack.c.l.b16 %v163
  %v585 = vunpack.c.h.b16 %v163
  %v586 = vunpack.c.l.b16 %v164
  %v587 = vunpack.c.h.b16 %v164
  %v588 = vunpack.c.l.b16 %v165
  %v589 = vunpack.c.h.b16 %v165
  %v590 = vunpack.c.l.b16 %v166
  %v591 = vunpack.c.h.b16 %v166
  %v592 = vunpack.c.l.b16 %v167
  %v593 = vunpack.c.h.b16 %v167
  %v594 = vunpack.c.l.b16 %v168
  %v595 = vunpack.c.h.b16 %v168
  %v596 = vunpack.c.l.b16 %v169
  %v597 = vunpack.c.h.b16 %v169
  %v598 = vunpack.c.l.b16 %v170
  %v599 = vunpack.c.h.b16 %v170
  %v600 = vunpack.c.l.b16 %v171
  %v601 = vunpack.c.h.b16 %v171
  %v602 = vunpack.c.l.b16 %v172
  %v603 = vunpack.c.h.b16 %v172
  %v604 = vunpack.c.l.b16 %v173
  %v605 = vunpack.c.h.b16 %v173
  %v606 = vunpack.c.l.b16 %v174
  %v607 = vunpack.c.h.b16 %v174
  %v608 = vunpack.c.l.b16 %v175
  %v609 = vunpack.c.h.b16 %v175
  %v610 = vunpack.c.l.b16 %v176
  %v611 = vunpack.c.h.b16 %v176
  %v612 = vunpack.c.l.b16 %v177
  %v613 = vunpack.c.h.b16 %v177
  %v614 = vpack.c.b16 %v366, %v358
  %v615 = vpack.c.b16 %v367, %v359
  %v616 = vpack.c.b16 %v368, %v360
  %v617 = vpack.c.b16 %v369, %v361
  %v618 = vpack.c.b16 %v370, %v362
  %v619 = vpack.c.b16 %v371, %v363
  %v620 = vpack.c.b16 %v372, %v364
  %v621 = vpack.c.b16 %v373, %v365
  %v622 = vpack.c.b16 %v382, %v374
  %v623 = vpack.c.b16 %v383, %v375
  %v624 = vpack.c.b16 %v384, %v376
  %v625 = vpack.c.b16 %v385, %v377
  %v626 = vpack.c.b16 %v386, %v378
  %v627 = vpack.c.b16 %v387, %v379
  %v628 = vpack.c.b16 %v388, %v380
  %v629 = vpack.c.b16 %v389, %v381
  %v630 = vpack.c.b16 %v398, %v390
  %v631 = vpack.c.b16 %v399, %v391
  %v632 = vpack.c.b16 %v400, %v392
  %v633 = vpack.c.b16 %v401, %v393
  %v634 = vpack.c.b16 %v402, %v394
  %v635 = vpack.c.b16 %v403, %v395
  %v636 = vpack.c.b16 %v404, %v396
  %v637 = vpack.c.b16 %v405, %v397
  %v638 = vpack.c.b16 %v414, %v406
  %v639 = vpack.c.b16 %v415, %v407
  %v640 = vpack.c.b16 %v416, %v408
  %v641 = vpack.c.b16 %v417, %v409
  %v642 = vpack.c.b16 %v418, %v410
  %v643 = vpack.c.b16 %v419, %v411
  %v644 = vpack.c.b16 %v420, %v412
  %v645 = vpack.c.b16 %v421, %v413
  %v646 = vpack.c.b16 %v430, %v422
  %v647 = vpack.c.b16 %v431, %v423
  %v648 = vpack.c.b16 %v432, %v424
  %v649 = vpack.c.b16 %v433, %v425
  %v650 = vpack.c.b16 %v434, %v426
  %v651 = vpack.c.b16 %v435, %v427
  %v652 = vpack.c.b16 %v436, %v428
  %v653 = vpack.c.b16 %v437, %v429
  %v654 = vpack.c.b16 %v446, %v438
  %v655 = vpack.c.b16 %v447, %v439
  %v656 = vpack.c.b16 %v448, %v440
  %v657 = vpack.c.b16 %v449, %v441
  %v658 = vpack.c.b16 %v450, %v442
  %v659 = vpack.c.b16 %v451, %v443
  %v660 = vpack.c.b16 %v452, %v444
  %v661 = vpack.c.b16 %v453, %v445
  %v662 = vpack.c.b16 %v462, %v454
  %v663 = vpack.c.b16 %v463, %v455
  %v664 = vpack.c.b16 %v464, %v456
  %v665 = vpack.c.b16 %v465, %v457
  %v666 = vpack.c.b16 %v466, %v458
  %v667 = vpack.c.b16 %v467, %v459
  %v668 = vpack.c.b16 %v468, %v460
  %v669 = vpack.c.b16 %v469, %v461
  %v670 = vpack.c.b16 %v478, %v470
  %v671 = vpack.c.b16 %v479, %v471
  %v672 = vpack.c.b16 %v480, %v472
  %v673 = vpack.c.b16 %v481, %v473
  %v674 = vpack.c.b16 %v482, %v474
  %v675 = vpack.c.b16 %v483, %v475
  %v676 = vpack.c.b16 %v484, %v476
  %v677 = vpack.c.b16 %v485, %v477
  %v678 = vpack.c.b16 %v494, %v486
  %v679 = vpack.c.b16 %v495, %v487
  %v680 = vpack.c.b16 %v496, %v488
  %v681 = vpack.c.b16 %v497, %v489
  %v682 = vpack.c.b16 %v498, %v490
  %v683 = vpack.c.b16 %v499, %v491
  %v684 = vpack.c.b16 %v500, %v492
  %v685 = vpack.c.b16 %v501, %v493
  %v686 = vpack.c.b16 %v510, %v502
  %v687 = vpack.c.b16 %v511, %v503
  %v688 = vpack.c.b16 %v512, %v504
  %v689 = vpack.c.b16 %v513, %v505
  %v690 = vpack.c.b16 %v514, %v506
  %v691 = vpack.c.b16 %v515, %v507
  %v692 = vpack.c.b16 %v516, %v508
  %v693 = vpack.c.b16 %v517, %v509
  %v694 = vpack.c.b16 %v526, %v518
  %v695 = vpack.c.b16 %v527, %v519
  %v696 = vpack.c.b16 %v528, %v520
  %v697 = vpack.c.b16 %v529, %v521
  %v698 = vpack.c.b16 %v530, %v522
  %v699 = vpack.c.b16 %v531, %v523
  %v700 = vpack.c.b16 %v532, %v524
  %v701 = vpack.c.b16 %v533, %v525
  %v702 = vpack.c.b16 %v542, %v534
  %v703 = vpack.c.b16 %v543, %v535
  %v704 = vpack.c.b16 %v544, %v536
  %v705 = vpack.c.b16 %v545, %v537
  %v706 = vpack.c.b16 %v546, %v538
  %v707 = vpack.c.b16 %v547, %v539
  %v708 = vpack.c.b16 %v548, %v540
  %v709 = vpack.c.b16 %v549, %v541
  %v710 = vpack.c.b16 %v558, %v550
  %v711 = vpack.c.b16 %v559, %v551
  %v712 = vpack.c.b16 %v560, %v552
  %v713 = vpack.c.b16 %v561, %v553
  %v714 = vpack.c.b16 %v562, %v554
  %v715 = vpack.c.b16 %v563, %v555
  %v716 = vpack.c.b16 %v564, %v556
  %v717 = vpack.c.b16 %v565, %v557
  %v718 = vpack.c.b16 %v574, %v566
  %v719 = vpack.c.b16 %v575, %v567
  %v720 = vpack.c.b16 %v576, %v568
  %v721 = vpack.c.b16 %v577, %v569
  %v722 = vpack.c.b16 %v578, %v570
  %v723 = vpack.c.b16 %v579, %v571
  %v724 = vpack.c.b16 %v580, %v572
  %v725 = vpack.c.b16 %v581, %v573
  %v726 = vpack.c.b16 %v590, %v582
  %v727 = vpack.c.b16 %v591, %v583
  %v728 = vpack.c.b16 %v592, %v584
  %v729 = vpack.c.b16 %v593, %v585
  %v730 = vpack.c.b16 %v594, %v586
  %v731 = vpack.c.b16 %v595, %v587
  %v732 = vpack.c.b16 %v596, %v588
  %v733 = vpack.c.b16 %v597, %v589
  %v734 = vpack.c.b16 %v606, %v598
  %v735 = vpack.c.b16 %v607, %v599
  %v736 = vpack.c.b16 %v608, %v600
  %v737 = vpack.c.b16 %v609, %v601
  %v738 = vpack.c.b16 %v610, %v602
  %v739 = vpack.c.b16 %v611, %v603
  %v740 = vpack.c.b16 %v612, %v604
  %v741 = vpack.c.b16 %v613, %v605
  %870 = vmatprep.subr.bf16.mxu0 %v615
  %871 = vmatpush1.bf16.msra.mxu0 %v614
  %872 = vmatprep.subr.bf16.mxu0 %v623
  %873 = vmatpush1.bf16.msra.mxu0 %v622
  %874 = vmatprep.subr.bf16.mxu0 %v631
  %875 = vmatpush1.bf16.msra.mxu0 %v630
  %876 = vmatprep.subr.bf16.mxu0 %v639
  %877 = vmatpush1.bf16.msra.mxu0 %v638
  %878 = vmatprep.subr.bf16.mxu0 %v647
  %879 = vmatpush1.bf16.msra.mxu0 %v646
  %880 = vmatprep.subr.bf16.mxu0 %v655
  %881 = vmatpush1.bf16.msra.mxu0 %v654
  %882 = vmatprep.subr.bf16.mxu0 %v663
  %883 = vmatpush1.bf16.msra.mxu0 %v662
  %884 = vmatprep.subr.bf16.mxu0 %v671
  %885 = vmatpush1.bf16.msra.mxu0 %v670
  %886 = vmatprep.subr.bf16.mxu0 %v679
  %887 = vmatpush1.bf16.msra.mxu0 %v678
  %888 = vmatprep.subr.bf16.mxu0 %v687
  %889 = vmatpush1.bf16.msra.mxu0 %v686
  %890 = vmatprep.subr.bf16.mxu0 %v695
  %891 = vmatpush1.bf16.msra.mxu0 %v694
  %892 = vmatprep.subr.bf16.mxu0 %v703
  %893 = vmatpush1.bf16.msra.mxu0 %v702
  %894 = vmatprep.subr.bf16.mxu0 %v711
  %895 = vmatpush1.bf16.msra.mxu0 %v710
  %896 = vmatprep.subr.bf16.mxu0 %v719
  %897 = vmatpush1.bf16.msra.mxu0 %v718
  %898 = vmatprep.subr.bf16.mxu0 %v727
  %899 = vmatpush1.bf16.msra.mxu0 %v726
  %900 = vmatprep.subr.bf16.mxu0 %v735
  %901 = vmatpush1.bf16.msra.mxu0 %v734
  %902 = vmatprep.mubr.bf16.mxu0 %v227
  %903 = vmatmul.mubr.bf16.gmra.mrb[0].mxu0 %v226
  %v904 = vpop.f32.mrb[0].mxu0
  %v905 = vadd.f32 %v183, %v904
  %v906 = vpop.f32.mrb[0].mxu0
  %v907 = vadd.f32 %v187, %v906
  %v908 = vpop.f32.mrb[0].mxu0
  %v909 = vadd.f32 %v183, %v908
  %v910 = vpop.f32.mrb[0].mxu0
  %v911 = vadd.f32 %v187, %v910
  %912 = vdwg.mxu0
  %913 = vmatprep.subr.bf16.mxu0 %v617
  %914 = vmatpush1.bf16.msra.mxu0 %v616
  %915 = vmatprep.subr.bf16.mxu0 %v625
  %916 = vmatpush1.bf16.msra.mxu0 %v624
  %917 = vmatprep.subr.bf16.mxu0 %v633
  %918 = vmatpush1.bf16.msra.mxu0 %v632
  %919 = vmatprep.subr.bf16.mxu0 %v641
  %920 = vmatpush1.bf16.msra.mxu0 %v640
  %921 = vmatprep.subr.bf16.mxu0 %v649
  %922 = vmatpush1.bf16.msra.mxu0 %v648
  %923 = vmatprep.subr.bf16.mxu0 %v657
  %924 = vmatpush1.bf16.msra.mxu0 %v656
  %925 = vmatprep.subr.bf16.mxu0 %v665
  %926 = vmatpush1.bf16.msra.mxu0 %v664
  %927 = vmatprep.subr.bf16.mxu0 %v673
  %928 = vmatpush1.bf16.msra.mxu0 %v672
  %929 = vmatprep.subr.bf16.mxu0 %v681
  %930 = vmatpush1.bf16.msra.mxu0 %v680
  %931 = vmatprep.subr.bf16.mxu0 %v689
  %932 = vmatpush1.bf16.msra.mxu0 %v688
  %933 = vmatprep.subr.bf16.mxu0 %v697
  %934 = vmatpush1.bf16.msra.mxu0 %v696
  %935 = vmatprep.subr.bf16.mxu0 %v705
  %936 = vmatpush1.bf16.msra.mxu0 %v704
  %937 = vmatprep.subr.bf16.mxu0 %v713
  %938 = vmatpush1.bf16.msra.mxu0 %v712
  %939 = vmatprep.subr.bf16.mxu0 %v721
  %940 = vmatpush1.bf16.msra.mxu0 %v720
  %941 = vmatprep.subr.bf16.mxu0 %v729
  %942 = vmatpush1.bf16.msra.mxu0 %v728
  %943 = vmatprep.subr.bf16.mxu0 %v737
  %944 = vmatpush1.bf16.msra.mxu0 %v736
  %945 = vmatprep.mubr.bf16.mxu0 %v227
  %946 = vmatmul.mubr.bf16.gmra.mrb[0].mxu0 %v226
  %v947 = vpop.f32.mrb[0].mxu0
  %v948 = vadd.f32 %v191, %v947
  %v949 = vpop.f32.mrb[0].mxu0
  %v950 = vadd.f32 %v195, %v949
  %v951 = vpop.f32.mrb[0].mxu0
  %v952 = vadd.f32 %v191, %v951
  %v953 = vpop.f32.mrb[0].mxu0
  %v954 = vadd.f32 %v195, %v953
  %955 = vdwg.mxu0
  %956 = vmatprep.subr.bf16.mxu0 %v619
  %957 = vmatpush1.bf16.msra.mxu0 %v618
  %958 = vmatprep.subr.bf16.mxu0 %v627
  %959 = vmatpush1.bf16.msra.mxu0 %v626
  %960 = vmatprep.subr.bf16.mxu0 %v635
  %961 = vmatpush1.bf16.msra.mxu0 %v634
  %962 = vmatprep.subr.bf16.mxu0 %v643
  %963 = vmatpush1.bf16.msra.mxu0 %v642
  %964 = vmatprep.subr.bf16.mxu0 %v651
  %965 = vmatpush1.bf16.msra.mxu0 %v650
  %966 = vmatprep.subr.bf16.mxu0 %v659
  %967 = vmatpush1.bf16.msra.mxu0 %v658
  %968 = vmatprep.subr.bf16.mxu0 %v667
  %969 = vmatpush1.bf16.msra.mxu0 %v666
  %970 = vmatprep.subr.bf16.mxu0 %v675
  %971 = vmatpush1.bf16.msra.mxu0 %v674
  %972 = vmatprep.subr.bf16.mxu0 %v683
  %973 = vmatpush1.bf16.msra.mxu0 %v682
  %974 = vmatprep.subr.bf16.mxu0 %v691
  %975 = vmatpush1.bf16.msra.mxu0 %v690
  %976 = vmatprep.subr.bf16.mxu0 %v699
  %977 = vmatpush1.bf16.msra.mxu0 %v698
  %978 = vmatprep.subr.bf16.mxu0 %v707
  %979 = vmatpush1.bf16.msra.mxu0 %v706
  %980 = vmatprep.subr.bf16.mxu0 %v715
  %981 = vmatpush1.bf16.msra.mxu0 %v714
  %982 = vmatprep.subr.bf16.mxu0 %v723
  %983 = vmatpush1.bf16.msra.mxu0 %v722
  %984 = vmatprep.subr.bf16.mxu0 %v731
  %985 = vmatpush1.bf16.msra.mxu0 %v730
  %986 = vmatprep.subr.bf16.mxu0 %v739
  %987 = vmatpush1.bf16.msra.mxu0 %v738
  %988 = vmatprep.mubr.bf16.mxu0 %v227
  %989 = vmatmul.mubr.bf16.gmra.mrb[0].mxu0 %v226
  %v990 = vpop.f32.mrb[0].mxu0
  %v991 = vadd.f32 %v199, %v990
  %v992 = vpop.f32.mrb[0].mxu0
  %v993 = vadd.f32 %v203, %v992
  %v994 = vpop.f32.mrb[0].mxu0
  %v995 = vadd.f32 %v199, %v994
  %v996 = vpop.f32.mrb[0].mxu0
  %v997 = vadd.f32 %v203, %v996
  %998 = vdwg.mxu0
  %999 = vmatprep.subr.bf16.mxu0 %v621
  %1000 = vmatpush1.bf16.msra.mxu0 %v620
  %1001 = vmatprep.subr.bf16.mxu0 %v629
  %1002 = vmatpush1.bf16.msra.mxu0 %v628
  %1003 = vmatprep.subr.bf16.mxu0 %v637
  %1004 = vmatpush1.bf16.msra.mxu0 %v636
  %1005 = vmatprep.subr.bf16.mxu0 %v645
  %1006 = vmatpush1.bf16.msra.mxu0 %v644
  %1007 = vmatprep.subr.bf16.mxu0 %v653
  %1008 = vmatpush1.bf16.msra.mxu0 %v652
  %1009 = vmatprep.subr.bf16.mxu0 %v661
  %1010 = vmatpush1.bf16.msra.mxu0 %v660
  %1011 = vmatprep.subr.bf16.mxu0 %v669
  %1012 = vmatpush1.bf16.msra.mxu0 %v668
  %1013 = vmatprep.subr.bf16.mxu0 %v677
  %1014 = vmatpush1.bf16.msra.mxu0 %v676
  %1015 = vmatprep.subr.bf16.mxu0 %v685
  %1016 = vmatpush1.bf16.msra.mxu0 %v684
  %1017 = vmatprep.subr.bf16.mxu0 %v693
  %1018 = vmatpush1.bf16.msra.mxu0 %v692
  %1019 = vmatprep.subr.bf16.mxu0 %v701
  %1020 = vmatpush1.bf16.msra.mxu0 %v700
  %1021 = vmatprep.subr.bf16.mxu0 %v709
  %1022 = vmatpush1.bf16.msra.mxu0 %v708
  %1023 = vmatprep.subr.bf16.mxu0 %v717
  %1024 = vmatpush1.bf16.msra.mxu0 %v716
  %1025 = vmatprep.subr.bf16.mxu0 %v725
  %1026 = vmatpush1.bf16.msra.mxu0 %v724
  %1027 = vmatprep.subr.bf16.mxu0 %v733
  %1028 = vmatpush1.bf16.msra.mxu0 %v732
  %1029 = vmatprep.subr.bf16.mxu0 %v741
  %1030 = vmatpush1.bf16.msra.mxu0 %v740
  %1031 = vmatprep.mubr.bf16.mxu0 %v227
  %1032 = vmatmul.mubr.bf16.gmra.mrb[0].mxu0 %v226
  %v1033 = vpop.f32.mrb[0].mxu0
  %v1034 = vadd.f32 %v207, %v1033
  %v1035 = vpop.f32.mrb[0].mxu0
  %v1036 = vadd.f32 %v211, %v1035
  %v1037 = vpop.f32.mrb[0].mxu0
  %v1038 = vadd.f32 %v207, %v1037
  %v1039 = vpop.f32.mrb[0].mxu0
  %v1040 = vadd.f32 %v211, %v1039
  %1041 = vdwg.mxu0
  %v1042 = vmul.f32 %v905, 0.2
  %v1043 = vmul.f32 %v907, 0.2
  %v1044 = vmul.f32 %v948, 0.2
  %v1045 = vmul.f32 %v950, 0.2
  %v1046 = vmul.f32 %v991, 0.2
  %v1047 = vmul.f32 %v993, 0.2
  %v1048 = vmul.f32 %v1034, 0.2
  %v1049 = vmul.f32 %v1036, 0.2
  %v1050 = vmul.f32 %v909, 0.2
  %v1051 = vmul.f32 %v911, 0.2
  %v1052 = vmul.f32 %v952, 0.2
  %v1053 = vmul.f32 %v954, 0.2
  %v1054 = vmul.f32 %v995, 0.2
  %v1055 = vmul.f32 %v997, 0.2
  %v1056 = vmul.f32 %v1038, 0.2
  %v1057 = vmul.f32 %v1040, 0.2
  %v1058 = vmax.f32 %v905, %v1042
  %v1059 = vmax.f32 %v907, %v1043
  %v1060 = vmax.f32 %v948, %v1044
  %v1061 = vmax.f32 %v950, %v1045
  %v1062 = vmax.f32 %v991, %v1046
  %v1063 = vmax.f32 %v993, %v1047
  %v1064 = vmax.f32 %v1034, %v1048
  %v1065 = vmax.f32 %v1036, %v1049
  %v1066 = vmax.f32 %v909, %v1050
  %v1067 = vmax.f32 %v911, %v1051
  %v1068 = vmax.f32 %v952, %v1052
  %v1069 = vmax.f32 %v954, %v1053
  %v1070 = vmax.f32 %v995, %v1054
  %v1071 = vmax.f32 %v997, %v1055
  %v1072 = vmax.f32 %v1038, %v1056
  %v1073 = vmax.f32 %v1040, %v1057
  %v1074 = vpack.c.bf16 %v1066, %v1058
  %v1075 = vpack.c.bf16 %v1067, %v1059
  %v1076 = vpack.c.bf16 %v1068, %v1060
  %v1077 = vpack.c.bf16 %v1069, %v1061
  %v1078 = vpack.c.bf16 %v1070, %v1062
  %v1079 = vpack.c.bf16 %v1071, %v1063
  %v1080 = vpack.c.bf16 %v1072, %v1064
  %v1081 = vpack.c.bf16 %v1073, %v1065
  %v1082 = vld [vmem:[%s3] sm:$0xff]
  %v1083 = vld [vmem:[%s3 + $0x8] sm:$0xff]
  %v1084 = vld [vmem:[%s3 + $0x10] sm:$0xff]
  %v1085 = vld [vmem:[%s3 + $0x18] sm:$0xff]
  %v1086 = vld [vmem:[%s3 + $0x20] sm:$0xff]
  %v1087 = vld [vmem:[%s3 + $0x28] sm:$0xff]
  %v1088 = vld [vmem:[%s3 + $0x30] sm:$0xff]
  %v1089 = vld [vmem:[%s3 + $0x38] sm:$0xff]
  %v1090 = vld [vmem:[%s3 + $0x40] sm:$0xff]
  %v1091 = vld [vmem:[%s3 + $0x48] sm:$0xff]
  %v1092 = vld [vmem:[%s3 + $0x50] sm:$0xff]
  %v1093 = vld [vmem:[%s3 + $0x58] sm:$0xff]
  %v1094 = vld [vmem:[%s3 + $0x60] sm:$0xff]
  %v1095 = vld [vmem:[%s3 + $0x68] sm:$0xff]
  %v1096 = vld [vmem:[%s3 + $0x70] sm:$0xff]
  %v1097 = vld [vmem:[%s3 + $0x78] sm:$0xff]
  %v1098 = vld [vmem:[%s3 + $0x80] sm:$0xff]
  %v1099 = vld [vmem:[%s3 + $0x88] sm:$0xff]
  %v1100 = vld [vmem:[%s3 + $0x90] sm:$0xff]
  %v1101 = vld [vmem:[%s3 + $0x98] sm:$0xff]
  %v1102 = vld [vmem:[%s3 + $0xa0] sm:$0xff]
  %v1103 = vld [vmem:[%s3 + $0xa8] sm:$0xff]
  %v1104 = vld [vmem:[%s3 + $0xb0] sm:$0xff]
  %v1105 = vld [vmem:[%s3 + $0xb8] sm:$0xff]
  %v1106 = vld [vmem:[%s3 + $0xc0] sm:$0xff]
  %v1107 = vld [vmem:[%s3 + $0xc8] sm:$0xff]
  %v1108 = vld [vmem:[%s3 + $0xd0] sm:$0xff]
  %v1109 = vld [vmem:[%s3 + $0xd8] sm:$0xff]
  %v1110 = vld [vmem:[%s3 + $0xe0] sm:$0xff]
  %v1111 = vld [vmem:[%s3 + $0xe8] sm:$0xff]
  %v1112 = vld [vmem:[%s3 + $0xf0] sm:$0xff]
  %v1113 = vld [vmem:[%s3 + $0xf8] sm:$0xff]
  %v1114 = vld [vmem:[%s3 + $0x100] sm:$0xff]
  %v1115 = vld [vmem:[%s3 + $0x108] sm:$0xff]
  %v1116 = vld [vmem:[%s3 + $0x110] sm:$0xff]
  %v1117 = vld [vmem:[%s3 + $0x118] sm:$0xff]
  %v1118 = vld [vmem:[%s3 + $0x120] sm:$0xff]
  %v1119 = vld [vmem:[%s3 + $0x128] sm:$0xff]
  %v1120 = vld [vmem:[%s3 + $0x130] sm:$0xff]
  %v1121 = vld [vmem:[%s3 + $0x138] sm:$0xff]
  %v1122 = vld [vmem:[%s3 + $0x140] sm:$0xff]
  %v1123 = vld [vmem:[%s3 + $0x148] sm:$0xff]
  %v1124 = vld [vmem:[%s3 + $0x150] sm:$0xff]
  %v1125 = vld [vmem:[%s3 + $0x158] sm:$0xff]
  %v1126 = vld [vmem:[%s3 + $0x160] sm:$0xff]
  %v1127 = vld [vmem:[%s3 + $0x168] sm:$0xff]
  %v1128 = vld [vmem:[%s3 + $0x170] sm:$0xff]
  %v1129 = vld [vmem:[%s3 + $0x178] sm:$0xff]
  %v1130 = vld [vmem:[%s3 + $0x180] sm:$0xff]
  %v1131 = vld [vmem:[%s3 + $0x188] sm:$0xff]
  %v1132 = vld [vmem:[%s3 + $0x190] sm:$0xff]
  %v1133 = vld [vmem:[%s3 + $0x198] sm:$0xff]
  %v1134 = vld [vmem:[%s3 + $0x1a0] sm:$0xff]
  %v1135 = vld [vmem:[%s3 + $0x1a8] sm:$0xff]
  %v1136 = vld [vmem:[%s3 + $0x1b0] sm:$0xff]
  %v1137 = vld [vmem:[%s3 + $0x1b8] sm:$0xff]
  %v1138 = vld [vmem:[%s3 + $0x1c0] sm:$0xff]
  %v1139 = vld [vmem:[%s3 + $0x1c8] sm:$0xff]
  %v1140 = vld [vmem:[%s3 + $0x1d0] sm:$0xff]
  %v1141 = vld [vmem:[%s3 + $0x1d8] sm:$0xff]
  %v1142 = vld [vmem:[%s3 + $0x1e0] sm:$0xff]
  %v1143 = vld [vmem:[%s3 + $0x1e8] sm:$0xff]
  %v1144 = vld [vmem:[%s3 + $0x1f0] sm:$0xff]
  %v1145 = vld [vmem:[%s3 + $0x1f8] sm:$0xff]
  %v1146 = vld [vmem:[%s3 + $0x200] sm:$0xff]
  %v1147 = vld [vmem:[%s3 + $0x208] sm:$0xff]
  %v1148 = vld [vmem:[%s3 + $0x210] sm:$0xff]
  %v1149 = vld [vmem:[%s3 + $0x218] sm:$0xff]
  %v1150 = vld [vmem:[%s3 + $0x220] sm:$0xff]
  %v1151 = vld [vmem:[%s3 + $0x228] sm:$0xff]
  %v1152 = vld [vmem:[%s3 + $0x230] sm:$0xff]
  %v1153 = vld [vmem:[%s3 + $0x238] sm:$0xff]
  %v1154 = vld [vmem:[%s3 + $0x240] sm:$0xff]
  %v1155 = vld [vmem:[%s3 + $0x248] sm:$0xff]
  %v1156 = vld [vmem:[%s3 + $0x250] sm:$0xff]
  %v1157 = vld [vmem:[%s3 + $0x258] sm:$0xff]
  %v1158 = vld [vmem:[%s3 + $0x260] sm:$0xff]
  %v1159 = vld [vmem:[%s3 + $0x268] sm:$0xff]
  %v1160 = vld [vmem:[%s3 + $0x270] sm:$0xff]
  %v1161 = vld [vmem:[%s3 + $0x278] sm:$0xff]
  %v1162 = vld [vmem:[%s3 + $0x280] sm:$0xff]
  %v1163 = vld [vmem:[%s3 + $0x288] sm:$0xff]
  %v1164 = vld [vmem:[%s3 + $0x290] sm:$0xff]
  %v1165 = vld [vmem:[%s3 + $0x298] sm:$0xff]
  %v1166 = vld [vmem:[%s3 + $0x2a0] sm:$0xff]
  %v1167 = vld [vmem:[%s3 + $0x2a8] sm:$0xff]
  %v1168 = vld [vmem:[%s3 + $0x2b0] sm:$0xff]
  %v1169 = vld [vmem:[%s3 + $0x2b8] sm:$0xff]
  %v1170 = vld [vmem:[%s3 + $0x2c0] sm:$0xff]
  %v1171 = vld [vmem:[%s3 + $0x2c8] sm:$0xff]
  %v1172 = vld [vmem:[%s3 + $0x2d0] sm:$0xff]
  %v1173 = vld [vmem:[%s3 + $0x2d8] sm:$0xff]
  %v1174 = vld [vmem:[%s3 + $0x2e0] sm:$0xff]
  %v1175 = vld [vmem:[%s3 + $0x2e8] sm:$0xff]
  %v1176 = vld [vmem:[%s3 + $0x2f0] sm:$0xff]
  %v1177 = vld [vmem:[%s3 + $0x2f8] sm:$0xff]
  %v1178 = vld [vmem:[%s3 + $0x300] sm:$0xff]
  %v1179 = vld [vmem:[%s3 + $0x308] sm:$0xff]
  %v1180 = vld [vmem:[%s3 + $0x310] sm:$0xff]
  %v1181 = vld [vmem:[%s3 + $0x318] sm:$0xff]
  %v1182 = vld [vmem:[%s3 + $0x320] sm:$0xff]
  %v1183 = vld [vmem:[%s3 + $0x328] sm:$0xff]
  %v1184 = vld [vmem:[%s3 + $0x330] sm:$0xff]
  %v1185 = vld [vmem:[%s3 + $0x338] sm:$0xff]
  %v1186 = vld [vmem:[%s3 + $0x340] sm:$0xff]
  %v1187 = vld [vmem:[%s3 + $0x348] sm:$0xff]
  %v1188 = vld [vmem:[%s3 + $0x350] sm:$0xff]
  %v1189 = vld [vmem:[%s3 + $0x358] sm:$0xff]
  %v1190 = vld [vmem:[%s3 + $0x360] sm:$0xff]
  %v1191 = vld [vmem:[%s3 + $0x368] sm:$0xff]
  %v1192 = vld [vmem:[%s3 + $0x370] sm:$0xff]
  %v1193 = vld [vmem:[%s3 + $0x378] sm:$0xff]
  %v1194 = vld [vmem:[%s3 + $0x380] sm:$0xff]
  %v1195 = vld [vmem:[%s3 + $0x388] sm:$0xff]
  %v1196 = vld [vmem:[%s3 + $0x390] sm:$0xff]
  %v1197 = vld [vmem:[%s3 + $0x398] sm:$0xff]
  %v1198 = vld [vmem:[%s3 + $0x3a0] sm:$0xff]
  %v1199 = vld [vmem:[%s3 + $0x3a8] sm:$0xff]
  %v1200 = vld [vmem:[%s3 + $0x3b0] sm:$0xff]
  %v1201 = vld [vmem:[%s3 + $0x3b8] sm:$0xff]
  %v1202 = vld [vmem:[%s3 + $0x3c0] sm:$0xff]
  %v1203 = vld [vmem:[%s3 + $0x3c8] sm:$0xff]
  %v1204 = vld [vmem:[%s3 + $0x3d0] sm:$0xff]
  %v1205 = vld [vmem:[%s3 + $0x3d8] sm:$0xff]
  %v1206 = vld [vmem:[%s3 + $0x3e0] sm:$0xff]
  %v1207 = vld [vmem:[%s3 + $0x3e8] sm:$0xff]
  %v1208 = vld [vmem:[%s3 + $0x3f0] sm:$0xff]
  %v1209 = vld [vmem:[%s3 + $0x3f8] sm:$0xff]
  %v1210 = vld [vmem:[%s3 + $0x400] sm:$0xff]
  %v1211 = vld [vmem:[%s3 + $0x408] sm:$0xff]
  %v1212 = vld [vmem:[%s3 + $0x410] sm:$0xff]
  %v1213 = vld [vmem:[%s3 + $0x418] sm:$0xff]
  %v1214 = vld [vmem:[%s3 + $0x420] sm:$0xff]
  %v1215 = vld [vmem:[%s3 + $0x428] sm:$0xff]
  %v1216 = vld [vmem:[%s3 + $0x430] sm:$0xff]
  %v1217 = vld [vmem:[%s3 + $0x438] sm:$0xff]
  %v1218 = vld [vmem:[%s3 + $0x440] sm:$0xff]
  %v1219 = vld [vmem:[%s3 + $0x448] sm:$0xff]
  %v1220 = vld [vmem:[%s3 + $0x450] sm:$0xff]
  %v1221 = vld [vmem:[%s3 + $0x458] sm:$0xff]
  %v1222 = vld [vmem:[%s3 + $0x460] sm:$0xff]
  %v1223 = vld [vmem:[%s3 + $0x468] sm:$0xff]
  %v1224 = vld [vmem:[%s3 + $0x470] sm:$0xff]
  %v1225 = vld [vmem:[%s3 + $0x478] sm:$0xff]
  %v1226 = vld [vmem:[%s3 + $0x480] sm:$0xff]
  %v1227 = vld [vmem:[%s3 + $0x488] sm:$0xff]
  %v1228 = vld [vmem:[%s3 + $0x490] sm:$0xff]
  %v1229 = vld [vmem:[%s3 + $0x498] sm:$0xff]
  %v1230 = vld [vmem:[%s3 + $0x4a0] sm:$0xff]
  %v1231 = vld [vmem:[%s3 + $0x4a8] sm:$0xff]
  %v1232 = vld [vmem:[%s3 + $0x4b0] sm:$0xff]
  %v1233 = vld [vmem:[%s3 + $0x4b8] sm:$0xff]
  %v1234 = vld [vmem:[%s3 + $0x4c0] sm:$0xff]
  %v1235 = vld [vmem:[%s3 + $0x4c8] sm:$0xff]
  %v1236 = vld [vmem:[%s3 + $0x4d0] sm:$0xff]
  %v1237 = vld [vmem:[%s3 + $0x4d8] sm:$0xff]
  %v1238 = vld [vmem:[%s3 + $0x4e0] sm:$0xff]
  %v1239 = vld [vmem:[%s3 + $0x4e8] sm:$0xff]
  %v1240 = vld [vmem:[%s3 + $0x4f0] sm:$0xff]
  %v1241 = vld [vmem:[%s3 + $0x4f8] sm:$0xff]
  %v1242 = vld [vmem:[%s3 + $0x500] sm:$0xff]
  %v1243 = vld [vmem:[%s3 + $0x508] sm:$0xff]
  %v1244 = vld [vmem:[%s3 + $0x510] sm:$0xff]
  %v1245 = vld [vmem:[%s3 + $0x518] sm:$0xff]
  %v1246 = vld [vmem:[%s3 + $0x520] sm:$0xff]
  %v1247 = vld [vmem:[%s3 + $0x528] sm:$0xff]
  %v1248 = vld [vmem:[%s3 + $0x530] sm:$0xff]
  %v1249 = vld [vmem:[%s3 + $0x538] sm:$0xff]
  %v1250 = vld [vmem:[%s3 + $0x540] sm:$0xff]
  %v1251 = vld [vmem:[%s3 + $0x548] sm:$0xff]
  %v1252 = vld [vmem:[%s3 + $0x550] sm:$0xff]
  %v1253 = vld [vmem:[%s3 + $0x558] sm:$0xff]
  %v1254 = vld [vmem:[%s3 + $0x560] sm:$0xff]
  %v1255 = vld [vmem:[%s3 + $0x568] sm:$0xff]
  %v1256 = vld [vmem:[%s3 + $0x570] sm:$0xff]
  %v1257 = vld [vmem:[%s3 + $0x578] sm:$0xff]
  %v1258 = vld [vmem:[%s3 + $0x580] sm:$0xff]
  %v1259 = vld [vmem:[%s3 + $0x588] sm:$0xff]
  %v1260 = vld [vmem:[%s3 + $0x590] sm:$0xff]
  %v1261 = vld [vmem:[%s3 + $0x598] sm:$0xff]
  %v1262 = vld [vmem:[%s3 + $0x5a0] sm:$0xff]
  %v1263 = vld [vmem:[%s3 + $0x5a8] sm:$0xff]
  %v1264 = vld [vmem:[%s3 + $0x5b0] sm:$0xff]
  %v1265 = vld [vmem:[%s3 + $0x5b8] sm:$0xff]
  %v1266 = vld [vmem:[%s3 + $0x5c0] sm:$0xff]
  %v1267 = vld [vmem:[%s3 + $0x5c8] sm:$0xff]
  %v1268 = vld [vmem:[%s3 + $0x5d0] sm:$0xff]
  %v1269 = vld [vmem:[%s3 + $0x5d8] sm:$0xff]
  %v1270 = vld [vmem:[%s3 + $0x5e0] sm:$0xff]
  %v1271 = vld [vmem:[%s3 + $0x5e8] sm:$0xff]
  %v1272 = vld [vmem:[%s3 + $0x5f0] sm:$0xff]
  %v1273 = vld [vmem:[%s3 + $0x5f8] sm:$0xff]
  %v1274 = vld [vmem:[%s3 + $0x600] sm:$0xff]
  %v1275 = vld [vmem:[%s3 + $0x608] sm:$0xff]
  %v1276 = vld [vmem:[%s3 + $0x610] sm:$0xff]
  %v1277 = vld [vmem:[%s3 + $0x618] sm:$0xff]
  %v1278 = vld [vmem:[%s3 + $0x620] sm:$0xff]
  %v1279 = vld [vmem:[%s3 + $0x628] sm:$0xff]
  %v1280 = vld [vmem:[%s3 + $0x630] sm:$0xff]
  %v1281 = vld [vmem:[%s3 + $0x638] sm:$0xff]
  %v1282 = vld [vmem:[%s3 + $0x640] sm:$0xff]
  %v1283 = vld [vmem:[%s3 + $0x648] sm:$0xff]
  %v1284 = vld [vmem:[%s3 + $0x650] sm:$0xff]
  %v1285 = vld [vmem:[%s3 + $0x658] sm:$0xff]
  %v1286 = vld [vmem:[%s3 + $0x660] sm:$0xff]
  %v1287 = vld [vmem:[%s3 + $0x668] sm:$0xff]
  %v1288 = vld [vmem:[%s3 + $0x670] sm:$0xff]
  %v1289 = vld [vmem:[%s3 + $0x678] sm:$0xff]
  %v1290 = vld [vmem:[%s3 + $0x680] sm:$0xff]
  %v1291 = vld [vmem:[%s3 + $0x688] sm:$0xff]
  %v1292 = vld [vmem:[%s3 + $0x690] sm:$0xff]
  %v1293 = vld [vmem:[%s3 + $0x698] sm:$0xff]
  %v1294 = vld [vmem:[%s3 + $0x6a0] sm:$0xff]
  %v1295 = vld [vmem:[%s3 + $0x6a8] sm:$0xff]
  %v1296 = vld [vmem:[%s3 + $0x6b0] sm:$0xff]
  %v1297 = vld [vmem:[%s3 + $0x6b8] sm:$0xff]
  %v1298 = vld [vmem:[%s3 + $0x6c0] sm:$0xff]
  %v1299 = vld [vmem:[%s3 + $0x6c8] sm:$0xff]
  %v1300 = vld [vmem:[%s3 + $0x6d0] sm:$0xff]
  %v1301 = vld [vmem:[%s3 + $0x6d8] sm:$0xff]
  %v1302 = vld [vmem:[%s3 + $0x6e0] sm:$0xff]
  %v1303 = vld [vmem:[%s3 + $0x6e8] sm:$0xff]
  %v1304 = vld [vmem:[%s3 + $0x6f0] sm:$0xff]
  %v1305 = vld [vmem:[%s3 + $0x6f8] sm:$0xff]
  %v1306 = vld [vmem:[%s3 + $0x700] sm:$0xff]
  %v1307 = vld [vmem:[%s3 + $0x708] sm:$0xff]
  %v1308 = vld [vmem:[%s3 + $0x710] sm:$0xff]
  %v1309 = vld [vmem:[%s3 + $0x718] sm:$0xff]
  %v1310 = vld [vmem:[%s3 + $0x720] sm:$0xff]
  %v1311 = vld [vmem:[%s3 + $0x728] sm:$0xff]
  %v1312 = vld [vmem:[%s3 + $0x730] sm:$0xff]
  %v1313 = vld [vmem:[%s3 + $0x738] sm:$0xff]
  %v1314 = vld [vmem:[%s3 + $0x740] sm:$0xff]
  %v1315 = vld [vmem:[%s3 + $0x748] sm:$0xff]
  %v1316 = vld [vmem:[%s3 + $0x750] sm:$0xff]
  %v1317 = vld [vmem:[%s3 + $0x758] sm:$0xff]
  %v1318 = vld [vmem:[%s3 + $0x760] sm:$0xff]
  %v1319 = vld [vmem:[%s3 + $0x768] sm:$0xff]
  %v1320 = vld [vmem:[%s3 + $0x770] sm:$0xff]
  %v1321 = vld [vmem:[%s3 + $0x778] sm:$0xff]
  %v1322 = vld [vmem:[%s3 + $0x780] sm:$0xff]
  %v1323 = vld [vmem:[%s3 + $0x788] sm:$0xff]
  %v1324 = vld [vmem:[%s3 + $0x790] sm:$0xff]
  %v1325 = vld [vmem:[%s3 + $0x798] sm:$0xff]
  %v1326 = vld [vmem:[%s3 + $0x7a0] sm:$0xff]
  %v1327 = vld [vmem:[%s3 + $0x7a8] sm:$0xff]
  %v1328 = vld [vmem:[%s3 + $0x7b0] sm:$0xff]
  %v1329 = vld [vmem:[%s3 + $0x7b8] sm:$0xff]
  %v1330 = vld [vmem:[%s3 + $0x7c0] sm:$0xff]
  %v1331 = vld [vmem:[%s3 + $0x7c8] sm:$0xff]
  %v1332 = vld [vmem:[%s3 + $0x7d0] sm:$0xff]
  %v1333 = vld [vmem:[%s3 + $0x7d8] sm:$0xff]
  %v1334 = vld [vmem:[%s3 + $0x7e0] sm:$0xff]
  %v1335 = vld [vmem:[%s3 + $0x7e8] sm:$0xff]
  %v1336 = vld [vmem:[%s3 + $0x7f0] sm:$0xff]
  %v1337 = vld [vmem:[%s3 + $0x7f8] sm:$0xff]
  %v1338 = vld [vmem:[%s4] sm:$0xf]
  %v1340 = vlaneseq
  %v1341 = vshrl.u32 %v1340, 7
  %v1342 = vsub.s32 0, %v1341
  %v1343 = vrot.slane %v1338, %v1342
  %v1344 = vlaneseq
  %v1345 = vshrl.u32 %v1344, 7
  %v1346 = vsub.s32 1, %v1345
  %v1347 = vrot.slane %v1338, %v1346
  %v1348 = vlaneseq
  %v1349 = vshrl.u32 %v1348, 7
  %v1350 = vsub.s32 2, %v1349
  %v1351 = vrot.slane %v1338, %v1350
  %v1352 = vlaneseq
  %v1353 = vshrl.u32 %v1352, 7
  %v1354 = vsub.s32 3, %v1353
  %v1355 = vrot.slane %v1338, %v1354
  %v1616 = vunpack.c.l.b16 %v1082
  %v1617 = vunpack.c.h.b16 %v1082
  %v1618 = vunpack.c.l.b16 %v1083
  %v1619 = vunpack.c.h.b16 %v1083
  %v1620 = vunpack.c.l.b16 %v1084
  %v1621 = vunpack.c.h.b16 %v1084
  %v1622 = vunpack.c.l.b16 %v1085
  %v1623 = vunpack.c.h.b16 %v1085
  %v1624 = vunpack.c.l.b16 %v1086
  %v1625 = vunpack.c.h.b16 %v1086
  %v1626 = vunpack.c.l.b16 %v1087
  %v1627 = vunpack.c.h.b16 %v1087
  %v1628 = vunpack.c.l.b16 %v1088
  %v1629 = vunpack.c.h.b16 %v1088
  %v1630 = vunpack.c.l.b16 %v1089
  %v1631 = vunpack.c.h.b16 %v1089
  %v1632 = vunpack.c.l.b16 %v1090
  %v1633 = vunpack.c.h.b16 %v1090
  %v1634 = vunpack.c.l.b16 %v1091
  %v1635 = vunpack.c.h.b16 %v1091
  %v1636 = vunpack.c.l.b16 %v1092
  %v1637 = vunpack.c.h.b16 %v1092
  %v1638 = vunpack.c.l.b16 %v1093
  %v1639 = vunpack.c.h.b16 %v1093
  %v1640 = vunpack.c.l.b16 %v1094
  %v1641 = vunpack.c.h.b16 %v1094
  %v1642 = vunpack.c.l.b16 %v1095
  %v1643 = vunpack.c.h.b16 %v1095
  %v1644 = vunpack.c.l.b16 %v1096
  %v1645 = vunpack.c.h.b16 %v1096
  %v1646 = vunpack.c.l.b16 %v1097
  %v1647 = vunpack.c.h.b16 %v1097
  %v1648 = vunpack.c.l.b16 %v1098
  %v1649 = vunpack.c.h.b16 %v1098
  %v1650 = vunpack.c.l.b16 %v1099
  %v1651 = vunpack.c.h.b16 %v1099
  %v1652 = vunpack.c.l.b16 %v1100
  %v1653 = vunpack.c.h.b16 %v1100
  %v1654 = vunpack.c.l.b16 %v1101
  %v1655 = vunpack.c.h.b16 %v1101
  %v1656 = vunpack.c.l.b16 %v1102
  %v1657 = vunpack.c.h.b16 %v1102
  %v1658 = vunpack.c.l.b16 %v1103
  %v1659 = vunpack.c.h.b16 %v1103
  %v1660 = vunpack.c.l.b16 %v1104
  %v1661 = vunpack.c.h.b16 %v1104
  %v1662 = vunpack.c.l.b16 %v1105
  %v1663 = vunpack.c.h.b16 %v1105
  %v1664 = vunpack.c.l.b16 %v1106
  %v1665 = vunpack.c.h.b16 %v1106
  %v1666 = vunpack.c.l.b16 %v1107
  %v1667 = vunpack.c.h.b16 %v1107
  %v1668 = vunpack.c.l.b16 %v1108
  %v1669 = vunpack.c.h.b16 %v1108
  %v1670 = vunpack.c.l.b16 %v1109
  %v1671 = vunpack.c.h.b16 %v1109
  %v1672 = vunpack.c.l.b16 %v1110
  %v1673 = vunpack.c.h.b16 %v1110
  %v1674 = vunpack.c.l.b16 %v1111
  %v1675 = vunpack.c.h.b16 %v1111
  %v1676 = vunpack.c.l.b16 %v1112
  %v1677 = vunpack.c.h.b16 %v1112
  %v1678 = vunpack.c.l.b16 %v1113
  %v1679 = vunpack.c.h.b16 %v1113
  %v1680 = vunpack.c.l.b16 %v1114
  %v1681 = vunpack.c.h.b16 %v1114
  %v1682 = vunpack.c.l.b16 %v1115
  %v1683 = vunpack.c.h.b16 %v1115
  %v1684 = vunpack.c.l.b16 %v1116
  %v1685 = vunpack.c.h.b16 %v1116
  %v1686 = vunpack.c.l.b16 %v1117
  %v1687 = vunpack.c.h.b16 %v1117
  %v1688 = vunpack.c.l.b16 %v1118
  %v1689 = vunpack.c.h.b16 %v1118
  %v1690 = vunpack.c.l.b16 %v1119
  %v1691 = vunpack.c.h.b16 %v1119
  %v1692 = vunpack.c.l.b16 %v1120
  %v1693 = vunpack.c.h.b16 %v1120
  %v1694 = vunpack.c.l.b16 %v1121
  %v1695 = vunpack.c.h.b16 %v1121
  %v1696 = vunpack.c.l.b16 %v1122
  %v1697 = vunpack.c.h.b16 %v1122
  %v1698 = vunpack.c.l.b16 %v1123
  %v1699 = vunpack.c.h.b16 %v1123
  %v1700 = vunpack.c.l.b16 %v1124
  %v1701 = vunpack.c.h.b16 %v1124
  %v1702 = vunpack.c.l.b16 %v1125
  %v1703 = vunpack.c.h.b16 %v1125
  %v1704 = vunpack.c.l.b16 %v1126
  %v1705 = vunpack.c.h.b16 %v1126
  %v1706 = vunpack.c.l.b16 %v1127
  %v1707 = vunpack.c.h.b16 %v1127
  %v1708 = vunpack.c.l.b16 %v1128
  %v1709 = vunpack.c.h.b16 %v1128
  %v1710 = vunpack.c.l.b16 %v1129
  %v1711 = vunpack.c.h.b16 %v1129
  %v1712 = vunpack.c.l.b16 %v1130
  %v1713 = vunpack.c.h.b16 %v1130
  %v1714 = vunpack.c.l.b16 %v1131
  %v1715 = vunpack.c.h.b16 %v1131
  %v1716 = vunpack.c.l.b16 %v1132
  %v1717 = vunpack.c.h.b16 %v1132
  %v1718 = vunpack.c.l.b16 %v1133
  %v1719 = vunpack.c.h.b16 %v1133
  %v1720 = vunpack.c.l.b16 %v1134
  %v1721 = vunpack.c.h.b16 %v1134
  %v1722 = vunpack.c.l.b16 %v1135
  %v1723 = vunpack.c.h.b16 %v1135
  %v1724 = vunpack.c.l.b16 %v1136
  %v1725 = vunpack.c.h.b16 %v1136
  %v1726 = vunpack.c.l.b16 %v1137
  %v1727 = vunpack.c.h.b16 %v1137
  %v1728 = vunpack.c.l.b16 %v1138
  %v1729 = vunpack.c.h.b16 %v1138
  %v1730 = vunpack.c.l.b16 %v1139
  %v1731 = vunpack.c.h.b16 %v1139
  %v1732 = vunpack.c.l.b16 %v1140
  %v1733 = vunpack.c.h.b16 %v1140
  %v1734 = vunpack.c.l.b16 %v1141
  %v1735 = vunpack.c.h.b16 %v1141
  %v1736 = vunpack.c.l.b16 %v1142
  %v1737 = vunpack.c.h.b16 %v1142
  %v1738 = vunpack.c.l.b16 %v1143
  %v1739 = vunpack.c.h.b16 %v1143
  %v1740 = vunpack.c.l.b16 %v1144
  %v1741 = vunpack.c.h.b16 %v1144
  %v1742 = vunpack.c.l.b16 %v1145
  %v1743 = vunpack.c.h.b16 %v1145
  %v1744 = vunpack.c.l.b16 %v1146
  %v1745 = vunpack.c.h.b16 %v1146
  %v1746 = vunpack.c.l.b16 %v1147
  %v1747 = vunpack.c.h.b16 %v1147
  %v1748 = vunpack.c.l.b16 %v1148
  %v1749 = vunpack.c.h.b16 %v1148
  %v1750 = vunpack.c.l.b16 %v1149
  %v1751 = vunpack.c.h.b16 %v1149
  %v1752 = vunpack.c.l.b16 %v1150
  %v1753 = vunpack.c.h.b16 %v1150
  %v1754 = vunpack.c.l.b16 %v1151
  %v1755 = vunpack.c.h.b16 %v1151
  %v1756 = vunpack.c.l.b16 %v1152
  %v1757 = vunpack.c.h.b16 %v1152
  %v1758 = vunpack.c.l.b16 %v1153
  %v1759 = vunpack.c.h.b16 %v1153
  %v1760 = vunpack.c.l.b16 %v1154
  %v1761 = vunpack.c.h.b16 %v1154
  %v1762 = vunpack.c.l.b16 %v1155
  %v1763 = vunpack.c.h.b16 %v1155
  %v1764 = vunpack.c.l.b16 %v1156
  %v1765 = vunpack.c.h.b16 %v1156
  %v1766 = vunpack.c.l.b16 %v1157
  %v1767 = vunpack.c.h.b16 %v1157
  %v1768 = vunpack.c.l.b16 %v1158
  %v1769 = vunpack.c.h.b16 %v1158
  %v1770 = vunpack.c.l.b16 %v1159
  %v1771 = vunpack.c.h.b16 %v1159
  %v1772 = vunpack.c.l.b16 %v1160
  %v1773 = vunpack.c.h.b16 %v1160
  %v1774 = vunpack.c.l.b16 %v1161
  %v1775 = vunpack.c.h.b16 %v1161
  %v1776 = vunpack.c.l.b16 %v1162
  %v1777 = vunpack.c.h.b16 %v1162
  %v1778 = vunpack.c.l.b16 %v1163
  %v1779 = vunpack.c.h.b16 %v1163
  %v1780 = vunpack.c.l.b16 %v1164
  %v1781 = vunpack.c.h.b16 %v1164
  %v1782 = vunpack.c.l.b16 %v1165
  %v1783 = vunpack.c.h.b16 %v1165
  %v1784 = vunpack.c.l.b16 %v1166
  %v1785 = vunpack.c.h.b16 %v1166
  %v1786 = vunpack.c.l.b16 %v1167
  %v1787 = vunpack.c.h.b16 %v1167
  %v1788 = vunpack.c.l.b16 %v1168
  %v1789 = vunpack.c.h.b16 %v1168
  %v1790 = vunpack.c.l.b16 %v1169
  %v1791 = vunpack.c.h.b16 %v1169
  %v1792 = vunpack.c.l.b16 %v1170
  %v1793 = vunpack.c.h.b16 %v1170
  %v1794 = vunpack.c.l.b16 %v1171
  %v1795 = vunpack.c.h.b16 %v1171
  %v1796 = vunpack.c.l.b16 %v1172
  %v1797 = vunpack.c.h.b16 %v1172
  %v1798 = vunpack.c.l.b16 %v1173
  %v1799 = vunpack.c.h.b16 %v1173
  %v1800 = vunpack.c.l.b16 %v1174
  %v1801 = vunpack.c.h.b16 %v1174
  %v1802 = vunpack.c.l.b16 %v1175
  %v1803 = vunpack.c.h.b16 %v1175
  %v1804 = vunpack.c.l.b16 %v1176
  %v1805 = vunpack.c.h.b16 %v1176
  %v1806 = vunpack.c.l.b16 %v1177
  %v1807 = vunpack.c.h.b16 %v1177
  %v1808 = vunpack.c.l.b16 %v1178
  %v1809 = vunpack.c.h.b16 %v1178
  %v1810 = vunpack.c.l.b16 %v1179
  %v1811 = vunpack.c.h.b16 %v1179
  %v1812 = vunpack.c.l.b16 %v1180
  %v1813 = vunpack.c.h.b16 %v1180
  %v1814 = vunpack.c.l.b16 %v1181
  %v1815 = vunpack.c.h.b16 %v1181
  %v1816 = vunpack.c.l.b16 %v1182
  %v1817 = vunpack.c.h.b16 %v1182
  %v1818 = vunpack.c.l.b16 %v1183
  %v1819 = vunpack.c.h.b16 %v1183
  %v1820 = vunpack.c.l.b16 %v1184
  %v1821 = vunpack.c.h.b16 %v1184
  %v1822 = vunpack.c.l.b16 %v1185
  %v1823 = vunpack.c.h.b16 %v1185
  %v1824 = vunpack.c.l.b16 %v1186
  %v1825 = vunpack.c.h.b16 %v1186
  %v1826 = vunpack.c.l.b16 %v1187
  %v1827 = vunpack.c.h.b16 %v1187
  %v1828 = vunpack.c.l.b16 %v1188
  %v1829 = vunpack.c.h.b16 %v1188
  %v1830 = vunpack.c.l.b16 %v1189
  %v1831 = vunpack.c.h.b16 %v1189
  %v1832 = vunpack.c.l.b16 %v1190
  %v1833 = vunpack.c.h.b16 %v1190
  %v1834 = vunpack.c.l.b16 %v1191
  %v1835 = vunpack.c.h.b16 %v1191
  %v1836 = vunpack.c.l.b16 %v1192
  %v1837 = vunpack.c.h.b16 %v1192
  %v1838 = vunpack.c.l.b16 %v1193
  %v1839 = vunpack.c.h.b16 %v1193
  %v1840 = vunpack.c.l.b16 %v1194
  %v1841 = vunpack.c.h.b16 %v1194
  %v1842 = vunpack.c.l.b16 %v1195
  %v1843 = vunpack.c.h.b16 %v1195
  %v1844 = vunpack.c.l.b16 %v1196
  %v1845 = vunpack.c.h.b16 %v1196
  %v1846 = vunpack.c.l.b16 %v1197
  %v1847 = vunpack.c.h.b16 %v1197
  %v1848 = vunpack.c.l.b16 %v1198
  %v1849 = vunpack.c.h.b16 %v1198
  %v1850 = vunpack.c.l.b16 %v1199
  %v1851 = vunpack.c.h.b16 %v1199
  %v1852 = vunpack.c.l.b16 %v1200
  %v1853 = vunpack.c.h.b16 %v1200
  %v1854 = vunpack.c.l.b16 %v1201
  %v1855 = vunpack.c.h.b16 %v1201
  %v1856 = vunpack.c.l.b16 %v1202
  %v1857 = vunpack.c.h.b16 %v1202
  %v1858 = vunpack.c.l.b16 %v1203
  %v1859 = vunpack.c.h.b16 %v1203
  %v1860 = vunpack.c.l.b16 %v1204
  %v1861 = vunpack.c.h.b16 %v1204
  %v1862 = vunpack.c.l.b16 %v1205
  %v1863 = vunpack.c.h.b16 %v1205
  %v1864 = vunpack.c.l.b16 %v1206
  %v1865 = vunpack.c.h.b16 %v1206
  %v1866 = vunpack.c.l.b16 %v1207
  %v1867 = vunpack.c.h.b16 %v1207
  %v1868 = vunpack.c.l.b16 %v1208
  %v1869 = vunpack.c.h.b16 %v1208
  %v1870 = vunpack.c.l.b16 %v1209
  %v1871 = vunpack.c.h.b16 %v1209
  %v1872 = vunpack.c.l.b16 %v1210
  %v1873 = vunpack.c.h.b16 %v1210
  %v1874 = vunpack.c.l.b16 %v1211
  %v1875 = vunpack.c.h.b16 %v1211
  %v1876 = vunpack.c.l.b16 %v1212
  %v1877 = vunpack.c.h.b16 %v1212
  %v1878 = vunpack.c.l.b16 %v1213
  %v1879 = vunpack.c.h.b16 %v1213
  %v1880 = vunpack.c.l.b16 %v1214
  %v1881 = vunpack.c.h.b16 %v1214
  %v1882 = vunpack.c.l.b16 %v1215
  %v1883 = vunpack.c.h.b16 %v1215
  %v1884 = vunpack.c.l.b16 %v1216
  %v1885 = vunpack.c.h.b16 %v1216
  %v1886 = vunpack.c.l.b16 %v1217
  %v1887 = vunpack.c.h.b16 %v1217
  %v1888 = vunpack.c.l.b16 %v1218
  %v1889 = vunpack.c.h.b16 %v1218
  %v1890 = vunpack.c.l.b16 %v1219
  %v1891 = vunpack.c.h.b16 %v1219
  %v1892 = vunpack.c.l.b16 %v1220
  %v1893 = vunpack.c.h.b16 %v1220
  %v1894 = vunpack.c.l.b16 %v1221
  %v1895 = vunpack.c.h.b16 %v1221
  %v1896 = vunpack.c.l.b16 %v1222
  %v1897 = vunpack.c.h.b16 %v1222
  %v1898 = vunpack.c.l.b16 %v1223
  %v1899 = vunpack.c.h.b16 %v1223
  %v1900 = vunpack.c.l.b16 %v1224
  %v1901 = vunpack.c.h.b16 %v1224
  %v1902 = vunpack.c.l.b16 %v1225
  %v1903 = vunpack.c.h.b16 %v1225
  %v1904 = vunpack.c.l.b16 %v1226
  %v1905 = vunpack.c.h.b16 %v1226
  %v1906 = vunpack.c.l.b16 %v1227
  %v1907 = vunpack.c.h.b16 %v1227
  %v1908 = vunpack.c.l.b16 %v1228
  %v1909 = vunpack.c.h.b16 %v1228
  %v1910 = vunpack.c.l.b16 %v1229
  %v1911 = vunpack.c.h.b16 %v1229
  %v1912 = vunpack.c.l.b16 %v1230
  %v1913 = vunpack.c.h.b16 %v1230
  %v1914 = vunpack.c.l.b16 %v1231
  %v1915 = vunpack.c.h.b16 %v1231
  %v1916 = vunpack.c.l.b16 %v1232
  %v1917 = vunpack.c.h.b16 %v1232
  %v1918 = vunpack.c.l.b16 %v1233
  %v1919 = vunpack.c.h.b16 %v1233
  %v1920 = vunpack.c.l.b16 %v1234
  %v1921 = vunpack.c.h.b16 %v1234
  %v1922 = vunpack.c.l.b16 %v1235
  %v1923 = vunpack.c.h.b16 %v1235
  %v1924 = vunpack.c.l.b16 %v1236
  %v1925 = vunpack.c.h.b16 %v1236
  %v1926 = vunpack.c.l.b16 %v1237
  %v1927 = vunpack.c.h.b16 %v1237
  %v1928 = vunpack.c.l.b16 %v1238
  %v1929 = vunpack.c.h.b16 %v1238
  %v1930 = vunpack.c.l.b16 %v1239
  %v1931 = vunpack.c.h.b16 %v1239
  %v1932 = vunpack.c.l.b16 %v1240
  %v1933 = vunpack.c.h.b16 %v1240
  %v1934 = vunpack.c.l.b16 %v1241
  %v1935 = vunpack.c.h.b16 %v1241
  %v1936 = vunpack.c.l.b16 %v1242
  %v1937 = vunpack.c.h.b16 %v1242
  %v1938 = vunpack.c.l.b16 %v1243
  %v1939 = vunpack.c.h.b16 %v1243
  %v1940 = vunpack.c.l.b16 %v1244
  %v1941 = vunpack.c.h.b16 %v1244
  %v1942 = vunpack.c.l.b16 %v1245
  %v1943 = vunpack.c.h.b16 %v1245
  %v1944 = vunpack.c.l.b16 %v1246
  %v1945 = vunpack.c.h.b16 %v1246
  %v1946 = vunpack.c.l.b16 %v1247
  %v1947 = vunpack.c.h.b16 %v1247
  %v1948 = vunpack.c.l.b16 %v1248
  %v1949 = vunpack.c.h.b16 %v1248
  %v1950 = vunpack.c.l.b16 %v1249
  %v1951 = vunpack.c.h.b16 %v1249
  %v1952 = vunpack.c.l.b16 %v1250
  %v1953 = vunpack.c.h.b16 %v1250
  %v1954 = vunpack.c.l.b16 %v1251
  %v1955 = vunpack.c.h.b16 %v1251
  %v1956 = vunpack.c.l.b16 %v1252
  %v1957 = vunpack.c.h.b16 %v1252
  %v1958 = vunpack.c.l.b16 %v1253
  %v1959 = vunpack.c.h.b16 %v1253
  %v1960 = vunpack.c.l.b16 %v1254
  %v1961 = vunpack.c.h.b16 %v1254
  %v1962 = vunpack.c.l.b16 %v1255
  %v1963 = vunpack.c.h.b16 %v1255
  %v1964 = vunpack.c.l.b16 %v1256
  %v1965 = vunpack.c.h.b16 %v1256
  %v1966 = vunpack.c.l.b16 %v1257
  %v1967 = vunpack.c.h.b16 %v1257
  %v1968 = vunpack.c.l.b16 %v1258
  %v1969 = vunpack.c.h.b16 %v1258
  %v1970 = vunpack.c.l.b16 %v1259
  %v1971 = vunpack.c.h.b16 %v1259
  %v1972 = vunpack.c.l.b16 %v1260
  %v1973 = vunpack.c.h.b16 %v1260
  %v1974 = vunpack.c.l.b16 %v1261
  %v1975 = vunpack.c.h.b16 %v1261
  %v1976 = vunpack.c.l.b16 %v1262
  %v1977 = vunpack.c.h.b16 %v1262
  %v1978 = vunpack.c.l.b16 %v1263
  %v1979 = vunpack.c.h.b16 %v1263
  %v1980 = vunpack.c.l.b16 %v1264
  %v1981 = vunpack.c.h.b16 %v1264
  %v1982 = vunpack.c.l.b16 %v1265
  %v1983 = vunpack.c.h.b16 %v1265
  %v1984 = vunpack.c.l.b16 %v1266
  %v1985 = vunpack.c.h.b16 %v1266
  %v1986 = vunpack.c.l.b16 %v1267
  %v1987 = vunpack.c.h.b16 %v1267
  %v1988 = vunpack.c.l.b16 %v1268
  %v1989 = vunpack.c.h.b16 %v1268
  %v1990 = vunpack.c.l.b16 %v1269
  %v1991 = vunpack.c.h.b16 %v1269
  %v1992 = vunpack.c.l.b16 %v1270
  %v1993 = vunpack.c.h.b16 %v1270
  %v1994 = vunpack.c.l.b16 %v1271
  %v1995 = vunpack.c.h.b16 %v1271
  %v1996 = vunpack.c.l.b16 %v1272
  %v1997 = vunpack.c.h.b16 %v1272
  %v1998 = vunpack.c.l.b16 %v1273
  %v1999 = vunpack.c.h.b16 %v1273
  %v2000 = vunpack.c.l.b16 %v1274
  %v2001 = vunpack.c.h.b16 %v1274
  %v2002 = vunpack.c.l.b16 %v1275
  %v2003 = vunpack.c.h.b16 %v1275
  %v2004 = vunpack.c.l.b16 %v1276
  %v2005 = vunpack.c.h.b16 %v1276
  %v2006 = vunpack.c.l.b16 %v1277
  %v2007 = vunpack.c.h.b16 %v1277
  %v2008 = vunpack.c.l.b16 %v1278
  %v2009 = vunpack.c.h.b16 %v1278
  %v2010 = vunpack.c.l.b16 %v1279
  %v2011 = vunpack.c.h.b16 %v1279
  %v2012 = vunpack.c.l.b16 %v1280
  %v2013 = vunpack.c.h.b16 %v1280
  %v2014 = vunpack.c.l.b16 %v1281
  %v2015 = vunpack.c.h.b16 %v1281
  %v2016 = vunpack.c.l.b16 %v1282
  %v2017 = vunpack.c.h.b16 %v1282
  %v2018 = vunpack.c.l.b16 %v1283
  %v2019 = vunpack.c.h.b16 %v1283
  %v2020 = vunpack.c.l.b16 %v1284
  %v2021 = vunpack.c.h.b16 %v1284
  %v2022 = vunpack.c.l.b16 %v1285
  %v2023 = vunpack.c.h.b16 %v1285
  %v2024 = vunpack.c.l.b16 %v1286
  %v2025 = vunpack.c.h.b16 %v1286
  %v2026 = vunpack.c.l.b16 %v1287
  %v2027 = vunpack.c.h.b16 %v1287
  %v2028 = vunpack.c.l.b16 %v1288
  %v2029 = vunpack.c.h.b16 %v1288
  %v2030 = vunpack.c.l.b16 %v1289
  %v2031 = vunpack.c.h.b16 %v1289
  %v2032 = vunpack.c.l.b16 %v1290
  %v2033 = vunpack.c.h.b16 %v1290
  %v2034 = vunpack.c.l.b16 %v1291
  %v2035 = vunpack.c.h.b16 %v1291
  %v2036 = vunpack.c.l.b16 %v1292
  %v2037 = vunpack.c.h.b16 %v1292
  %v2038 = vunpack.c.l.b16 %v1293
  %v2039 = vunpack.c.h.b16 %v1293
  %v2040 = vunpack.c.l.b16 %v1294
  %v2041 = vunpack.c.h.b16 %v1294
  %v2042 = vunpack.c.l.b16 %v1295
  %v2043 = vunpack.c.h.b16 %v1295
  %v2044 = vunpack.c.l.b16 %v1296
  %v2045 = vunpack.c.h.b16 %v1296
  %v2046 = vunpack.c.l.b16 %v1297
  %v2047 = vunpack.c.h.b16 %v1297
  %v2048 = vunpack.c.l.b16 %v1298
  %v2049 = vunpack.c.h.b16 %v1298
  %v2050 = vunpack.c.l.b16 %v1299
  %v2051 = vunpack.c.h.b16 %v1299
  %v2052 = vunpack.c.l.b16 %v1300
  %v2053 = vunpack.c.h.b16 %v1300
  %v2054 = vunpack.c.l.b16 %v1301
  %v2055 = vunpack.c.h.b16 %v1301
  %v2056 = vunpack.c.l.b16 %v1302
  %v2057 = vunpack.c.h.b16 %v1302
  %v2058 = vunpack.c.l.b16 %v1303
  %v2059 = vunpack.c.h.b16 %v1303
  %v2060 = vunpack.c.l.b16 %v1304
  %v2061 = vunpack.c.h.b16 %v1304
  %v2062 = vunpack.c.l.b16 %v1305
  %v2063 = vunpack.c.h.b16 %v1305
  %v2064 = vunpack.c.l.b16 %v1306
  %v2065 = vunpack.c.h.b16 %v1306
  %v2066 = vunpack.c.l.b16 %v1307
  %v2067 = vunpack.c.h.b16 %v1307
  %v2068 = vunpack.c.l.b16 %v1308
  %v2069 = vunpack.c.h.b16 %v1308
  %v2070 = vunpack.c.l.b16 %v1309
  %v2071 = vunpack.c.h.b16 %v1309
  %v2072 = vunpack.c.l.b16 %v1310
  %v2073 = vunpack.c.h.b16 %v1310
  %v2074 = vunpack.c.l.b16 %v1311
  %v2075 = vunpack.c.h.b16 %v1311
  %v2076 = vunpack.c.l.b16 %v1312
  %v2077 = vunpack.c.h.b16 %v1312
  %v2078 = vunpack.c.l.b16 %v1313
  %v2079 = vunpack.c.h.b16 %v1313
  %v2080 = vunpack.c.l.b16 %v1314
  %v2081 = vunpack.c.h.b16 %v1314
  %v2082 = vunpack.c.l.b16 %v1315
  %v2083 = vunpack.c.h.b16 %v1315
  %v2084 = vunpack.c.l.b16 %v1316
  %v2085 = vunpack.c.h.b16 %v1316
  %v2086 = vunpack.c.l.b16 %v1317
  %v2087 = vunpack.c.h.b16 %v1317
  %v2088 = vunpack.c.l.b16 %v1318
  %v2089 = vunpack.c.h.b16 %v1318
  %v2090 = vunpack.c.l.b16 %v1319
  %v2091 = vunpack.c.h.b16 %v1319
  %v2092 = vunpack.c.l.b16 %v1320
  %v2093 = vunpack.c.h.b16 %v1320
  %v2094 = vunpack.c.l.b16 %v1321
  %v2095 = vunpack.c.h.b16 %v1321
  %v2096 = vunpack.c.l.b16 %v1322
  %v2097 = vunpack.c.h.b16 %v1322
  %v2098 = vunpack.c.l.b16 %v1323
  %v2099 = vunpack.c.h.b16 %v1323
  %v2100 = vunpack.c.l.b16 %v1324
  %v2101 = vunpack.c.h.b16 %v1324
  %v2102 = vunpack.c.l.b16 %v1325
  %v2103 = vunpack.c.h.b16 %v1325
  %v2104 = vunpack.c.l.b16 %v1326
  %v2105 = vunpack.c.h.b16 %v1326
  %v2106 = vunpack.c.l.b16 %v1327
  %v2107 = vunpack.c.h.b16 %v1327
  %v2108 = vunpack.c.l.b16 %v1328
  %v2109 = vunpack.c.h.b16 %v1328
  %v2110 = vunpack.c.l.b16 %v1329
  %v2111 = vunpack.c.h.b16 %v1329
  %v2112 = vunpack.c.l.b16 %v1330
  %v2113 = vunpack.c.h.b16 %v1330
  %v2114 = vunpack.c.l.b16 %v1331
  %v2115 = vunpack.c.h.b16 %v1331
  %v2116 = vunpack.c.l.b16 %v1332
  %v2117 = vunpack.c.h.b16 %v1332
  %v2118 = vunpack.c.l.b16 %v1333
  %v2119 = vunpack.c.h.b16 %v1333
  %v2120 = vunpack.c.l.b16 %v1334
  %v2121 = vunpack.c.h.b16 %v1334
  %v2122 = vunpack.c.l.b16 %v1335
  %v2123 = vunpack.c.h.b16 %v1335
  %v2124 = vunpack.c.l.b16 %v1336
  %v2125 = vunpack.c.h.b16 %v1336
  %v2126 = vunpack.c.l.b16 %v1337
  %v2127 = vunpack.c.h.b16 %v1337
  %v2128 = vpack.c.b16 %v1620, %v1616
  %v2129 = vpack.c.b16 %v1621, %v1617
  %v2130 = vpack.c.b16 %v1622, %v1618
  %v2131 = vpack.c.b16 %v1623, %v1619
  %v2132 = vpack.c.b16 %v1628, %v1624
  %v2133 = vpack.c.b16 %v1629, %v1625
  %v2134 = vpack.c.b16 %v1630, %v1626
  %v2135 = vpack.c.b16 %v1631, %v1627
  %v2136 = vpack.c.b16 %v1636, %v1632
  %v2137 = vpack.c.b16 %v1637, %v1633
  %v2138 = vpack.c.b16 %v1638, %v1634
  %v2139 = vpack.c.b16 %v1639, %v1635
  %v2140 = vpack.c.b16 %v1644, %v1640
  %v2141 = vpack.c.b16 %v1645, %v1641
  %v2142 = vpack.c.b16 %v1646, %v1642
  %v2143 = vpack.c.b16 %v1647, %v1643
  %v2144 = vpack.c.b16 %v1652, %v1648
  %v2145 = vpack.c.b16 %v1653, %v1649
  %v2146 = vpack.c.b16 %v1654, %v1650
  %v2147 = vpack.c.b16 %v1655, %v1651
  %v2148 = vpack.c.b16 %v1660, %v1656
  %v2149 = vpack.c.b16 %v1661, %v1657
  %v2150 = vpack.c.b16 %v1662, %v1658
  %v2151 = vpack.c.b16 %v1663, %v1659
  %v2152 = vpack.c.b16 %v1668, %v1664
  %v2153 = vpack.c.b16 %v1669, %v1665
  %v2154 = vpack.c.b16 %v1670, %v1666
  %v2155 = vpack.c.b16 %v1671, %v1667
  %v2156 = vpack.c.b16 %v1676, %v1672
  %v2157 = vpack.c.b16 %v1677, %v1673
  %v2158 = vpack.c.b16 %v1678, %v1674
  %v2159 = vpack.c.b16 %v1679, %v1675
  %v2160 = vpack.c.b16 %v1684, %v1680
  %v2161 = vpack.c.b16 %v1685, %v1681
  %v2162 = vpack.c.b16 %v1686, %v1682
  %v2163 = vpack.c.b16 %v1687, %v1683
  %v2164 = vpack.c.b16 %v1692, %v1688
  %v2165 = vpack.c.b16 %v1693, %v1689
  %v2166 = vpack.c.b16 %v1694, %v1690
  %v2167 = vpack.c.b16 %v1695, %v1691
  %v2168 = vpack.c.b16 %v1700, %v1696
  %v2169 = vpack.c.b16 %v1701, %v1697
  %v2170 = vpack.c.b16 %v1702, %v1698
  %v2171 = vpack.c.b16 %v1703, %v1699
  %v2172 = vpack.c.b16 %v1708, %v1704
  %v2173 = vpack.c.b16 %v1709, %v1705
  %v2174 = vpack.c.b16 %v1710, %v1706
  %v2175 = vpack.c.b16 %v1711, %v1707
  %v2176 = vpack.c.b16 %v1716, %v1712
  %v2177 = vpack.c.b16 %v1717, %v1713
  %v2178 = vpack.c.b16 %v1718, %v1714
  %v2179 = vpack.c.b16 %v1719, %v1715
  %v2180 = vpack.c.b16 %v1724, %v1720
  %v2181 = vpack.c.b16 %v1725, %v1721
  %v2182 = vpack.c.b16 %v1726, %v1722
  %v2183 = vpack.c.b16 %v1727, %v1723
  %v2184 = vpack.c.b16 %v1732, %v1728
  %v2185 = vpack.c.b16 %v1733, %v1729
  %v2186 = vpack.c.b16 %v1734, %v1730
  %v2187 = vpack.c.b16 %v1735, %v1731
  %v2188 = vpack.c.b16 %v1740, %v1736
  %v2189 = vpack.c.b16 %v1741, %v1737
  %v2190 = vpack.c.b16 %v1742, %v1738
  %v2191 = vpack.c.b16 %v1743, %v1739
  %v2192 = vpack.c.b16 %v1748, %v1744
  %v2193 = vpack.c.b16 %v1749, %v1745
  %v2194 = vpack.c.b16 %v1750, %v1746
  %v2195 = vpack.c.b16 %v1751, %v1747
  %v2196 = vpack.c.b16 %v1756, %v1752
  %v2197 = vpack.c.b16 %v1757, %v1753
  %v2198 = vpack.c.b16 %v1758, %v1754
  %v2199 = vpack.c.b16 %v1759, %v1755
  %v2200 = vpack.c.b16 %v1764, %v1760
  %v2201 = vpack.c.b16 %v1765, %v1761
  %v2202 = vpack.c.b16 %v1766, %v1762
  %v2203 = vpack.c.b16 %v1767, %v1763
  %v2204 = vpack.c.b16 %v1772, %v1768
  %v2205 = vpack.c.b16 %v1773, %v1769
  %v2206 = vpack.c.b16 %v1774, %v1770
  %v2207 = vpack.c.b16 %v1775, %v1771
  %v2208 = vpack.c.b16 %v1780, %v1776
  %v2209 = vpack.c.b16 %v1781, %v1777
  %v2210 = vpack.c.b16 %v1782, %v1778
  %v2211 = vpack.c.b16 %v1783, %v1779
  %v2212 = vpack.c.b16 %v1788, %v1784
  %v2213 = vpack.c.b16 %v1789, %v1785
  %v2214 = vpack.c.b16 %v1790, %v1786
  %v2215 = vpack.c.b16 %v1791, %v1787
  %v2216 = vpack.c.b16 %v1796, %v1792
  %v2217 = vpack.c.b16 %v1797, %v1793
  %v2218 = vpack.c.b16 %v1798, %v1794
  %v2219 = vpack.c.b16 %v1799, %v1795
  %v2220 = vpack.c.b16 %v1804, %v1800
  %v2221 = vpack.c.b16 %v1805, %v1801
  %v2222 = vpack.c.b16 %v1806, %v1802
  %v2223 = vpack.c.b16 %v1807, %v1803
  %v2224 = vpack.c.b16 %v1812, %v1808
  %v2225 = vpack.c.b16 %v1813, %v1809
  %v2226 = vpack.c.b16 %v1814, %v1810
  %v2227 = vpack.c.b16 %v1815, %v1811
  %v2228 = vpack.c.b16 %v1820, %v1816
  %v2229 = vpack.c.b16 %v1821, %v1817
  %v2230 = vpack.c.b16 %v1822, %v1818
  %v2231 = vpack.c.b16 %v1823, %v1819
  %v2232 = vpack.c.b16 %v1828, %v1824
  %v2233 = vpack.c.b16 %v1829, %v1825
  %v2234 = vpack.c.b16 %v1830, %v1826
  %v2235 = vpack.c.b16 %v1831, %v1827
  %v2236 = vpack.c.b16 %v1836, %v1832
  %v2237 = vpack.c.b16 %v1837, %v1833
  %v2238 = vpack.c.b16 %v1838, %v1834
  %v2239 = vpack.c.b16 %v1839, %v1835
  %v2240 = vpack.c.b16 %v1844, %v1840
  %v2241 = vpack.c.b16 %v1845, %v1841
  %v2242 = vpack.c.b16 %v1846, %v1842
  %v2243 = vpack.c.b16 %v1847, %v1843
  %v2244 = vpack.c.b16 %v1852, %v1848
  %v2245 = vpack.c.b16 %v1853, %v1849
  %v2246 = vpack.c.b16 %v1854, %v1850
  %v2247 = vpack.c.b16 %v1855, %v1851
  %v2248 = vpack.c.b16 %v1860, %v1856
  %v2249 = vpack.c.b16 %v1861, %v1857
  %v2250 = vpack.c.b16 %v1862, %v1858
  %v2251 = vpack.c.b16 %v1863, %v1859
  %v2252 = vpack.c.b16 %v1868, %v1864
  %v2253 = vpack.c.b16 %v1869, %v1865
  %v2254 = vpack.c.b16 %v1870, %v1866
  %v2255 = vpack.c.b16 %v1871, %v1867
  %v2256 = vpack.c.b16 %v1876, %v1872
  %v2257 = vpack.c.b16 %v1877, %v1873
  %v2258 = vpack.c.b16 %v1878, %v1874
  %v2259 = vpack.c.b16 %v1879, %v1875
  %v2260 = vpack.c.b16 %v1884, %v1880
  %v2261 = vpack.c.b16 %v1885, %v1881
  %v2262 = vpack.c.b16 %v1886, %v1882
  %v2263 = vpack.c.b16 %v1887, %v1883
  %v2264 = vpack.c.b16 %v1892, %v1888
  %v2265 = vpack.c.b16 %v1893, %v1889
  %v2266 = vpack.c.b16 %v1894, %v1890
  %v2267 = vpack.c.b16 %v1895, %v1891
  %v2268 = vpack.c.b16 %v1900, %v1896
  %v2269 = vpack.c.b16 %v1901, %v1897
  %v2270 = vpack.c.b16 %v1902, %v1898
  %v2271 = vpack.c.b16 %v1903, %v1899
  %v2272 = vpack.c.b16 %v1908, %v1904
  %v2273 = vpack.c.b16 %v1909, %v1905
  %v2274 = vpack.c.b16 %v1910, %v1906
  %v2275 = vpack.c.b16 %v1911, %v1907
  %v2276 = vpack.c.b16 %v1916, %v1912
  %v2277 = vpack.c.b16 %v1917, %v1913
  %v2278 = vpack.c.b16 %v1918, %v1914
  %v2279 = vpack.c.b16 %v1919, %v1915
  %v2280 = vpack.c.b16 %v1924, %v1920
  %v2281 = vpack.c.b16 %v1925, %v1921
  %v2282 = vpack.c.b16 %v1926, %v1922
  %v2283 = vpack.c.b16 %v1927, %v1923
  %v2284 = vpack.c.b16 %v1932, %v1928
  %v2285 = vpack.c.b16 %v1933, %v1929
  %v2286 = vpack.c.b16 %v1934, %v1930
  %v2287 = vpack.c.b16 %v1935, %v1931
  %v2288 = vpack.c.b16 %v1940, %v1936
  %v2289 = vpack.c.b16 %v1941, %v1937
  %v2290 = vpack.c.b16 %v1942, %v1938
  %v2291 = vpack.c.b16 %v1943, %v1939
  %v2292 = vpack.c.b16 %v1948, %v1944
  %v2293 = vpack.c.b16 %v1949, %v1945
  %v2294 = vpack.c.b16 %v1950, %v1946
  %v2295 = vpack.c.b16 %v1951, %v1947
  %v2296 = vpack.c.b16 %v1956, %v1952
  %v2297 = vpack.c.b16 %v1957, %v1953
  %v2298 = vpack.c.b16 %v1958, %v1954
  %v2299 = vpack.c.b16 %v1959, %v1955
  %v2300 = vpack.c.b16 %v1964, %v1960
  %v2301 = vpack.c.b16 %v1965, %v1961
  %v2302 = vpack.c.b16 %v1966, %v1962
  %v2303 = vpack.c.b16 %v1967, %v1963
  %v2304 = vpack.c.b16 %v1972, %v1968
  %v2305 = vpack.c.b16 %v1973, %v1969
  %v2306 = vpack.c.b16 %v1974, %v1970
  %v2307 = vpack.c.b16 %v1975, %v1971
  %v2308 = vpack.c.b16 %v1980, %v1976
  %v2309 = vpack.c.b16 %v1981, %v1977
  %v2310 = vpack.c.b16 %v1982, %v1978
  %v2311 = vpack.c.b16 %v1983, %v1979
  %v2312 = vpack.c.b16 %v1988, %v1984
  %v2313 = vpack.c.b16 %v1989, %v1985
  %v2314 = vpack.c.b16 %v1990, %v1986
  %v2315 = vpack.c.b16 %v1991, %v1987
  %v2316 = vpack.c.b16 %v1996, %v1992
  %v2317 = vpack.c.b16 %v1997, %v1993
  %v2318 = vpack.c.b16 %v1998, %v1994
  %v2319 = vpack.c.b16 %v1999, %v1995
  %v2320 = vpack.c.b16 %v2004, %v2000
  %v2321 = vpack.c.b16 %v2005, %v2001
  %v2322 = vpack.c.b16 %v2006, %v2002
  %v2323 = vpack.c.b16 %v2007, %v2003
  %v2324 = vpack.c.b16 %v2012, %v2008
  %v2325 = vpack.c.b16 %v2013, %v2009
  %v2326 = vpack.c.b16 %v2014, %v2010
  %v2327 = vpack.c.b16 %v2015, %v2011
  %v2328 = vpack.c.b16 %v2020, %v2016
  %v2329 = vpack.c.b16 %v2021, %v2017
  %v2330 = vpack.c.b16 %v2022, %v2018
  %v2331 = vpack.c.b16 %v2023, %v2019
  %v2332 = vpack.c.b16 %v2028, %v2024
  %v2333 = vpack.c.b16 %v2029, %v2025
  %v2334 = vpack.c.b16 %v2030, %v2026
  %v2335 = vpack.c.b16 %v2031, %v2027
  %v2336 = vpack.c.b16 %v2036, %v2032
  %v2337 = vpack.c.b16 %v2037, %v2033
  %v2338 = vpack.c.b16 %v2038, %v2034
  %v2339 = vpack.c.b16 %v2039, %v2035
  %v2340 = vpack.c.b16 %v2044, %v2040
  %v2341 = vpack.c.b16 %v2045, %v2041
  %v2342 = vpack.c.b16 %v2046, %v2042
  %v2343 = vpack.c.b16 %v2047, %v2043
  %v2344 = vpack.c.b16 %v2052, %v2048
  %v2345 = vpack.c.b16 %v2053, %v2049
  %v2346 = vpack.c.b16 %v2054, %v2050
  %v2347 = vpack.c.b16 %v2055, %v2051
  %v2348 = vpack.c.b16 %v2060, %v2056
  %v2349 = vpack.c.b16 %v2061, %v2057
  %v2350 = vpack.c.b16 %v2062, %v2058
  %v2351 = vpack.c.b16 %v2063, %v2059
  %v2352 = vpack.c.b16 %v2068, %v2064
  %v2353 = vpack.c.b16 %v2069, %v2065
  %v2354 = vpack.c.b16 %v2070, %v2066
  %v2355 = vpack.c.b16 %v2071, %v2067
  %v2356 = vpack.c.b16 %v2076, %v2072
  %v2357 = vpack.c.b16 %v2077, %v2073
  %v2358 = vpack.c.b16 %v2078, %v2074
  %v2359 = vpack.c.b16 %v2079, %v2075
  %v2360 = vpack.c.b16 %v2084, %v2080
  %v2361 = vpack.c.b16 %v2085, %v2081
  %v2362 = vpack.c.b16 %v2086, %v2082
  %v2363 = vpack.c.b16 %v2087, %v2083
  %v2364 = vpack.c.b16 %v2092, %v2088
  %v2365 = vpack.c.b16 %v2093, %v2089
  %v2366 = vpack.c.b16 %v2094, %v2090
  %v2367 = vpack.c.b16 %v2095, %v2091
  %v2368 = vpack.c.b16 %v2100, %v2096
  %v2369 = vpack.c.b16 %v2101, %v2097
  %v2370 = vpack.c.b16 %v2102, %v2098
  %v2371 = vpack.c.b16 %v2103, %v2099
  %v2372 = vpack.c.b16 %v2108, %v2104
  %v2373 = vpack.c.b16 %v2109, %v2105
  %v2374 = vpack.c.b16 %v2110, %v2106
  %v2375 = vpack.c.b16 %v2111, %v2107
  %v2376 = vpack.c.b16 %v2116, %v2112
  %v2377 = vpack.c.b16 %v2117, %v2113
  %v2378 = vpack.c.b16 %v2118, %v2114
  %v2379 = vpack.c.b16 %v2119, %v2115
  %v2380 = vpack.c.b16 %v2124, %v2120
  %v2381 = vpack.c.b16 %v2125, %v2121
  %v2382 = vpack.c.b16 %v2126, %v2122
  %v2383 = vpack.c.b16 %v2127, %v2123
  %2640 = vmatprep.subr.bf16.mxu0 %v2129
  %2641 = vmatpush1.bf16.msra.mxu0 %v2128
  %2642 = vmatprep.subr.bf16.mxu0 %v2133
  %2643 = vmatpush1.bf16.msra.mxu0 %v2132
  %2644 = vmatprep.subr.bf16.mxu0 %v2137
  %2645 = vmatpush1.bf16.msra.mxu0 %v2136
  %2646 = vmatprep.subr.bf16.mxu0 %v2141
  %2647 = vmatpush1.bf16.msra.mxu0 %v2140
  %2648 = vmatprep.subr.bf16.mxu0 %v2145
  %2649 = vmatpush1.bf16.msra.mxu0 %v2144
  %2650 = vmatprep.subr.bf16.mxu0 %v2149
  %2651 = vmatpush1.bf16.msra.mxu0 %v2148
  %2652 = vmatprep.subr.bf16.mxu0 %v2153
  %2653 = vmatpush1.bf16.msra.mxu0 %v2152
  %2654 = vmatprep.subr.bf16.mxu0 %v2157
  %2655 = vmatpush1.bf16.msra.mxu0 %v2156
  %2656 = vmatprep.subr.bf16.mxu0 %v2161
  %2657 = vmatpush1.bf16.msra.mxu0 %v2160
  %2658 = vmatprep.subr.bf16.mxu0 %v2165
  %2659 = vmatpush1.bf16.msra.mxu0 %v2164
  %2660 = vmatprep.subr.bf16.mxu0 %v2169
  %2661 = vmatpush1.bf16.msra.mxu0 %v2168
  %2662 = vmatprep.subr.bf16.mxu0 %v2173
  %2663 = vmatpush1.bf16.msra.mxu0 %v2172
  %2664 = vmatprep.subr.bf16.mxu0 %v2177
  %2665 = vmatpush1.bf16.msra.mxu0 %v2176
  %2666 = vmatprep.subr.bf16.mxu0 %v2181
  %2667 = vmatpush1.bf16.msra.mxu0 %v2180
  %2668 = vmatprep.subr.bf16.mxu0 %v2185
  %2669 = vmatpush1.bf16.msra.mxu0 %v2184
  %2670 = vmatprep.subr.bf16.mxu0 %v2189
  %2671 = vmatpush1.bf16.msra.mxu0 %v2188
  %2672 = vmatprep.mubr.bf16.mxu0 %v1075
  %2673 = vmatmul.mubr.bf16.gmra.mrb[0].mxu0 %v1074
  %v2674 = vpop.f32.mrb[0].mxu0
  %v2675 = vadd.f32 %v1343, %v2674
  %v2676 = vpop.f32.mrb[0].mxu0
  %v2677 = vadd.f32 %v1347, %v2676
  %v2678 = vpop.f32.mrb[0].mxu0
  %v2679 = vadd.f32 %v1343, %v2678
  %v2680 = vpop.f32.mrb[0].mxu0
  %v2681 = vadd.f32 %v1347, %v2680
  %2682 = vdwg.mxu0
  %2683 = vmatprep.subr.bf16.mxu0 %v2193
  %2684 = vmatpush1.bf16.msra.mxu0 %v2192
  %2685 = vmatprep.subr.bf16.mxu0 %v2197
  %2686 = vmatpush1.bf16.msra.mxu0 %v2196
  %2687 = vmatprep.subr.bf16.mxu0 %v2201
  %2688 = vmatpush1.bf16.msra.mxu0 %v2200
  %2689 = vmatprep.subr.bf16.mxu0 %v2205
  %2690 = vmatpush1.bf16.msra.mxu0 %v2204
  %2691 = vmatprep.subr.bf16.mxu0 %v2209
  %2692 = vmatpush1.bf16.msra.mxu0 %v2208
  %2693 = vmatprep.subr.bf16.mxu0 %v2213
  %2694 = vmatpush1.bf16.msra.mxu0 %v2212
  %2695 = vmatprep.subr.bf16.mxu0 %v2217
  %2696 = vmatpush1.bf16.msra.mxu0 %v2216
  %2697 = vmatprep.subr.bf16.mxu0 %v2221
  %2698 = vmatpush1.bf16.msra.mxu0 %v2220
  %2699 = vmatprep.subr.bf16.mxu0 %v2225
  %2700 = vmatpush1.bf16.msra.mxu0 %v2224
  %2701 = vmatprep.subr.bf16.mxu0 %v2229
  %2702 = vmatpush1.bf16.msra.mxu0 %v2228
  %2703 = vmatprep.subr.bf16.mxu0 %v2233
  %2704 = vmatpush1.bf16.msra.mxu0 %v2232
  %2705 = vmatprep.subr.bf16.mxu0 %v2237
  %2706 = vmatpush1.bf16.msra.mxu0 %v2236
  %2707 = vmatprep.subr.bf16.mxu0 %v2241
  %2708 = vmatpush1.bf16.msra.mxu0 %v2240
  %2709 = vmatprep.subr.bf16.mxu0 %v2245
  %2710 = vmatpush1.bf16.msra.mxu0 %v2244
  %2711 = vmatprep.subr.bf16.mxu0 %v2249
  %2712 = vmatpush1.bf16.msra.mxu0 %v2248
  %2713 = vmatprep.subr.bf16.mxu0 %v2253
  %2714 = vmatpush1.bf16.msra.mxu0 %v2252
  %2715 = vmatprep.mubr.bf16.mxu0 %v1077
  %2716 = vmatmul.mubr.bf16.gmra.mrb[0].mxu0 %v1076
  %v2717 = vpop.f32.mrb[0].mxu0
  %v2718 = vadd.f32 %v2675, %v2717
  %v2719 = vpop.f32.mrb[0].mxu0
  %v2720 = vadd.f32 %v2677, %v2719
  %v2721 = vpop.f32.mrb[0].mxu0
  %v2722 = vadd.f32 %v2679, %v2721
  %v2723 = vpop.f32.mrb[0].mxu0
  %v2724 = vadd.f32 %v2681, %v2723
  %2725 = vdwg.mxu0
  %2726 = vmatprep.subr.bf16.mxu0 %v2257
  %2727 = vmatpush1.bf16.msra.mxu0 %v2256
  %2728 = vmatprep.subr.bf16.mxu0 %v2261
  %2729 = vmatpush1.bf16.msra.mxu0 %v2260
  %2730 = vmatprep.subr.bf16.mxu0 %v2265
  %2731 = vmatpush1.bf16.msra.mxu0 %v2264
  %2732 = vmatprep.subr.bf16.mxu0 %v2269
  %2733 = vmatpush1.bf16.msra.mxu0 %v2268
  %2734 = vmatprep.subr.bf16.mxu0 %v2273
  %2735 = vmatpush1.bf16.msra.mxu0 %v2272
  %2736 = vmatprep.subr.bf16.mxu0 %v2277
  %2737 = vmatpush1.bf16.msra.mxu0 %v2276
  %2738 = vmatprep.subr.bf16.mxu0 %v2281
  %2739 = vmatpush1.bf16.msra.mxu0 %v2280
  %2740 = vmatprep.subr.bf16.mxu0 %v2285
  %2741 = vmatpush1.bf16.msra.mxu0 %v2284
  %2742 = vmatprep.subr.bf16.mxu0 %v2289
  %2743 = vmatpush1.bf16.msra.mxu0 %v2288
  %2744 = vmatprep.subr.bf16.mxu0 %v2293
  %2745 = vmatpush1.bf16.msra.mxu0 %v2292
  %2746 = vmatprep.subr.bf16.mxu0 %v2297
  %2747 = vmatpush1.bf16.msra.mxu0 %v2296
  %2748 = vmatprep.subr.bf16.mxu0 %v2301
  %2749 = vmatpush1.bf16.msra.mxu0 %v2300
  %2750 = vmatprep.subr.bf16.mxu0 %v2305
  %2751 = vmatpush1.bf16.msra.mxu0 %v2304
  %2752 = vmatprep.subr.bf16.mxu0 %v2309
  %2753 = vmatpush1.bf16.msra.mxu0 %v2308
  %2754 = vmatprep.subr.bf16.mxu0 %v2313
  %2755 = vmatpush1.bf16.msra.mxu0 %v2312
  %2756 = vmatprep.subr.bf16.mxu0 %v2317
  %2757 = vmatpush1.bf16.msra.mxu0 %v2316
  %2758 = vmatprep.mubr.bf16.mxu0 %v1079
  %2759 = vmatmul.mubr.bf16.gmra.mrb[0].mxu0 %v1078
  %v2760 = vpop.f32.mrb[0].mxu0
  %v2761 = vadd.f32 %v2718, %v2760
  %v2762 = vpop.f32.mrb[0].mxu0
  %v2763 = vadd.f32 %v2720, %v2762
  %v2764 = vpop.f32.mrb[0].mxu0
  %v2765 = vadd.f32 %v2722, %v2764
  %v2766 = vpop.f32.mrb[0].mxu0
  %v2767 = vadd.f32 %v2724, %v2766
  %2768 = vdwg.mxu0
  %2769 = vmatprep.subr.bf16.mxu0 %v2321
  %2770 = vmatpush1.bf16.msra.mxu0 %v2320
  %2771 = vmatprep.subr.bf16.mxu0 %v2325
  %2772 = vmatpush1.bf16.msra.mxu0 %v2324
  %2773 = vmatprep.subr.bf16.mxu0 %v2329
  %2774 = vmatpush1.bf16.msra.mxu0 %v2328
  %2775 = vmatprep.subr.bf16.mxu0 %v2333
  %2776 = vmatpush1.bf16.msra.mxu0 %v2332
  %2777 = vmatprep.subr.bf16.mxu0 %v2337
  %2778 = vmatpush1.bf16.msra.mxu0 %v2336
  %2779 = vmatprep.subr.bf16.mxu0 %v2341
  %2780 = vmatpush1.bf16.msra.mxu0 %v2340
  %2781 = vmatprep.subr.bf16.mxu0 %v2345
  %2782 = vmatpush1.bf16.msra.mxu0 %v2344
  %2783 = vmatprep.subr.bf16.mxu0 %v2349
  %2784 = vmatpush1.bf16.msra.mxu0 %v2348
  %2785 = vmatprep.subr.bf16.mxu0 %v2353
  %2786 = vmatpush1.bf16.msra.mxu0 %v2352
  %2787 = vmatprep.subr.bf16.mxu0 %v2357
  %2788 = vmatpush1.bf16.msra.mxu0 %v2356
  %2789 = vmatprep.subr.bf16.mxu0 %v2361
  %2790 = vmatpush1.bf16.msra.mxu0 %v2360
  %2791 = vmatprep.subr.bf16.mxu0 %v2365
  %2792 = vmatpush1.bf16.msra.mxu0 %v2364
  %2793 = vmatprep.subr.bf16.mxu0 %v2369
  %2794 = vmatpush1.bf16.msra.mxu0 %v2368
  %2795 = vmatprep.subr.bf16.mxu0 %v2373
  %2796 = vmatpush1.bf16.msra.mxu0 %v2372
  %2797 = vmatprep.subr.bf16.mxu0 %v2377
  %2798 = vmatpush1.bf16.msra.mxu0 %v2376
  %2799 = vmatprep.subr.bf16.mxu0 %v2381
  %2800 = vmatpush1.bf16.msra.mxu0 %v2380
  %2801 = vmatprep.mubr.bf16.mxu0 %v1081
  %2802 = vmatmul.mubr.bf16.gmra.mrb[0].mxu0 %v1080
  %v2803 = vpop.f32.mrb[0].mxu0
  %v2804 = vadd.f32 %v2761, %v2803
  %v2805 = vpop.f32.mrb[0].mxu0
  %v2806 = vadd.f32 %v2763, %v2805
  %v2807 = vpop.f32.mrb[0].mxu0
  %v2808 = vadd.f32 %v2765, %v2807
  %v2809 = vpop.f32.mrb[0].mxu0
  %v2810 = vadd.f32 %v2767, %v2809
  %2811 = vdwg.mxu0
  %2812 = vmatprep.subr.bf16.mxu0 %v2131
  %2813 = vmatpush1.bf16.msra.mxu0 %v2130
  %2814 = vmatprep.subr.bf16.mxu0 %v2135
  %2815 = vmatpush1.bf16.msra.mxu0 %v2134
  %2816 = vmatprep.subr.bf16.mxu0 %v2139
  %2817 = vmatpush1.bf16.msra.mxu0 %v2138
  %2818 = vmatprep.subr.bf16.mxu0 %v2143
  %2819 = vmatpush1.bf16.msra.mxu0 %v2142
  %2820 = vmatprep.subr.bf16.mxu0 %v2147
  %2821 = vmatpush1.bf16.msra.mxu0 %v2146
  %2822 = vmatprep.subr.bf16.mxu0 %v2151
  %2823 = vmatpush1.bf16.msra.mxu0 %v2150
  %2824 = vmatprep.subr.bf16.mxu0 %v2155
  %2825 = vmatpush1.bf16.msra.mxu0 %v2154
  %2826 = vmatprep.subr.bf16.mxu0 %v2159
  %2827 = vmatpush1.bf16.msra.mxu0 %v2158
  %2828 = vmatprep.subr.bf16.mxu0 %v2163
  %2829 = vmatpush1.bf16.msra.mxu0 %v2162
  %2830 = vmatprep.subr.bf16.mxu0 %v2167
  %2831 = vmatpush1.bf16.msra.mxu0 %v2166
  %2832 = vmatprep.subr.bf16.mxu0 %v2171
  %2833 = vmatpush1.bf16.msra.mxu0 %v2170
  %2834 = vmatprep.subr.bf16.mxu0 %v2175
  %2835 = vmatpush1.bf16.msra.mxu0 %v2174
  %2836 = vmatprep.subr.bf16.mxu0 %v2179
  %2837 = vmatpush1.bf16.msra.mxu0 %v2178
  %2838 = vmatprep.subr.bf16.mxu0 %v2183
  %2839 = vmatpush1.bf16.msra.mxu0 %v2182
  %2840 = vmatprep.subr.bf16.mxu0 %v2187
  %2841 = vmatpush1.bf16.msra.mxu0 %v2186
  %2842 = vmatprep.subr.bf16.mxu0 %v2191
  %2843 = vmatpush1.bf16.msra.mxu0 %v2190
  %2844 = vmatprep.mubr.bf16.mxu0 %v1075
  %2845 = vmatmul.mubr.bf16.gmra.mrb[0].mxu0 %v1074
  %v2846 = vpop.f32.mrb[0].mxu0
  %v2847 = vadd.f32 %v1351, %v2846
  %v2848 = vpop.f32.mrb[0].mxu0
  %v2849 = vadd.f32 %v1355, %v2848
  %v2850 = vpop.f32.mrb[0].mxu0
  %v2851 = vadd.f32 %v1351, %v2850
  %v2852 = vpop.f32.mrb[0].mxu0
  %v2853 = vadd.f32 %v1355, %v2852
  %2854 = vdwg.mxu0
  %2855 = vmatprep.subr.bf16.mxu0 %v2195
  %2856 = vmatpush1.bf16.msra.mxu0 %v2194
  %2857 = vmatprep.subr.bf16.mxu0 %v2199
  %2858 = vmatpush1.bf16.msra.mxu0 %v2198
  %2859 = vmatprep.subr.bf16.mxu0 %v2203
  %2860 = vmatpush1.bf16.msra.mxu0 %v2202
  %2861 = vmatprep.subr.bf16.mxu0 %v2207
  %2862 = vmatpush1.bf16.msra.mxu0 %v2206
  %2863 = vmatprep.subr.bf16.mxu0 %v2211
  %2864 = vmatpush1.bf16.msra.mxu0 %v2210
  %2865 = vmatprep.subr.bf16.mxu0 %v2215
  %2866 = vmatpush1.bf16.msra.mxu0 %v2214
  %2867 = vmatprep.subr.bf16.mxu0 %v2219
  %2868 = vmatpush1.bf16.msra.mxu0 %v2218
  %2869 = vmatprep.subr.bf16.mxu0 %v2223
  %2870 = vmatpush1.bf16.msra.mxu0 %v2222
  %2871 = vmatprep.subr.bf16.mxu0 %v2227
  %2872 = vmatpush1.bf16.msra.mxu0 %v2226
  %2873 = vmatprep.subr.bf16.mxu0 %v2231
  %2874 = vmatpush1.bf16.msra.mxu0 %v2230
  %2875 = vmatprep.subr.bf16.mxu0 %v2235
  %2876 = vmatpush1.bf16.msra.mxu0 %v2234
  %2877 = vmatprep.subr.bf16.mxu0 %v2239
  %2878 = vmatpush1.bf16.msra.mxu0 %v2238
  %2879 = vmatprep.subr.bf16.mxu0 %v2243
  %2880 = vmatpush1.bf16.msra.mxu0 %v2242
  %2881 = vmatprep.subr.bf16.mxu0 %v2247
  %2882 = vmatpush1.bf16.msra.mxu0 %v2246
  %2883 = vmatprep.subr.bf16.mxu0 %v2251
  %2884 = vmatpush1.bf16.msra.mxu0 %v2250
  %2885 = vmatprep.subr.bf16.mxu0 %v2255
  %2886 = vmatpush1.bf16.msra.mxu0 %v2254
  %2887 = vmatprep.mubr.bf16.mxu0 %v1077
  %2888 = vmatmul.mubr.bf16.gmra.mrb[0].mxu0 %v1076
  %v2889 = vpop.f32.mrb[0].mxu0
  %v2890 = vadd.f32 %v2847, %v2889
  %v2891 = vpop.f32.mrb[0].mxu0
  %v2892 = vadd.f32 %v2849, %v2891
  %v2893 = vpop.f32.mrb[0].mxu0
  %v2894 = vadd.f32 %v2851, %v2893
  %v2895 = vpop.f32.mrb[0].mxu0
  %v2896 = vadd.f32 %v2853, %v2895
  %2897 = vdwg.mxu0
  %2898 = vmatprep.subr.bf16.mxu0 %v2259
  %2899 = vmatpush1.bf16.msra.mxu0 %v2258
  %2900 = vmatprep.subr.bf16.mxu0 %v2263
  %2901 = vmatpush1.bf16.msra.mxu0 %v2262
  %2902 = vmatprep.subr.bf16.mxu0 %v2267
  %2903 = vmatpush1.bf16.msra.mxu0 %v2266
  %2904 = vmatprep.subr.bf16.mxu0 %v2271
  %2905 = vmatpush1.bf16.msra.mxu0 %v2270
  %2906 = vmatprep.subr.bf16.mxu0 %v2275
  %2907 = vmatpush1.bf16.msra.mxu0 %v2274
  %2908 = vmatprep.subr.bf16.mxu0 %v2279
  %2909 = vmatpush1.bf16.msra.mxu0 %v2278
  %2910 = vmatprep.subr.bf16.mxu0 %v2283
  %2911 = vmatpush1.bf16.msra.mxu0 %v2282
  %2912 = vmatprep.subr.bf16.mxu0 %v2287
  %2913 = vmatpush1.bf16.msra.mxu0 %v2286
  %2914 = vmatprep.subr.bf16.mxu0 %v2291
  %2915 = vmatpush1.bf16.msra.mxu0 %v2290
  %2916 = vmatprep.subr.bf16.mxu0 %v2295
  %2917 = vmatpush1.bf16.msra.mxu0 %v2294
  %2918 = vmatprep.subr.bf16.mxu0 %v2299
  %2919 = vmatpush1.bf16.msra.mxu0 %v2298
  %2920 = vmatprep.subr.bf16.mxu0 %v2303
  %2921 = vmatpush1.bf16.msra.mxu0 %v2302
  %2922 = vmatprep.subr.bf16.mxu0 %v2307
  %2923 = vmatpush1.bf16.msra.mxu0 %v2306
  %2924 = vmatprep.subr.bf16.mxu0 %v2311
  %2925 = vmatpush1.bf16.msra.mxu0 %v2310
  %2926 = vmatprep.subr.bf16.mxu0 %v2315
  %2927 = vmatpush1.bf16.msra.mxu0 %v2314
  %2928 = vmatprep.subr.bf16.mxu0 %v2319
  %2929 = vmatpush1.bf16.msra.mxu0 %v2318
  %2930 = vmatprep.mubr.bf16.mxu0 %v1079
  %2931 = vmatmul.mubr.bf16.gmra.mrb[0].mxu0 %v1078
  %v2932 = vpop.f32.mrb[0].mxu0
  %v2933 = vadd.f32 %v2890, %v2932
  %v2934 = vpop.f32.mrb[0].mxu0
  %v2935 = vadd.f32 %v2892, %v2934
  %v2936 = vpop.f32.mrb[0].mxu0
  %v2937 = vadd.f32 %v2894, %v2936
  %v2938 = vpop.f32.mrb[0].mxu0
  %v2939 = vadd.f32 %v2896, %v2938
  %2940 = vdwg.mxu0
  %2941 = vmatprep.subr.bf16.mxu0 %v2323
  %2942 = vmatpush1.bf16.msra.mxu0 %v2322
  %2943 = vmatprep.subr.bf16.mxu0 %v2327
  %2944 = vmatpush1.bf16.msra.mxu0 %v2326
  %2945 = vmatprep.subr.bf16.mxu0 %v2331
  %2946 = vmatpush1.bf16.msra.mxu0 %v2330
  %2947 = vmatprep.subr.bf16.mxu0 %v2335
  %2948 = vmatpush1.bf16.msra.mxu0 %v2334
  %2949 = vmatprep.subr.bf16.mxu0 %v2339
  %2950 = vmatpush1.bf16.msra.mxu0 %v2338
  %2951 = vmatprep.subr.bf16.mxu0 %v2343
  %2952 = vmatpush1.bf16.msra.mxu0 %v2342
  %2953 = vmatprep.subr.bf16.mxu0 %v2347
  %2954 = vmatpush1.bf16.msra.mxu0 %v2346
  %2955 = vmatprep.subr.bf16.mxu0 %v2351
  %2956 = vmatpush1.bf16.msra.mxu0 %v2350
  %2957 = vmatprep.subr.bf16.mxu0 %v2355
  %2958 = vmatpush1.bf16.msra.mxu0 %v2354
  %2959 = vmatprep.subr.bf16.mxu0 %v2359
  %2960 = vmatpush1.bf16.msra.mxu0 %v2358
  %2961 = vmatprep.subr.bf16.mxu0 %v2363
  %2962 = vmatpush1.bf16.msra.mxu0 %v2362
  %2963 = vmatprep.subr.bf16.mxu0 %v2367
  %2964 = vmatpush1.bf16.msra.mxu0 %v2366
  %2965 = vmatprep.subr.bf16.mxu0 %v2371
  %2966 = vmatpush1.bf16.msra.mxu0 %v2370
  %2967 = vmatprep.subr.bf16.mxu0 %v2375
  %2968 = vmatpush1.bf16.msra.mxu0 %v2374
  %2969 = vmatprep.subr.bf16.mxu0 %v2379
  %2970 = vmatpush1.bf16.msra.mxu0 %v2378
  %2971 = vmatprep.subr.bf16.mxu0 %v2383
  %2972 = vmatpush1.bf16.msra.mxu0 %v2382
  %2973 = vmatprep.mubr.bf16.mxu0 %v1081
  %2974 = vmatmul.mubr.bf16.gmra.mrb[0].mxu0 %v1080
  %v2975 = vpop.f32.mrb[0].mxu0
  %v2976 = vadd.f32 %v2933, %v2975
  %v2977 = vpop.f32.mrb[0].mxu0
  %v2978 = vadd.f32 %v2935, %v2977
  %v2979 = vpop.f32.mrb[0].mxu0
  %v2980 = vadd.f32 %v2937, %v2979
  %v2981 = vpop.f32.mrb[0].mxu0
  %v2982 = vadd.f32 %v2939, %v2981
  %2983 = vdwg.mxu0
  %v2984 = vmul.f32 %v2804, 0.2
  %v2985 = vmul.f32 %v2806, 0.2
  %v2986 = vmul.f32 %v2976, 0.2
  %v2987 = vmul.f32 %v2978, 0.2
  %v2988 = vmul.f32 %v2808, 0.2
  %v2989 = vmul.f32 %v2810, 0.2
  %v2990 = vmul.f32 %v2980, 0.2
  %v2991 = vmul.f32 %v2982, 0.2
  %v2992 = vmax.f32 %v2804, %v2984
  %v2993 = vmax.f32 %v2806, %v2985
  %v2994 = vmax.f32 %v2976, %v2986
  %v2995 = vmax.f32 %v2978, %v2987
  %v2996 = vmax.f32 %v2808, %v2988
  %v2997 = vmax.f32 %v2810, %v2989
  %v2998 = vmax.f32 %v2980, %v2990
  %v2999 = vmax.f32 %v2982, %v2991
  %v3000 = vld [vmem:[%s5] sm:$0xf]
  %v3002 = vlaneseq
  %v3003 = vshrl.u32 %v3002, 7
  %v3004 = vsub.s32 0, %v3003
  %v3005 = vrot.slane %v3000, %v3004
  %v3006 = vlaneseq
  %v3007 = vshrl.u32 %v3006, 7
  %v3008 = vsub.s32 1, %v3007
  %v3009 = vrot.slane %v3000, %v3008
  %v3010 = vlaneseq
  %v3011 = vshrl.u32 %v3010, 7
  %v3012 = vsub.s32 2, %v3011
  %v3013 = vrot.slane %v3000, %v3012
  %v3014 = vlaneseq
  %v3015 = vshrl.u32 %v3014, 7
  %v3016 = vsub.s32 3, %v3015
  %v3017 = vrot.slane %v3000, %v3016
  %v3022 = vadd.f32 %v2992, %v3005
  %v3023 = vadd.f32 %v2993, %v3009
  %v3024 = vadd.f32 %v2994, %v3013
  %v3025 = vadd.f32 %v2995, %v3017
  %v3026 = vadd.f32 %v2996, %v3005
  %v3027 = vadd.f32 %v2997, %v3009
  %v3028 = vadd.f32 %v2998, %v3013
  %v3029 = vadd.f32 %v2999, %v3017
  %v3030 = vpack.c.bf16 %v3026, %v3022
  %v3031 = vpack.c.bf16 %v3027, %v3023
  %v3032 = vpack.c.bf16 %v3028, %v3024
  %v3033 = vpack.c.bf16 %v3029, %v3025
  %v3034 = vld [vmem:[%s6] sm:$0xff]
  %v3035 = vld [vmem:[%s6 + $0x8] sm:$0xff]
  %v3036 = vld [vmem:[%s6 + $0x10] sm:$0xff]
  %v3037 = vld [vmem:[%s6 + $0x18] sm:$0xff]
  %v3038 = vld [vmem:[%s6 + $0x20] sm:$0xff]
  %v3039 = vld [vmem:[%s6 + $0x28] sm:$0xff]
  %v3040 = vld [vmem:[%s6 + $0x30] sm:$0xff]
  %v3041 = vld [vmem:[%s6 + $0x38] sm:$0xff]
  %v3042 = vld [vmem:[%s6 + $0x40] sm:$0xff]
  %v3043 = vld [vmem:[%s6 + $0x48] sm:$0xff]
  %v3044 = vld [vmem:[%s6 + $0x50] sm:$0xff]
  %v3045 = vld [vmem:[%s6 + $0x58] sm:$0xff]
  %v3046 = vld [vmem:[%s6 + $0x60] sm:$0xff]
  %v3047 = vld [vmem:[%s6 + $0x68] sm:$0xff]
  %v3048 = vld [vmem:[%s6 + $0x70] sm:$0xff]
  %v3049 = vld [vmem:[%s6 + $0x78] sm:$0xff]
  %v3050 = vld [vmem:[%s6 + $0x80] sm:$0xff]
  %v3051 = vld [vmem:[%s6 + $0x88] sm:$0xff]
  %v3052 = vld [vmem:[%s6 + $0x90] sm:$0xff]
  %v3053 = vld [vmem:[%s6 + $0x98] sm:$0xff]
  %v3054 = vld [vmem:[%s6 + $0xa0] sm:$0xff]
  %v3055 = vld [vmem:[%s6 + $0xa8] sm:$0xff]
  %v3056 = vld [vmem:[%s6 + $0xb0] sm:$0xff]
  %v3057 = vld [vmem:[%s6 + $0xb8] sm:$0xff]
  %v3058 = vld [vmem:[%s6 + $0xc0] sm:$0xff]
  %v3059 = vld [vmem:[%s6 + $0xc8] sm:$0xff]
  %v3060 = vld [vmem:[%s6 + $0xd0] sm:$0xff]
  %v3061 = vld [vmem:[%s6 + $0xd8] sm:$0xff]
  %v3062 = vld [vmem:[%s6 + $0xe0] sm:$0xff]
  %v3063 = vld [vmem:[%s6 + $0xe8] sm:$0xff]
  %v3064 = vld [vmem:[%s6 + $0xf0] sm:$0xff]
  %v3065 = vld [vmem:[%s6 + $0xf8] sm:$0xff]
  %v3066 = vld [vmem:[%s6 + $0x100] sm:$0xff]
  %v3067 = vld [vmem:[%s6 + $0x108] sm:$0xff]
  %v3068 = vld [vmem:[%s6 + $0x110] sm:$0xff]
  %v3069 = vld [vmem:[%s6 + $0x118] sm:$0xff]
  %v3070 = vld [vmem:[%s6 + $0x120] sm:$0xff]
  %v3071 = vld [vmem:[%s6 + $0x128] sm:$0xff]
  %v3072 = vld [vmem:[%s6 + $0x130] sm:$0xff]
  %v3073 = vld [vmem:[%s6 + $0x138] sm:$0xff]
  %v3074 = vld [vmem:[%s6 + $0x140] sm:$0xff]
  %v3075 = vld [vmem:[%s6 + $0x148] sm:$0xff]
  %v3076 = vld [vmem:[%s6 + $0x150] sm:$0xff]
  %v3077 = vld [vmem:[%s6 + $0x158] sm:$0xff]
  %v3078 = vld [vmem:[%s6 + $0x160] sm:$0xff]
  %v3079 = vld [vmem:[%s6 + $0x168] sm:$0xff]
  %v3080 = vld [vmem:[%s6 + $0x170] sm:$0xff]
  %v3081 = vld [vmem:[%s6 + $0x178] sm:$0xff]
  %v3082 = vld [vmem:[%s6 + $0x180] sm:$0xff]
  %v3083 = vld [vmem:[%s6 + $0x188] sm:$0xff]
  %v3084 = vld [vmem:[%s6 + $0x190] sm:$0xff]
  %v3085 = vld [vmem:[%s6 + $0x198] sm:$0xff]
  %v3086 = vld [vmem:[%s6 + $0x1a0] sm:$0xff]
  %v3087 = vld [vmem:[%s6 + $0x1a8] sm:$0xff]
  %v3088 = vld [vmem:[%s6 + $0x1b0] sm:$0xff]
  %v3089 = vld [vmem:[%s6 + $0x1b8] sm:$0xff]
  %v3090 = vld [vmem:[%s6 + $0x1c0] sm:$0xff]
  %v3091 = vld [vmem:[%s6 + $0x1c8] sm:$0xff]
  %v3092 = vld [vmem:[%s6 + $0x1d0] sm:$0xff]
  %v3093 = vld [vmem:[%s6 + $0x1d8] sm:$0xff]
  %v3094 = vld [vmem:[%s6 + $0x1e0] sm:$0xff]
  %v3095 = vld [vmem:[%s6 + $0x1e8] sm:$0xff]
  %v3096 = vld [vmem:[%s6 + $0x1f0] sm:$0xff]
  %v3097 = vld [vmem:[%s6 + $0x1f8] sm:$0xff]
  %v3098 = vld [vmem:[%s7] sm:$0x3]
  %v3100 = vlaneseq
  %v3101 = vshrl.u32 %v3100, 7
  %v3102 = vsub.s32 0, %v3101
  %v3103 = vrot.slane %v3098, %v3102
  %v3104 = vlaneseq
  %v3105 = vshrl.u32 %v3104, 7
  %v3106 = vsub.s32 1, %v3105
  %v3107 = vrot.slane %v3098, %v3106
  %v3174 = vunpack.c.l.b16 %v3034
  %v3175 = vunpack.c.h.b16 %v3034
  %v3176 = vunpack.c.l.b16 %v3035
  %v3177 = vunpack.c.h.b16 %v3035
  %v3178 = vunpack.c.l.b16 %v3036
  %v3179 = vunpack.c.h.b16 %v3036
  %v3180 = vunpack.c.l.b16 %v3037
  %v3181 = vunpack.c.h.b16 %v3037
  %v3182 = vunpack.c.l.b16 %v3038
  %v3183 = vunpack.c.h.b16 %v3038
  %v3184 = vunpack.c.l.b16 %v3039
  %v3185 = vunpack.c.h.b16 %v3039
  %v3186 = vunpack.c.l.b16 %v3040
  %v3187 = vunpack.c.h.b16 %v3040
  %v3188 = vunpack.c.l.b16 %v3041
  %v3189 = vunpack.c.h.b16 %v3041
  %v3190 = vunpack.c.l.b16 %v3042
  %v3191 = vunpack.c.h.b16 %v3042
  %v3192 = vunpack.c.l.b16 %v3043
  %v3193 = vunpack.c.h.b16 %v3043
  %v3194 = vunpack.c.l.b16 %v3044
  %v3195 = vunpack.c.h.b16 %v3044
  %v3196 = vunpack.c.l.b16 %v3045
  %v3197 = vunpack.c.h.b16 %v3045
  %v3198 = vunpack.c.l.b16 %v3046
  %v3199 = vunpack.c.h.b16 %v3046
  %v3200 = vunpack.c.l.b16 %v3047
  %v3201 = vunpack.c.h.b16 %v3047
  %v3202 = vunpack.c.l.b16 %v3048
  %v3203 = vunpack.c.h.b16 %v3048
  %v3204 = vunpack.c.l.b16 %v3049
  %v3205 = vunpack.c.h.b16 %v3049
  %v3206 = vunpack.c.l.b16 %v3050
  %v3207 = vunpack.c.h.b16 %v3050
  %v3208 = vunpack.c.l.b16 %v3051
  %v3209 = vunpack.c.h.b16 %v3051
  %v3210 = vunpack.c.l.b16 %v3052
  %v3211 = vunpack.c.h.b16 %v3052
  %v3212 = vunpack.c.l.b16 %v3053
  %v3213 = vunpack.c.h.b16 %v3053
  %v3214 = vunpack.c.l.b16 %v3054
  %v3215 = vunpack.c.h.b16 %v3054
  %v3216 = vunpack.c.l.b16 %v3055
  %v3217 = vunpack.c.h.b16 %v3055
  %v3218 = vunpack.c.l.b16 %v3056
  %v3219 = vunpack.c.h.b16 %v3056
  %v3220 = vunpack.c.l.b16 %v3057
  %v3221 = vunpack.c.h.b16 %v3057
  %v3222 = vunpack.c.l.b16 %v3058
  %v3223 = vunpack.c.h.b16 %v3058
  %v3224 = vunpack.c.l.b16 %v3059
  %v3225 = vunpack.c.h.b16 %v3059
  %v3226 = vunpack.c.l.b16 %v3060
  %v3227 = vunpack.c.h.b16 %v3060
  %v3228 = vunpack.c.l.b16 %v3061
  %v3229 = vunpack.c.h.b16 %v3061
  %v3230 = vunpack.c.l.b16 %v3062
  %v3231 = vunpack.c.h.b16 %v3062
  %v3232 = vunpack.c.l.b16 %v3063
  %v3233 = vunpack.c.h.b16 %v3063
  %v3234 = vunpack.c.l.b16 %v3064
  %v3235 = vunpack.c.h.b16 %v3064
  %v3236 = vunpack.c.l.b16 %v3065
  %v3237 = vunpack.c.h.b16 %v3065
  %v3238 = vunpack.c.l.b16 %v3066
  %v3239 = vunpack.c.h.b16 %v3066
  %v3240 = vunpack.c.l.b16 %v3067
  %v3241 = vunpack.c.h.b16 %v3067
  %v3242 = vunpack.c.l.b16 %v3068
  %v3243 = vunpack.c.h.b16 %v3068
  %v3244 = vunpack.c.l.b16 %v3069
  %v3245 = vunpack.c.h.b16 %v3069
  %v3246 = vunpack.c.l.b16 %v3070
  %v3247 = vunpack.c.h.b16 %v3070
  %v3248 = vunpack.c.l.b16 %v3071
  %v3249 = vunpack.c.h.b16 %v3071
  %v3250 = vunpack.c.l.b16 %v3072
  %v3251 = vunpack.c.h.b16 %v3072
  %v3252 = vunpack.c.l.b16 %v3073
  %v3253 = vunpack.c.h.b16 %v3073
  %v3254 = vunpack.c.l.b16 %v3074
  %v3255 = vunpack.c.h.b16 %v3074
  %v3256 = vunpack.c.l.b16 %v3075
  %v3257 = vunpack.c.h.b16 %v3075
  %v3258 = vunpack.c.l.b16 %v3076
  %v3259 = vunpack.c.h.b16 %v3076
  %v3260 = vunpack.c.l.b16 %v3077
  %v3261 = vunpack.c.h.b16 %v3077
  %v3262 = vunpack.c.l.b16 %v3078
  %v3263 = vunpack.c.h.b16 %v3078
  %v3264 = vunpack.c.l.b16 %v3079
  %v3265 = vunpack.c.h.b16 %v3079
  %v3266 = vunpack.c.l.b16 %v3080
  %v3267 = vunpack.c.h.b16 %v3080
  %v3268 = vunpack.c.l.b16 %v3081
  %v3269 = vunpack.c.h.b16 %v3081
  %v3270 = vunpack.c.l.b16 %v3082
  %v3271 = vunpack.c.h.b16 %v3082
  %v3272 = vunpack.c.l.b16 %v3083
  %v3273 = vunpack.c.h.b16 %v3083
  %v3274 = vunpack.c.l.b16 %v3084
  %v3275 = vunpack.c.h.b16 %v3084
  %v3276 = vunpack.c.l.b16 %v3085
  %v3277 = vunpack.c.h.b16 %v3085
  %v3278 = vunpack.c.l.b16 %v3086
  %v3279 = vunpack.c.h.b16 %v3086
  %v3280 = vunpack.c.l.b16 %v3087
  %v3281 = vunpack.c.h.b16 %v3087
  %v3282 = vunpack.c.l.b16 %v3088
  %v3283 = vunpack.c.h.b16 %v3088
  %v3284 = vunpack.c.l.b16 %v3089
  %v3285 = vunpack.c.h.b16 %v3089
  %v3286 = vunpack.c.l.b16 %v3090
  %v3287 = vunpack.c.h.b16 %v3090
  %v3288 = vunpack.c.l.b16 %v3091
  %v3289 = vunpack.c.h.b16 %v3091
  %v3290 = vunpack.c.l.b16 %v3092
  %v3291 = vunpack.c.h.b16 %v3092
  %v3292 = vunpack.c.l.b16 %v3093
  %v3293 = vunpack.c.h.b16 %v3093
  %v3294 = vunpack.c.l.b16 %v3094
  %v3295 = vunpack.c.h.b16 %v3094
  %v3296 = vunpack.c.l.b16 %v3095
  %v3297 = vunpack.c.h.b16 %v3095
  %v3298 = vunpack.c.l.b16 %v3096
  %v3299 = vunpack.c.h.b16 %v3096
  %v3300 = vunpack.c.l.b16 %v3097
  %v3301 = vunpack.c.h.b16 %v3097
  %v3302 = vpack.c.b16 %v3176, %v3174
  %v3303 = vpack.c.b16 %v3177, %v3175
  %v3304 = vpack.c.b16 %v3180, %v3178
  %v3305 = vpack.c.b16 %v3181, %v3179
  %v3306 = vpack.c.b16 %v3184, %v3182
  %v3307 = vpack.c.b16 %v3185, %v3183
  %v3308 = vpack.c.b16 %v3188, %v3186
  %v3309 = vpack.c.b16 %v3189, %v3187
  %v3310 = vpack.c.b16 %v3192, %v3190
  %v3311 = vpack.c.b16 %v3193, %v3191
  %v3312 = vpack.c.b16 %v3196, %v3194
  %v3313 = vpack.c.b16 %v3197, %v3195
  %v3314 = vpack.c.b16 %v3200, %v3198
  %v3315 = vpack.c.b16 %v3201, %v3199
  %v3316 = vpack.c.b16 %v3204, %v3202
  %v3317 = vpack.c.b16 %v3205, %v3203
  %v3318 = vpack.c.b16 %v3208, %v3206
  %v3319 = vpack.c.b16 %v3209, %v3207
  %v3320 = vpack.c.b16 %v3212, %v3210
  %v3321 = vpack.c.b16 %v3213, %v3211
  %v3322 = vpack.c.b16 %v3216, %v3214
  %v3323 = vpack.c.b16 %v3217, %v3215
  %v3324 = vpack.c.b16 %v3220, %v3218
  %v3325 = vpack.c.b16 %v3221, %v3219
  %v3326 = vpack.c.b16 %v3224, %v3222
  %v3327 = vpack.c.b16 %v3225, %v3223
  %v3328 = vpack.c.b16 %v3228, %v3226
  %v3329 = vpack.c.b16 %v3229, %v3227
  %v3330 = vpack.c.b16 %v3232, %v3230
  %v3331 = vpack.c.b16 %v3233, %v3231
  %v3332 = vpack.c.b16 %v3236, %v3234
  %v3333 = vpack.c.b16 %v3237, %v3235
  %v3334 = vpack.c.b16 %v3240, %v3238
  %v3335 = vpack.c.b16 %v3241, %v3239
  %v3336 = vpack.c.b16 %v3244, %v3242
  %v3337 = vpack.c.b16 %v3245, %v3243
  %v3338 = vpack.c.b16 %v3248, %v3246
  %v3339 = vpack.c.b16 %v3249, %v3247
  %v3340 = vpack.c.b16 %v3252, %v3250
  %v3341 = vpack.c.b16 %v3253, %v3251
  %v3342 = vpack.c.b16 %v3256, %v3254
  %v3343 = vpack.c.b16 %v3257, %v3255
  %v3344 = vpack.c.b16 %v3260, %v3258
  %v3345 = vpack.c.b16 %v3261, %v3259
  %v3346 = vpack.c.b16 %v3264, %v3262
  %v3347 = vpack.c.b16 %v3265, %v3263
  %v3348 = vpack.c.b16 %v3268, %v3266
  %v3349 = vpack.c.b16 %v3269, %v3267
  %v3350 = vpack.c.b16 %v3272, %v3270
  %v3351 = vpack.c.b16 %v3273, %v3271
  %v3352 = vpack.c.b16 %v3276, %v3274
  %v3353 = vpack.c.b16 %v3277, %v3275
  %v3354 = vpack.c.b16 %v3280, %v3278
  %v3355 = vpack.c.b16 %v3281, %v3279
  %v3356 = vpack.c.b16 %v3284, %v3282
  %v3357 = vpack.c.b16 %v3285, %v3283
  %v3358 = vpack.c.b16 %v3288, %v3286
  %v3359 = vpack.c.b16 %v3289, %v3287
  %v3360 = vpack.c.b16 %v3292, %v3290
  %v3361 = vpack.c.b16 %v3293, %v3291
  %v3362 = vpack.c.b16 %v3296, %v3294
  %v3363 = vpack.c.b16 %v3297, %v3295
  %v3364 = vpack.c.b16 %v3300, %v3298
  %v3365 = vpack.c.b16 %v3301, %v3299
  %3430 = vmatprep.subr.bf16.mxu0 %v3303
  %3431 = vmatpush1.bf16.msra.mxu0 %v3302
  %3432 = vmatprep.subr.bf16.mxu0 %v3305
  %3433 = vmatpush1.bf16.msra.mxu0 %v3304
  %3434 = vmatprep.subr.bf16.mxu0 %v3307
  %3435 = vmatpush1.bf16.msra.mxu0 %v3306
  %3436 = vmatprep.subr.bf16.mxu0 %v3309
  %3437 = vmatpush1.bf16.msra.mxu0 %v3308
  %3438 = vmatprep.subr.bf16.mxu0 %v3311
  %3439 = vmatpush1.bf16.msra.mxu0 %v3310
  %3440 = vmatprep.subr.bf16.mxu0 %v3313
  %3441 = vmatpush1.bf16.msra.mxu0 %v3312
  %3442 = vmatprep.subr.bf16.mxu0 %v3315
  %3443 = vmatpush1.bf16.msra.mxu0 %v3314
  %3444 = vmatprep.subr.bf16.mxu0 %v3317
  %3445 = vmatpush1.bf16.msra.mxu0 %v3316
  %3446 = vmatprep.subr.bf16.mxu0 %v3319
  %3447 = vmatpush1.bf16.msra.mxu0 %v3318
  %3448 = vmatprep.subr.bf16.mxu0 %v3321
  %3449 = vmatpush1.bf16.msra.mxu0 %v3320
  %3450 = vmatprep.subr.bf16.mxu0 %v3323
  %3451 = vmatpush1.bf16.msra.mxu0 %v3322
  %3452 = vmatprep.subr.bf16.mxu0 %v3325
  %3453 = vmatpush1.bf16.msra.mxu0 %v3324
  %3454 = vmatprep.subr.bf16.mxu0 %v3327
  %3455 = vmatpush1.bf16.msra.mxu0 %v3326
  %3456 = vmatprep.subr.bf16.mxu0 %v3329
  %3457 = vmatpush1.bf16.msra.mxu0 %v3328
  %3458 = vmatprep.subr.bf16.mxu0 %v3331
  %3459 = vmatpush1.bf16.msra.mxu0 %v3330
  %3460 = vmatprep.subr.bf16.mxu0 %v3333
  %3461 = vmatpush1.bf16.msra.mxu0 %v3332
  %3462 = vmatprep.mubr.bf16.mxu0 %v3031
  %3463 = vmatmul.mubr.bf16.gmra.mrb[0].mxu0 %v3030
  %v3464 = vpop.f32.mrb[0].mxu0
  %v3465 = vadd.f32 %v3103, %v3464
  %v3466 = vpop.f32.mrb[0].mxu0
  %v3467 = vadd.f32 %v3107, %v3466
  %v3468 = vpop.f32.mrb[0].mxu0
  %v3469 = vadd.f32 %v3103, %v3468
  %v3470 = vpop.f32.mrb[0].mxu0
  %v3471 = vadd.f32 %v3107, %v3470
  %3472 = vdwg.mxu0
  %3473 = vmatprep.subr.bf16.mxu0 %v3335
  %3474 = vmatpush1.bf16.msra.mxu0 %v3334
  %3475 = vmatprep.subr.bf16.mxu0 %v3337
  %3476 = vmatpush1.bf16.msra.mxu0 %v3336
  %3477 = vmatprep.subr.bf16.mxu0 %v3339
  %3478 = vmatpush1.bf16.msra.mxu0 %v3338
  %3479 = vmatprep.subr.bf16.mxu0 %v3341
  %3480 = vmatpush1.bf16.msra.mxu0 %v3340
  %3481 = vmatprep.subr.bf16.mxu0 %v3343
  %3482 = vmatpush1.bf16.msra.mxu0 %v3342
  %3483 = vmatprep.subr.bf16.mxu0 %v3345
  %3484 = vmatpush1.bf16.msra.mxu0 %v3344
  %3485 = vmatprep.subr.bf16.mxu0 %v3347
  %3486 = vmatpush1.bf16.msra.mxu0 %v3346
  %3487 = vmatprep.subr.bf16.mxu0 %v3349
  %3488 = vmatpush1.bf16.msra.mxu0 %v3348
  %3489 = vmatprep.subr.bf16.mxu0 %v3351
  %3490 = vmatpush1.bf16.msra.mxu0 %v3350
  %3491 = vmatprep.subr.bf16.mxu0 %v3353
  %3492 = vmatpush1.bf16.msra.mxu0 %v3352
  %3493 = vmatprep.subr.bf16.mxu0 %v3355
  %3494 = vmatpush1.bf16.msra.mxu0 %v3354
  %3495 = vmatprep.subr.bf16.mxu0 %v3357
  %3496 = vmatpush1.bf16.msra.mxu0 %v3356
  %3497 = vmatprep.subr.bf16.mxu0 %v3359
  %3498 = vmatpush1.bf16.msra.mxu0 %v3358
  %3499 = vmatprep.subr.bf16.mxu0 %v3361
  %3500 = vmatpush1.bf16.msra.mxu0 %v3360
  %3501 = vmatprep.subr.bf16.mxu0 %v3363
  %3502 = vmatpush1.bf16.msra.mxu0 %v3362
  %3503 = vmatprep.subr.bf16.mxu0 %v3365
  %3504 = vmatpush1.bf16.msra.mxu0 %v3364
  %3505 = vmatprep.mubr.bf16.mxu0 %v3033
  %3506 = vmatmul.mubr.bf16.gmra.mrb[0].mxu0 %v3032
  %v3507 = vpop.f32.mrb[0].mxu0
  %v3508 = vadd.f32 %v3465, %v3507
  %v3509 = vpop.f32.mrb[0].mxu0
  %v3510 = vadd.f32 %v3467, %v3509
  %v3511 = vpop.f32.mrb[0].mxu0
  %v3512 = vadd.f32 %v3469, %v3511
  %v3513 = vpop.f32.mrb[0].mxu0
  %v3514 = vadd.f32 %v3471, %v3513
  %3515 = vdwg.mxu0
  %v3516 = vmul.f32 %v3508, 0.2
  %v3517 = vmul.f32 %v3510, 0.2
  %v3518 = vmul.f32 %v3512, 0.2
  %v3519 = vmul.f32 %v3514, 0.2
  %v3520 = vmax.f32 %v3508, %v3516
  %v3521 = vmax.f32 %v3510, %v3517
  %v3522 = vmax.f32 %v3512, %v3518
  %v3523 = vmax.f32 %v3514, %v3519
  %v3524 = vld [vmem:[%s8] sm:$0x3]
  %v3526 = vlaneseq
  %v3527 = vshrl.u32 %v3526, 7
  %v3528 = vsub.s32 0, %v3527
  %v3529 = vrot.slane %v3524, %v3528
  %v3530 = vlaneseq
  %v3531 = vshrl.u32 %v3530, 7
  %v3532 = vsub.s32 1, %v3531
  %v3533 = vrot.slane %v3524, %v3532
  %v3536 = vadd.f32 %v3520, %v3529
  %v3537 = vadd.f32 %v3521, %v3533
  %v3538 = vadd.f32 %v3522, %v3529
  %v3539 = vadd.f32 %v3523, %v3533
  %v3540 = vpack.c.bf16 %v3538, %v3536
  %v3541 = vpack.c.bf16 %v3539, %v3537
  %v3542 = vld [vmem:[%s9] sm:$0xf]
  %v3543 = vld [vmem:[%s9 + $0x4] sm:$0xf]
  %v3544 = vld [vmem:[%s9 + $0x8] sm:$0xf]
  %v3545 = vld [vmem:[%s9 + $0xc] sm:$0xf]
  %v3546 = vld [vmem:[%s9 + $0x10] sm:$0xf]
  %v3547 = vld [vmem:[%s9 + $0x14] sm:$0xf]
  %v3548 = vld [vmem:[%s9 + $0x18] sm:$0xf]
  %v3549 = vld [vmem:[%s9 + $0x1c] sm:$0xf]
  %v3550 = vld [vmem:[%s9 + $0x20] sm:$0xf]
  %v3551 = vld [vmem:[%s9 + $0x24] sm:$0xf]
  %v3552 = vld [vmem:[%s9 + $0x28] sm:$0xf]
  %v3553 = vld [vmem:[%s9 + $0x2c] sm:$0xf]
  %v3554 = vld [vmem:[%s9 + $0x30] sm:$0xf]
  %v3555 = vld [vmem:[%s9 + $0x34] sm:$0xf]
  %v3556 = vld [vmem:[%s9 + $0x38] sm:$0xf]
  %v3557 = vld [vmem:[%s9 + $0x3c] sm:$0xf]
  %v3558 = vld [vmem:[%s9 + $0x40] sm:$0xf]
  %v3559 = vld [vmem:[%s9 + $0x44] sm:$0xf]
  %v3560 = vld [vmem:[%s9 + $0x48] sm:$0xf]
  %v3561 = vld [vmem:[%s9 + $0x4c] sm:$0xf]
  %v3562 = vld [vmem:[%s9 + $0x50] sm:$0xf]
  %v3563 = vld [vmem:[%s9 + $0x54] sm:$0xf]
  %v3564 = vld [vmem:[%s9 + $0x58] sm:$0xf]
  %v3565 = vld [vmem:[%s9 + $0x5c] sm:$0xf]
  %v3566 = vld [vmem:[%s9 + $0x60] sm:$0xf]
  %v3567 = vld [vmem:[%s9 + $0x64] sm:$0xf]
  %v3568 = vld [vmem:[%s9 + $0x68] sm:$0xf]
  %v3569 = vld [vmem:[%s9 + $0x6c] sm:$0xf]
  %v3570 = vld [vmem:[%s9 + $0x70] sm:$0xf]
  %v3571 = vld [vmem:[%s9 + $0x74] sm:$0xf]
  %v3572 = vld [vmem:[%s9 + $0x78] sm:$0xf]
  %v3573 = vld [vmem:[%s9 + $0x7c] sm:$0xf]
  %v3574 = vld [vmem:[%s10] sm:$0x1]
  %v3576 = vlaneseq
  %v3577 = vshrl.u32 %v3576, 7
  %v3578 = vsub.s32 0, %v3577
  %v3579 = vrot.slane %v3574, %v3578
  %v3613 = vunpack.c.l.b16 %v3542
  %v3614 = vunpack.c.l.b16 %v3543
  %v3615 = vunpack.c.l.b16 %v3544
  %v3616 = vunpack.c.l.b16 %v3545
  %v3617 = vunpack.c.l.b16 %v3546
  %v3618 = vunpack.c.l.b16 %v3547
  %v3619 = vunpack.c.l.b16 %v3548
  %v3620 = vunpack.c.l.b16 %v3549
  %v3621 = vunpack.c.l.b16 %v3550
  %v3622 = vunpack.c.l.b16 %v3551
  %v3623 = vunpack.c.l.b16 %v3552
  %v3624 = vunpack.c.l.b16 %v3553
  %v3625 = vunpack.c.l.b16 %v3554
  %v3626 = vunpack.c.l.b16 %v3555
  %v3627 = vunpack.c.l.b16 %v3556
  %v3628 = vunpack.c.l.b16 %v3557
  %v3629 = vunpack.c.l.b16 %v3558
  %v3630 = vunpack.c.l.b16 %v3559
  %v3631 = vunpack.c.l.b16 %v3560
  %v3632 = vunpack.c.l.b16 %v3561
  %v3633 = vunpack.c.l.b16 %v3562
  %v3634 = vunpack.c.l.b16 %v3563
  %v3635 = vunpack.c.l.b16 %v3564
  %v3636 = vunpack.c.l.b16 %v3565
  %v3637 = vunpack.c.l.b16 %v3566
  %v3638 = vunpack.c.l.b16 %v3567
  %v3639 = vunpack.c.l.b16 %v3568
  %v3640 = vunpack.c.l.b16 %v3569
  %v3641 = vunpack.c.l.b16 %v3570
  %v3642 = vunpack.c.l.b16 %v3571
  %v3643 = vunpack.c.l.b16 %v3572
  %v3644 = vunpack.c.l.b16 %v3573
  %v3645 = vpack.c.b16 %v3614, %v3613
  %v3646 = vpack.c.b16 %v3616, %v3615
  %v3647 = vpack.c.b16 %v3618, %v3617
  %v3648 = vpack.c.b16 %v3620, %v3619
  %v3649 = vpack.c.b16 %v3622, %v3621
  %v3650 = vpack.c.b16 %v3624, %v3623
  %v3651 = vpack.c.b16 %v3626, %v3625
  %v3652 = vpack.c.b16 %v3628, %v3627
  %v3653 = vpack.c.b16 %v3630, %v3629
  %v3654 = vpack.c.b16 %v3632, %v3631
  %v3655 = vpack.c.b16 %v3634, %v3633
  %v3656 = vpack.c.b16 %v3636, %v3635
  %v3657 = vpack.c.b16 %v3638, %v3637
  %v3658 = vpack.c.b16 %v3640, %v3639
  %v3659 = vpack.c.b16 %v3642, %v3641
  %v3660 = vpack.c.b16 %v3644, %v3643
  %3677 = vmatprep.subr.bf16.mxu0 0
  %3678 = vmatpush1.bf16.msra.mxu0 %v3645
  %3679 = vmatprep.subr.bf16.mxu0 0
  %3680 = vmatpush1.bf16.msra.mxu0 %v3646
  %3681 = vmatprep.subr.bf16.mxu0 0
  %3682 = vmatpush1.bf16.msra.mxu0 %v3647
  %3683 = vmatprep.subr.bf16.mxu0 0
  %3684 = vmatpush1.bf16.msra.mxu0 %v3648
  %3685 = vmatprep.subr.bf16.mxu0 0
  %3686 = vmatpush1.bf16.msra.mxu0 %v3649
  %3687 = vmatprep.subr.bf16.mxu0 0
  %3688 = vmatpush1.bf16.msra.mxu0 %v3650
  %3689 = vmatprep.subr.bf16.mxu0 0
  %3690 = vmatpush1.bf16.msra.mxu0 %v3651
  %3691 = vmatprep.subr.bf16.mxu0 0
  %3692 = vmatpush1.bf16.msra.mxu0 %v3652
  %3693 = vmatprep.subr.bf16.mxu0 0
  %3694 = vmatpush1.bf16.msra.mxu0 %v3653
  %3695 = vmatprep.subr.bf16.mxu0 0
  %3696 = vmatpush1.bf16.msra.mxu0 %v3654
  %3697 = vmatprep.subr.bf16.mxu0 0
  %3698 = vmatpush1.bf16.msra.mxu0 %v3655
  %3699 = vmatprep.subr.bf16.mxu0 0
  %3700 = vmatpush1.bf16.msra.mxu0 %v3656
  %3701 = vmatprep.subr.bf16.mxu0 0
  %3702 = vmatpush1.bf16.msra.mxu0 %v3657
  %3703 = vmatprep.subr.bf16.mxu0 0
  %3704 = vmatpush1.bf16.msra.mxu0 %v3658
  %3705 = vmatprep.subr.bf16.mxu0 0
  %3706 = vmatpush1.bf16.msra.mxu0 %v3659
  %3707 = vmatprep.subr.bf16.mxu0 0
  %3708 = vmatpush1.bf16.msra.mxu0 %v3660
  %3709 = vmatprep.mubr.bf16.mxu0 %v3541
  %3710 = vmatmul.mubr.bf16.gmra.mrb[0].mxu0 %v3540
  %v3711 = vpop.f32.mrb[0].mxu0
  %v3712 = vadd.f32 %v3579, %v3711
  %v3713 = vpop.f32.mrb[0].mxu0
  %v3714 = vpop.f32.mrb[0].mxu0
  %v3715 = vadd.f32 %v3579, %v3714
  %v3716 = vpop.f32.mrb[0].mxu0
  %3717 = vdwg.mxu0
  %v3718 = vmul.f32 %v3712, 0.2
  %v3719 = vmul.f32 %v3715, 0.2
  %v3720 = vmax.f32 %v3712, %v3718
  %v3721 = vmax.f32 %v3715, %v3719
  %v3722 = vld [vmem:[%s11] sm:$0x1]
  %v3724 = vlaneseq
  %v3725 = vshrl.u32 %v3724, 7
  %v3726 = vsub.s32 0, %v3725
  %v3727 = vrot.slane %v3722, %v3726
  %v3729 = vadd.f32 %v3720, %v3727
  %v3730 = vadd.f32 %v3721, %v3727
  %v3731 = vpack.c.bf16 %v3730, %v3729
  %v3732 = vld [vmem:[%s12] sm:$0xf]
  %v3733 = vld [vmem:[%s12 + $0x4] sm:$0xf]
  %v3734 = vld [vmem:[%s12 + $0x8] sm:$0xf]
  %v3735 = vld [vmem:[%s12 + $0xc] sm:$0xf]
  %v3736 = vld [vmem:[%s12 + $0x10] sm:$0xf]
  %v3737 = vld [vmem:[%s12 + $0x14] sm:$0xf]
  %v3738 = vld [vmem:[%s12 + $0x18] sm:$0xf]
  %v3739 = vld [vmem:[%s12 + $0x1c] sm:$0xf]
  %v3740 = vld [vmem:[%s12 + $0x20] sm:$0xf]
  %v3741 = vld [vmem:[%s12 + $0x24] sm:$0xf]
  %v3742 = vld [vmem:[%s12 + $0x28] sm:$0xf]
  %v3743 = vld [vmem:[%s12 + $0x2c] sm:$0xf]
  %v3744 = vld [vmem:[%s12 + $0x30] sm:$0xf]
  %v3745 = vld [vmem:[%s12 + $0x34] sm:$0xf]
  %v3746 = vld [vmem:[%s12 + $0x38] sm:$0xf]
  %v3747 = vld [vmem:[%s12 + $0x3c] sm:$0xf]
  %v3748 = vld [vmem:[%s13] sm:$0x1]
  %v3750 = vlaneseq
  %v3751 = vshrl.u32 %v3750, 7
  %v3752 = vsub.s32 0, %v3751
  %v3753 = vrot.slane %v3748, %v3752
  %v3771 = vunpack.c.l.b16 %v3732
  %v3772 = vunpack.c.l.b16 %v3733
  %v3773 = vunpack.c.l.b16 %v3734
  %v3774 = vunpack.c.l.b16 %v3735
  %v3775 = vunpack.c.l.b16 %v3736
  %v3776 = vunpack.c.l.b16 %v3737
  %v3777 = vunpack.c.l.b16 %v3738
  %v3778 = vunpack.c.l.b16 %v3739
  %v3779 = vunpack.c.l.b16 %v3740
  %v3780 = vunpack.c.l.b16 %v3741
  %v3781 = vunpack.c.l.b16 %v3742
  %v3782 = vunpack.c.l.b16 %v3743
  %v3783 = vunpack.c.l.b16 %v3744
  %v3784 = vunpack.c.l.b16 %v3745
  %v3785 = vunpack.c.l.b16 %v3746
  %v3786 = vunpack.c.l.b16 %v3747
  %v3787 = vpack.c.b16 %v3772, %v3771
  %v3788 = vpack.c.b16 %v3774, %v3773
  %v3789 = vpack.c.b16 %v3776, %v3775
  %v3790 = vpack.c.b16 %v3778, %v3777
  %v3791 = vpack.c.b16 %v3780, %v3779
  %v3792 = vpack.c.b16 %v3782, %v3781
  %v3793 = vpack.c.b16 %v3784, %v3783
  %v3794 = vpack.c.b16 %v3786, %v3785
  %3803 = vmatprep.subr.bf16.mxu0 0
  %3804 = vmatpush1.bf16.msra.mxu0 %v3787
  %3805 = vmatprep.subr.bf16.mxu0 0
  %3806 = vmatpush1.bf16.msra.mxu0 %v3788
  %3807 = vmatprep.subr.bf16.mxu0 0
  %3808 = vmatpush1.bf16.msra.mxu0 %v3789
  %3809 = vmatprep.subr.bf16.mxu0 0
  %3810 = vmatpush1.bf16.msra.mxu0 %v3790
  %3811 = vmatprep.subr.bf16.mxu0 0
  %3812 = vmatpush1.bf16.msra.mxu0 %v3791
  %3813 = vmatprep.subr.bf16.mxu0 0
  %3814 = vmatpush1.bf16.msra.mxu0 %v3792
  %3815 = vmatprep.subr.bf16.mxu0 0
  %3816 = vmatpush1.bf16.msra.mxu0 %v3793
  %3817 = vmatprep.subr.bf16.mxu0 0
  %3818 = vmatpush1.bf16.msra.mxu0 %v3794
  %3819 = vmatprep.subr.bf16.mxu0 0
  %3820 = vmatpush1.bf16.msra.mxu0 0
  %3821 = vmatprep.subr.bf16.mxu0 0
  %3822 = vmatpush1.bf16.msra.mxu0 0
  %3823 = vmatprep.subr.bf16.mxu0 0
  %3824 = vmatpush1.bf16.msra.mxu0 0
  %3825 = vmatprep.subr.bf16.mxu0 0
  %3826 = vmatpush1.bf16.msra.mxu0 0
  %3827 = vmatprep.subr.bf16.mxu0 0
  %3828 = vmatpush1.bf16.msra.mxu0 0
  %3829 = vmatprep.subr.bf16.mxu0 0
  %3830 = vmatpush1.bf16.msra.mxu0 0
  %3831 = vmatprep.subr.bf16.mxu0 0
  %3832 = vmatpush1.bf16.msra.mxu0 0
  %3833 = vmatprep.subr.bf16.mxu0 0
  %3834 = vmatpush1.bf16.msra.mxu0 0
  %3835 = vmatprep.mubr.bf16.mxu0 0
  %3836 = vmatmul.mubr.bf16.gmra.mrb[0].mxu0 %v3731
  %v3837 = vpop.f32.mrb[0].mxu0
  %v3838 = vadd.f32 %v3753, %v3837
  %v3839 = vpop.f32.mrb[0].mxu0
  %v3840 = vpop.f32.mrb[0].mxu0
  %v3841 = vadd.f32 %v3753, %v3840
  %v3842 = vpop.f32.mrb[0].mxu0
  %3843 = vdwg.mxu0
  %v3844 = vlaneseq
  %v3845 = vand.u32 %v3844, 127
  %v3846 = vsub.f32 0.0, %v3838
  %v3847 = vsub.f32 0.0, %v3841
  %v3848 = vmul.f32 %v3846, 1.442695
  %v3849 = vpow.pop %v3848
  %v3850 = vmul.f32 %v3847, 1.442695
  %v3851 = vpow.pop %v3850
  %v3852 = vadd.f32 %v3849, 1.0
  %v3853 = vadd.f32 %v3851, 1.0
  %v3854 = vrcp.pop %v3852
  %v3855 = vmul.f32 1.0, %v3854
  %v3856 = vrcp.pop %v3853
  %v3857 = vmul.f32 1.0, %v3856
  %vm3858 = vcmp.ge.s32.totalorder %v3845, 1
  %vm3859 = vcmp.lt.s32.totalorder %v3845, 6
  %vm3860 = vmand %vm3858, %vm3859
  %v3861 = vsel %vm3860, %v3838, -1e+30
  %v3862 = vsel %vm3860, %v3841, -1e+30
  %3863 = vmax.xlane.f32.xlu0 %v3861
  %v3864 = vpop.xlane.xlu0 %3863
  %3865 = vmax.xlane.f32.xlu0 %v3862
  %v3866 = vpop.xlane.xlu0 %3865
  %v3867 = vsub.f32 %v3861, %v3864
  %v3868 = vsub.f32 %v3862, %v3866
  %v3869 = vmul.f32 %v3867, 1.442695
  %v3870 = vpow.pop %v3869
  %v3871 = vmul.f32 %v3868, 1.442695
  %v3872 = vpow.pop %v3871
  %v3873 = vsel %vm3860, %v3870, 0.0
  %v3874 = vsel %vm3860, %v3872, 0.0
  %3875 = vadd.xlane.f32.xlu0 %v3873
  %v3876 = vpop.xlane.xlu0 %3875
  %3877 = vadd.xlane.f32.xlu0 %v3874
  %v3878 = vpop.xlane.xlu0 %3877
  %v3879 = vrcp.pop %v3876
  %v3880 = vmul.f32 %v3873, %v3879
  %v3881 = vrcp.pop %v3878
  %v3882 = vmul.f32 %v3874, %v3881
  %vm3883 = vcmp.eq.s32.totalorder %v3845, 0
  %v3884 = vsel %vm3883, %v3855, %v3880
  %v3885 = vsel %vm3883, %v3857, %v3882
  %3886 = vst [vmem:[%s14] sm:$0xff] %v3884
  %3887 = vst [vmem:[%s14 + $0x8] sm:$0xff] %v3885
  // Predicated region
  $region58: #{discriminator_weak_forward.1} parent=0 // pred_check
    _
  $region59: #{discriminator_weak_forward.1} parent=0 // pred_check_branch
    %3889 = sbr.rel (0) target = $region61
  $region60: #{discriminator_weak_forward.1} parent=0 // pred_region
    _
  $region61: #{discriminator_weak_forward.1} parent=0 // pred_fallthru
    _
  // Predicated region
  $region62: #{discriminator_weak_forward.1} parent=0 // pred_check
    _
  $region63: #{discriminator_weak_forward.1} parent=0 // pred_check_branch
    %3891 = sbr.rel (0) target = $region65
  $region64: #{discriminator_weak_forward.1} parent=0 // pred_region
    _
  $region65: #{discriminator_weak_forward.1} parent=0 // pred_fallthru
    _

</llo_original>
